<compile_context>
chip_gen: v7x
topology: tpu7x:2x2x1
jax: 0.10.0
libtpu: 0.0.40
codegen_flags: <defaults>
</compile_context>

<pallas_src>
import functools

import jax
import jax.numpy as jnp
from jax import lax
from jax.experimental import pallas as pl
from jax.experimental.pallas import tpu as pltpu


def _dncnn_kernel(x_ref, w0_ref, b0_ref, wmid_ref, smid_ref, bmid_ref,
                  wlast_ref, o_ref, x0p_ref, bufa_ref, bufb_ref,
                  *, depth, H, W, C):
    """Whole DnCNN forward for one batch element, activations resident in VMEM.

    x_ref    : (H, W, 1)         network input (one batch element, NHWC)
    w0_ref   : (2, 2, C)         layer-0 conv weight (Cin=1 squeezed), HWIO
    b0_ref   : (1, C)            layer-0 conv bias
    wmid_ref : (depth-2, 4C, C)  middle conv weights, im2col rows = (di,dj,ci)
    smid_ref : (depth-2, 1, C)   fused eval-mode BatchNorm scale
    bmid_ref : (depth-2, 1, C)   fused eval-mode BatchNorm shift
    wlast_ref: (2, 2, C)         last conv weight (Cout=1 squeezed), HWIO
    o_ref    : (H, W, 1)         residual output  x - dncnn(x)[:H, :W]
    x0p_ref  : (H+1, W+1, 1)     VMEM scratch: top/left zero-padded input
    bufa/b   : (H+1, W+1, C)     VMEM ping-pong activations; row0/col0 = halo
    """
    f32 = jnp.float32

    # In-kernel zero padding: row 0 / col 0 of every buffer are the conv halo,
    # zeroed here and never written afterwards, so each layer reads its padded
    # input directly from the buffer (no jnp.pad, no HBM copy).
    x0p_ref[...] = jnp.zeros_like(x0p_ref)
    bufa_ref[...] = jnp.zeros_like(bufa_ref)
    bufb_ref[...] = jnp.zeros_like(bufb_ref)
    x0p_ref[1:H + 1, 1:W + 1, :] = x_ref[...]

    # ---- Layer 0: Conv(1 -> C, bias=True) + ReLU.
    # Cin=1 would mean a K=4 matmul (<1% MXU utilization); do 4 shifted
    # broadcast multiply-adds on the VPU instead.
    w0 = w0_ref[...]                                      # (2, 2, C)
    acc0 = jnp.zeros((H, W, C), f32)
    for di in range(2):
        for dj in range(2):
            patch = x0p_ref[di:di + H, dj:dj + W, :]      # (H, W, 1)
            acc0 = acc0 + patch * w0[di, dj]              # -> (H, W, C)
    bufa_ref[1:H + 1, 1:W + 1, :] = jnp.maximum(acc0 + b0_ref[...], 0.0)

    # ---- Middle layers: Conv(C -> C, bias=False) + BatchNorm + ReLU.
    # im2col over the 2x2 taps => one K = 4*C (=256) MXU matmul per layer.
    bufs = (bufa_ref, bufb_ref)
    for l in range(1, depth - 1):
        src = bufs[(l - 1) % 2]
        dst = bufs[l % 2]
        taps = [src[di:di + H, dj:dj + W, :]              # (H, W, C) each
                for di in range(2) for dj in range(2)]
        lhs = jnp.concatenate(taps, axis=-1)              # (H, W, 4C)
        acc = jnp.dot(lhs, wmid_ref[l - 1],
                      preferred_element_type=f32)         # (H, W, C)
        y = acc * smid_ref[l - 1] + bmid_ref[l - 1]
        dst[1:H + 1, 1:W + 1, :] = jnp.maximum(y, 0.0)

    # ---- Last layer: Conv(C -> 1, bias=False).  Cout=1 => per-pixel channel
    # reduction on the VPU/XLU, fused with the residual and the crop.
    src = bufs[(depth - 2) % 2]
    wl = wlast_ref[...]                                   # (2, 2, C)
    accl = jnp.zeros((H, W, 1), f32)
    for di in range(2):
        for dj in range(2):
            patch = src[di:di + H, dj:dj + W, :]          # (H, W, C)
            accl = accl + jnp.sum(patch * wl[di, dj], axis=-1, keepdims=True)
    o_ref[...] = (x_ref[...] - accl).astype(o_ref.dtype)


def _orthogonal_conv_weight(key, cout, cin, kh, kw):
    # torch.nn.init.orthogonal_ on (cout, cin, kh, kw) == orthogonal init of
    # the flattened (cout, cin*kh*kw) matrix.  Returned in HWIO layout.
    m = jax.nn.initializers.orthogonal()(key, (cout, cin * kh * kw), jnp.float32)
    w_oihw = m.reshape(cout, cin, kh, kw)
    return jnp.transpose(w_oihw, (2, 3, 1, 0))            # (kh, kw, cin, cout)


def init_dncnn_params(key, depth=17, n_channels=64, image_channels=1,
                      bn_eps=1e-4):
    """Deterministic params matching DnCNN.__init__ (kernel_size=2, padding=1).

    TODO(synk): BatchNorm is reproduced in eval mode with freshly initialized
    running stats (mean=0, var=1), i.e. fused scale = 1/sqrt(1+eps), shift = 0;
    training-mode batch statistics are not modeled.
    """
    assert depth >= 3 and image_channels == 1
    C = n_channels
    keys = jax.random.split(key, depth)
    bn_scale = (1.0 + bn_eps) ** -0.5
    return dict(
        w0=_orthogonal_conv_weight(keys[0], C, image_channels, 2, 2),
        b0=jnp.zeros((C,), jnp.float32),
        w_mid=jnp.stack([_orthogonal_conv_weight(keys[d], C, C, 2, 2)
                         for d in range(1, depth - 1)]),   # (depth-2,2,2,C,C)
        bn_scale=jnp.full((depth - 2, C), bn_scale, jnp.float32),
        bn_bias=jnp.zeros((depth - 2, C), jnp.float32),
        w_last=_orthogonal_conv_weight(keys[depth - 1], image_channels, C, 2, 2),
    )


def dncnn_forward(x_nchw, params):
    """DnCNN.forward: x - dncnn(x).  x_nchw: (N, 1, H, W) float32.

    TODO(synk): with kernel_size=2/padding=1 every conv grows H and W by 1, so
    the reference PyTorch `y - out` is a shape mismatch; as before, the network
    output is cropped to the input window [0:H, 0:W] before the residual.
    """
    N, Cin, H, W = x_nchw.shape
    assert Cin == 1, "kernel specialized for image_channels == 1"
    C = params["w0"].shape[-1]
    depth = params["w_mid"].shape[0] + 2

    x_nhwc = jnp.transpose(x_nchw, (0, 2, 3, 1)).astype(jnp.float32)  # (N,H,W,1)
    w0 = params["w0"][:, :, 0, :].astype(jnp.float32)                 # (2,2,C)
    b0 = params["b0"].reshape(1, C).astype(jnp.float32)
    wmid = params["w_mid"].reshape(depth - 2, 4 * C, C).astype(jnp.float32)
    smid = params["bn_scale"].reshape(depth - 2, 1, C).astype(jnp.float32)
    bmid = params["bn_bias"].reshape(depth - 2, 1, C).astype(jnp.float32)
    wlast = params["w_last"][:, :, :, 0].astype(jnp.float32)          # (2,2,C)

    kernel = functools.partial(_dncnn_kernel, depth=depth, H=H, W=W, C=C)
    out_nhwc = pl.pallas_call(
        kernel,
        out_shape=jax.ShapeDtypeStruct((N, H, W, 1), jnp.float32),
        grid_spec=pltpu.PrefetchScalarGridSpec(
            num_scalar_prefetch=0,
            grid=(N,),
            in_specs=[
                pl.BlockSpec((None, H, W, 1), lambda n: (n, 0, 0, 0)),
                pl.BlockSpec((2, 2, C), lambda n: (0, 0, 0)),
                pl.BlockSpec((1, C), lambda n: (0, 0)),
                pl.BlockSpec((depth - 2, 4 * C, C), lambda n: (0, 0, 0)),
                pl.BlockSpec((depth - 2, 1, C), lambda n: (0, 0, 0)),
                pl.BlockSpec((depth - 2, 1, C), lambda n: (0, 0, 0)),
                pl.BlockSpec((2, 2, C), lambda n: (0, 0, 0)),
            ],
            out_specs=pl.BlockSpec((None, H, W, 1), lambda n: (n, 0, 0, 0)),
            scratch_shapes=[
                pltpu.VMEM((H + 1, W + 1, 1), jnp.float32),   # padded input
                pltpu.VMEM((H + 1, W + 1, C), jnp.float32),   # ping
                pltpu.VMEM((H + 1, W + 1, C), jnp.float32),   # pong
            ],
        ),
        compiler_params=pltpu.CompilerParams(
            dimension_semantics=("parallel",)),
    )(x_nhwc, w0, b0, wmid, smid, bmid, wlast)
    return jnp.transpose(out_nhwc, (0, 3, 1, 2))              # (N, 1, H, W)


def _dncnn_reference(x_nchw, params):
    """Pure-JAX reference (lax.conv) with the same cropped-residual semantics."""
    dn = ("NHWC", "HWIO", "NHWC")
    pad = ((1, 1), (1, 1))
    N, _, H, W = x_nchw.shape
    x = jnp.transpose(x_nchw, (0, 2, 3, 1)).astype(jnp.float32)
    a = lax.conv_general_dilated(x, params["w0"], (1, 1), pad,
                                 dimension_numbers=dn)
    a = jnp.maximum(a + params["b0"], 0.0)
    for l in range(params["w_mid"].shape[0]):
        a = lax.conv_general_dilated(a, params["w_mid"][l], (1, 1), pad,
                                     dimension_numbers=dn)
        a = jnp.maximum(a * params["bn_scale"][l] + params["bn_bias"][l], 0.0)
    out = lax.conv_general_dilated(a, params["w_last"], (1, 1), pad,
                                   dimension_numbers=dn)
    return x_nchw - jnp.transpose(out[:, :H, :W, :], (0, 3, 1, 2))


if __name__ == "__main__":
    key = jax.random.PRNGKey(0)
    k_params, k_data = jax.random.split(key)

    # Small config consistent with the module: image_channels=1, k=2, p=1.
    depth, n_channels, image_channels = 5, 64, 1
    params = init_dncnn_params(k_params, depth=depth, n_channels=n_channels,
                               image_channels=image_channels)
    x = jax.random.normal(k_data, (2, image_channels, 16, 16), jnp.float32)

    out = jax.jit(dncnn_forward)(x, params)
    jax.block_until_ready(out)
    assert out.shape == x.shape and out.dtype == jnp.float32

    ref = _dncnn_reference(x, params)
    err = float(jnp.max(jnp.abs(out - ref)))
    assert err < 1e-3, f"kernel/reference mismatch: max abs err = {err}"
    print("KERNEL_OK")
</pallas_src>

<mosaic_0001>
module attributes {stable_mosaic.version = 11 : i64} {
  func.func @_dncnn_kernel(%arg0: i32, %arg1: memref<1x16x16x1xf32, #tpu.memory_space<vmem>>, %arg2: memref<2x2x64xf32, #tpu.memory_space<vmem>>, %arg3: memref<1x64xf32, #tpu.memory_space<vmem>>, %arg4: memref<3x256x64xf32, #tpu.memory_space<vmem>>, %arg5: memref<3x1x64xf32, #tpu.memory_space<vmem>>, %arg6: memref<3x1x64xf32, #tpu.memory_space<vmem>>, %arg7: memref<2x2x64xf32, #tpu.memory_space<vmem>>, %arg8: memref<1x16x16x1xf32, #tpu.memory_space<vmem>>, %arg9: memref<17x17x1xf32, #tpu.memory_space<vmem>>, %arg10: memref<17x17x64xf32, #tpu.memory_space<vmem>>, %arg11: memref<17x17x64xf32, #tpu.memory_space<vmem>>) attributes {dimension_semantics = [#tpu.dimension_semantics<parallel>], iteration_bounds = array<i64: 2>, scalar_prefetch = 0 : i64, scratch_operands = 3 : i64, tpu.core_type = #tpu.core_type<tc>, window_params = [{transform_indices = @transform_0, window_bounds = array<i64: 1, 16, 16, 1>}, {pipeline_mode = #tpu.pipeline_mode<synchronous>, transform_indices = @transform_1, window_bounds = array<i64: 2, 2, 64>}, {pipeline_mode = #tpu.pipeline_mode<synchronous>, transform_indices = @transform_2, window_bounds = array<i64: 1, 64>}, {pipeline_mode = #tpu.pipeline_mode<synchronous>, transform_indices = @transform_3, window_bounds = array<i64: 3, 256, 64>}, {pipeline_mode = #tpu.pipeline_mode<synchronous>, transform_indices = @transform_4, window_bounds = array<i64: 3, 1, 64>}, {pipeline_mode = #tpu.pipeline_mode<synchronous>, transform_indices = @transform_5, window_bounds = array<i64: 3, 1, 64>}, {pipeline_mode = #tpu.pipeline_mode<synchronous>, transform_indices = @transform_6, window_bounds = array<i64: 2, 2, 64>}, {transform_indices = @transform_7, window_bounds = array<i64: 1, 16, 16, 1>}]} {
    %cst = arith.constant 0.000000e+00 : f32
    %0 = vector.broadcast %cst : f32 to vector<17x17x1xf32>
    %c0 = arith.constant 0 : index
    %c0_0 = arith.constant 0 : index
    %c0_1 = arith.constant 0 : index
    %1 = vector.load %arg9[%c0, %c0_0, %c0_1] : memref<17x17x1xf32, #tpu.memory_space<vmem>>, vector<17x17x1xf32>
    tpu.vector_store %arg9[%c0, %c0_0, %c0_1], %0 {strides = array<i32>} : memref<17x17x1xf32, #tpu.memory_space<vmem>>, vector<17x17x1xf32>,
    %cst_2 = arith.constant 0.000000e+00 : f32
    %2 = vector.broadcast %cst_2 : f32 to vector<17x17x64xf32>
    %c0_3 = arith.constant 0 : index
    %c0_4 = arith.constant 0 : index
    %c0_5 = arith.constant 0 : index
    %3 = vector.load %arg10[%c0_3, %c0_4, %c0_5] : memref<17x17x64xf32, #tpu.memory_space<vmem>>, vector<17x17x64xf32>
    tpu.vector_store %arg10[%c0_3, %c0_4, %c0_5], %2 {strides = array<i32>} : memref<17x17x64xf32, #tpu.memory_space<vmem>>, vector<17x17x64xf32>,
    %cst_6 = arith.constant 0.000000e+00 : f32
    %4 = vector.broadcast %cst_6 : f32 to vector<17x17x64xf32>
    %c0_7 = arith.constant 0 : index
    %c0_8 = arith.constant 0 : index
    %c0_9 = arith.constant 0 : index
    %5 = vector.load %arg11[%c0_7, %c0_8, %c0_9] : memref<17x17x64xf32, #tpu.memory_space<vmem>>, vector<17x17x64xf32>
    tpu.vector_store %arg11[%c0_7, %c0_8, %c0_9], %4 {strides = array<i32>} : memref<17x17x64xf32, #tpu.memory_space<vmem>>, vector<17x17x64xf32>,
    %c0_10 = arith.constant 0 : index
    %c0_11 = arith.constant 0 : index
    %c0_12 = arith.constant 0 : index
    %c0_13 = arith.constant 0 : index
    %6 = vector.load %arg1[%c0_10, %c0_11, %c0_12, %c0_13] : memref<1x16x16x1xf32, #tpu.memory_space<vmem>>, vector<1x16x16x1xf32>
    %7 = vector.shape_cast %6 : vector<1x16x16x1xf32> to vector<16x16x1xf32>
    %c1 = arith.constant 1 : index
    %c1_14 = arith.constant 1 : index
    %c0_15 = arith.constant 0 : index
    %8 = vector.load %arg9[%c1, %c1_14, %c0_15] : memref<17x17x1xf32, #tpu.memory_space<vmem>>, vector<16x16x1xf32>
    tpu.vector_store %arg9[%c1, %c1_14, %c0_15], %7 {strides = array<i32>} : memref<17x17x1xf32, #tpu.memory_space<vmem>>, vector<16x16x1xf32>,
    %c0_16 = arith.constant 0 : index
    %c0_17 = arith.constant 0 : index
    %c0_18 = arith.constant 0 : index
    %9 = vector.load %arg2[%c0_16, %c0_17, %c0_18] : memref<2x2x64xf32, #tpu.memory_space<vmem>>, vector<2x2x64xf32>
    %cst_19 = arith.constant 0.000000e+00 : f32
    %10 = vector.broadcast %cst_19 : f32 to vector<16x16x64xf32>
    %c0_20 = arith.constant 0 : index
    %c0_21 = arith.constant 0 : index
    %c0_22 = arith.constant 0 : index
    %11 = vector.load %arg9[%c0_20, %c0_21, %c0_22] : memref<17x17x1xf32, #tpu.memory_space<vmem>>, vector<16x16x1xf32>
    %12 = vector.extract_strided_slice %9 {offsets = [0, 0, 0], sizes = [1, 1, 64], strides = [1, 1, 1]} : vector<2x2x64xf32> to vector<1x1x64xf32>
    %13 = vector.shape_cast %12 : vector<1x1x64xf32> to vector<64xf32>
    %14 = vector.shape_cast %13 : vector<64xf32> to vector<1x1x64xf32>
    %15 = vector.broadcast %11 : vector<16x16x1xf32> to vector<16x16x64xf32>
    %16 = vector.broadcast %14 : vector<1x1x64xf32> to vector<16x16x64xf32>
    %17 = arith.mulf %15, %16 : vector<16x16x64xf32>
    %18 = arith.addf %10, %17 : vector<16x16x64xf32>
    %c0_23 = arith.constant 0 : index
    %c1_24 = arith.constant 1 : index
    %c0_25 = arith.constant 0 : index
    %19 = vector.load %arg9[%c0_23, %c1_24, %c0_25] : memref<17x17x1xf32, #tpu.memory_space<vmem>>, vector<16x16x1xf32>
    %20 = vector.extract_strided_slice %9 {offsets = [0, 1, 0], sizes = [1, 1, 64], strides = [1, 1, 1]} : vector<2x2x64xf32> to vector<1x1x64xf32>
    %21 = vector.shape_cast %20 : vector<1x1x64xf32> to vector<64xf32>
    %22 = vector.shape_cast %21 : vector<64xf32> to vector<1x1x64xf32>
    %23 = vector.broadcast %19 : vector<16x16x1xf32> to vector<16x16x64xf32>
    %24 = vector.broadcast %22 : vector<1x1x64xf32> to vector<16x16x64xf32>
    %25 = arith.mulf %23, %24 : vector<16x16x64xf32>
    %26 = arith.addf %18, %25 : vector<16x16x64xf32>
    %c1_26 = arith.constant 1 : index
    %c0_27 = arith.constant 0 : index
    %c0_28 = arith.constant 0 : index
    %27 = vector.load %arg9[%c1_26, %c0_27, %c0_28] : memref<17x17x1xf32, #tpu.memory_space<vmem>>, vector<16x16x1xf32>
    %28 = vector.extract_strided_slice %9 {offsets = [1, 0, 0], sizes = [1, 1, 64], strides = [1, 1, 1]} : vector<2x2x64xf32> to vector<1x1x64xf32>
    %29 = vector.shape_cast %28 : vector<1x1x64xf32> to vector<64xf32>
    %30 = vector.shape_cast %29 : vector<64xf32> to vector<1x1x64xf32>
    %31 = vector.broadcast %27 : vector<16x16x1xf32> to vector<16x16x64xf32>
    %32 = vector.broadcast %30 : vector<1x1x64xf32> to vector<16x16x64xf32>
    %33 = arith.mulf %31, %32 : vector<16x16x64xf32>
    %34 = arith.addf %26, %33 : vector<16x16x64xf32>
    %c1_29 = arith.constant 1 : index
    %c1_30 = arith.constant 1 : index
    %c0_31 = arith.constant 0 : index
    %35 = vector.load %arg9[%c1_29, %c1_30, %c0_31] : memref<17x17x1xf32, #tpu.memory_space<vmem>>, vector<16x16x1xf32>
    %36 = vector.extract_strided_slice %9 {offsets = [1, 1, 0], sizes = [1, 1, 64], strides = [1, 1, 1]} : vector<2x2x64xf32> to vector<1x1x64xf32>
    %37 = vector.shape_cast %36 : vector<1x1x64xf32> to vector<64xf32>
    %38 = vector.shape_cast %37 : vector<64xf32> to vector<1x1x64xf32>
    %39 = vector.broadcast %35 : vector<16x16x1xf32> to vector<16x16x64xf32>
    %40 = vector.broadcast %38 : vector<1x1x64xf32> to vector<16x16x64xf32>
    %41 = arith.mulf %39, %40 : vector<16x16x64xf32>
    %42 = arith.addf %34, %41 : vector<16x16x64xf32>
    %c0_32 = arith.constant 0 : index
    %c0_33 = arith.constant 0 : index
    %43 = vector.load %arg3[%c0_32, %c0_33] : memref<1x64xf32, #tpu.memory_space<vmem>>, vector<1x64xf32>
    %44 = vector.shape_cast %43 : vector<1x64xf32> to vector<1x1x64xf32>
    %45 = vector.broadcast %44 : vector<1x1x64xf32> to vector<16x16x64xf32>
    %46 = arith.addf %42, %45 : vector<16x16x64xf32>
    %cst_34 = arith.constant 0.000000e+00 : f32
    %47 = vector.broadcast %cst_34 : f32 to vector<16x16x64xf32>
    %48 = arith.maximumf %46, %47 : vector<16x16x64xf32>
    %c1_35 = arith.constant 1 : index
    %c1_36 = arith.constant 1 : index
    %c0_37 = arith.constant 0 : index
    %49 = vector.load %arg10[%c1_35, %c1_36, %c0_37] : memref<17x17x64xf32, #tpu.memory_space<vmem>>, vector<16x16x64xf32>
    tpu.vector_store %arg10[%c1_35, %c1_36, %c0_37], %48 {strides = array<i32>} : memref<17x17x64xf32, #tpu.memory_space<vmem>>, vector<16x16x64xf32>,
    %c0_38 = arith.constant 0 : index
    %c0_39 = arith.constant 0 : index
    %c0_40 = arith.constant 0 : index
    %50 = vector.load %arg10[%c0_38, %c0_39, %c0_40] : memref<17x17x64xf32, #tpu.memory_space<vmem>>, vector<16x16x64xf32>
    %c0_41 = arith.constant 0 : index
    %c1_42 = arith.constant 1 : index
    %c0_43 = arith.constant 0 : index
    %51 = vector.load %arg10[%c0_41, %c1_42, %c0_43] : memref<17x17x64xf32, #tpu.memory_space<vmem>>, vector<16x16x64xf32>
    %c1_44 = arith.constant 1 : index
    %c0_45 = arith.constant 0 : index
    %c0_46 = arith.constant 0 : index
    %52 = vector.load %arg10[%c1_44, %c0_45, %c0_46] : memref<17x17x64xf32, #tpu.memory_space<vmem>>, vector<16x16x64xf32>
    %c1_47 = arith.constant 1 : index
    %c1_48 = arith.constant 1 : index
    %c0_49 = arith.constant 0 : index
    %53 = vector.load %arg10[%c1_47, %c1_48, %c0_49] : memref<17x17x64xf32, #tpu.memory_space<vmem>>, vector<16x16x64xf32>
    %54 = tpu.concatenate %50, %51, %52, %53 in 2 : vector<16x16x64xf32>, vector<16x16x64xf32>, vector<16x16x64xf32>, vector<16x16x64xf32> -> vector<16x16x256xf32>
    %c0_50 = arith.constant 0 : index
    %c0_51 = arith.constant 0 : index
    %c0_52 = arith.constant 0 : index
    %55 = vector.load %arg4[%c0_50, %c0_51, %c0_52] : memref<3x256x64xf32, #tpu.memory_space<vmem>>, vector<1x256x64xf32>
    %56 = vector.shape_cast %55 : vector<1x256x64xf32> to vector<256x64xf32>
    %cst_53 = arith.constant dense<0.000000e+00> : vector<16x16x64xf32>
    %57 = tpu.matmul %54, %56, %cst_53 {dimension_numbers = #tpu.dot_dimension_numbers<[2], [0], [0, 1], [1], [0, 0, 0, 1, 1, 1], [], []>} : vector<16x16x256xf32>, vector<256x64xf32>, vector<16x16x64xf32> -> vector<16x16x64xf32>
    %c0_54 = arith.constant 0 : index
    %c0_55 = arith.constant 0 : index
    %c0_56 = arith.constant 0 : index
    %58 = vector.load %arg5[%c0_54, %c0_55, %c0_56] : memref<3x1x64xf32, #tpu.memory_space<vmem>>, vector<1x1x64xf32>
    %59 = vector.shape_cast %58 : vector<1x1x64xf32> to vector<1x64xf32>
    %60 = vector.shape_cast %59 : vector<1x64xf32> to vector<1x1x64xf32>
    %61 = vector.broadcast %60 : vector<1x1x64xf32> to vector<16x16x64xf32>
    %62 = arith.mulf %57, %61 : vector<16x16x64xf32>
    %c0_57 = arith.constant 0 : index
    %c0_58 = arith.constant 0 : index
    %c0_59 = arith.constant 0 : index
    %63 = vector.load %arg6[%c0_57, %c0_58, %c0_59] : memref<3x1x64xf32, #tpu.memory_space<vmem>>, vector<1x1x64xf32>
    %64 = vector.shape_cast %63 : vector<1x1x64xf32> to vector<1x64xf32>
    %65 = vector.shape_cast %64 : vector<1x64xf32> to vector<1x1x64xf32>
    %66 = vector.broadcast %65 : vector<1x1x64xf32> to vector<16x16x64xf32>
    %67 = arith.addf %62, %66 : vector<16x16x64xf32>
    %cst_60 = arith.constant 0.000000e+00 : f32
    %68 = vector.broadcast %cst_60 : f32 to vector<16x16x64xf32>
    %69 = arith.maximumf %67, %68 : vector<16x16x64xf32>
    %c1_61 = arith.constant 1 : index
    %c1_62 = arith.constant 1 : index
    %c0_63 = arith.constant 0 : index
    %70 = vector.load %arg11[%c1_61, %c1_62, %c0_63] : memref<17x17x64xf32, #tpu.memory_space<vmem>>, vector<16x16x64xf32>
    tpu.vector_store %arg11[%c1_61, %c1_62, %c0_63], %69 {strides = array<i32>} : memref<17x17x64xf32, #tpu.memory_space<vmem>>, vector<16x16x64xf32>,
    %c0_64 = arith.constant 0 : index
    %c0_65 = arith.constant 0 : index
    %c0_66 = arith.constant 0 : index
    %71 = vector.load %arg11[%c0_64, %c0_65, %c0_66] : memref<17x17x64xf32, #tpu.memory_space<vmem>>, vector<16x16x64xf32>
    %c0_67 = arith.constant 0 : index
    %c1_68 = arith.constant 1 : index
    %c0_69 = arith.constant 0 : index
    %72 = vector.load %arg11[%c0_67, %c1_68, %c0_69] : memref<17x17x64xf32, #tpu.memory_space<vmem>>, vector<16x16x64xf32>
    %c1_70 = arith.constant 1 : index
    %c0_71 = arith.constant 0 : index
    %c0_72 = arith.constant 0 : index
    %73 = vector.load %arg11[%c1_70, %c0_71, %c0_72] : memref<17x17x64xf32, #tpu.memory_space<vmem>>, vector<16x16x64xf32>
    %c1_73 = arith.constant 1 : index
    %c1_74 = arith.constant 1 : index
    %c0_75 = arith.constant 0 : index
    %74 = vector.load %arg11[%c1_73, %c1_74, %c0_75] : memref<17x17x64xf32, #tpu.memory_space<vmem>>, vector<16x16x64xf32>
    %75 = tpu.concatenate %71, %72, %73, %74 in 2 : vector<16x16x64xf32>, vector<16x16x64xf32>, vector<16x16x64xf32>, vector<16x16x64xf32> -> vector<16x16x256xf32>
    %c1_76 = arith.constant 1 : index
    %c0_77 = arith.constant 0 : index
    %c0_78 = arith.constant 0 : index
    %76 = vector.load %arg4[%c1_76, %c0_77, %c0_78] : memref<3x256x64xf32, #tpu.memory_space<vmem>>, vector<1x256x64xf32>
    %77 = vector.shape_cast %76 : vector<1x256x64xf32> to vector<256x64xf32>
    %cst_79 = arith.constant dense<0.000000e+00> : vector<16x16x64xf32>
    %78 = tpu.matmul %75, %77, %cst_79 {dimension_numbers = #tpu.dot_dimension_numbers<[2], [0], [0, 1], [1], [0, 0, 0, 1, 1, 1], [], []>} : vector<16x16x256xf32>, vector<256x64xf32>, vector<16x16x64xf32> -> vector<16x16x64xf32>
    %c1_80 = arith.constant 1 : index
    %c0_81 = arith.constant 0 : index
    %c0_82 = arith.constant 0 : index
    %79 = vector.load %arg5[%c1_80, %c0_81, %c0_82] : memref<3x1x64xf32, #tpu.memory_space<vmem>>, vector<1x1x64xf32>
    %80 = vector.shape_cast %79 : vector<1x1x64xf32> to vector<1x64xf32>
    %81 = vector.shape_cast %80 : vector<1x64xf32> to vector<1x1x64xf32>
    %82 = vector.broadcast %81 : vector<1x1x64xf32> to vector<16x16x64xf32>
    %83 = arith.mulf %78, %82 : vector<16x16x64xf32>
    %c1_83 = arith.constant 1 : index
    %c0_84 = arith.constant 0 : index
    %c0_85 = arith.constant 0 : index
    %84 = vector.load %arg6[%c1_83, %c0_84, %c0_85] : memref<3x1x64xf32, #tpu.memory_space<vmem>>, vector<1x1x64xf32>
    %85 = vector.shape_cast %84 : vector<1x1x64xf32> to vector<1x64xf32>
    %86 = vector.shape_cast %85 : vector<1x64xf32> to vector<1x1x64xf32>
    %87 = vector.broadcast %86 : vector<1x1x64xf32> to vector<16x16x64xf32>
    %88 = arith.addf %83, %87 : vector<16x16x64xf32>
    %cst_86 = arith.constant 0.000000e+00 : f32
    %89 = vector.broadcast %cst_86 : f32 to vector<16x16x64xf32>
    %90 = arith.maximumf %88, %89 : vector<16x16x64xf32>
    %c1_87 = arith.constant 1 : index
    %c1_88 = arith.constant 1 : index
    %c0_89 = arith.constant 0 : index
    %91 = vector.load %arg10[%c1_87, %c1_88, %c0_89] : memref<17x17x64xf32, #tpu.memory_space<vmem>>, vector<16x16x64xf32>
    tpu.vector_store %arg10[%c1_87, %c1_88, %c0_89], %90 {strides = array<i32>} : memref<17x17x64xf32, #tpu.memory_space<vmem>>, vector<16x16x64xf32>,
    %c0_90 = arith.constant 0 : index
    %c0_91 = arith.constant 0 : index
    %c0_92 = arith.constant 0 : index
    %92 = vector.load %arg10[%c0_90, %c0_91, %c0_92] : memref<17x17x64xf32, #tpu.memory_space<vmem>>, vector<16x16x64xf32>
    %c0_93 = arith.constant 0 : index
    %c1_94 = arith.constant 1 : index
    %c0_95 = arith.constant 0 : index
    %93 = vector.load %arg10[%c0_93, %c1_94, %c0_95] : memref<17x17x64xf32, #tpu.memory_space<vmem>>, vector<16x16x64xf32>
    %c1_96 = arith.constant 1 : index
    %c0_97 = arith.constant 0 : index
    %c0_98 = arith.constant 0 : index
    %94 = vector.load %arg10[%c1_96, %c0_97, %c0_98] : memref<17x17x64xf32, #tpu.memory_space<vmem>>, vector<16x16x64xf32>
    %c1_99 = arith.constant 1 : index
    %c1_100 = arith.constant 1 : index
    %c0_101 = arith.constant 0 : index
    %95 = vector.load %arg10[%c1_99, %c1_100, %c0_101] : memref<17x17x64xf32, #tpu.memory_space<vmem>>, vector<16x16x64xf32>
    %96 = tpu.concatenate %92, %93, %94, %95 in 2 : vector<16x16x64xf32>, vector<16x16x64xf32>, vector<16x16x64xf32>, vector<16x16x64xf32> -> vector<16x16x256xf32>
    %c2 = arith.constant 2 : index
    %c0_102 = arith.constant 0 : index
    %c0_103 = arith.constant 0 : index
    %97 = vector.load %arg4[%c2, %c0_102, %c0_103] : memref<3x256x64xf32, #tpu.memory_space<vmem>>, vector<1x256x64xf32>
    %98 = vector.shape_cast %97 : vector<1x256x64xf32> to vector<256x64xf32>
    %cst_104 = arith.constant dense<0.000000e+00> : vector<16x16x64xf32>
    %99 = tpu.matmul %96, %98, %cst_104 {dimension_numbers = #tpu.dot_dimension_numbers<[2], [0], [0, 1], [1], [0, 0, 0, 1, 1, 1], [], []>} : vector<16x16x256xf32>, vector<256x64xf32>, vector<16x16x64xf32> -> vector<16x16x64xf32>
    %c2_105 = arith.constant 2 : index
    %c0_106 = arith.constant 0 : index
    %c0_107 = arith.constant 0 : index
    %100 = vector.load %arg5[%c2_105, %c0_106, %c0_107] : memref<3x1x64xf32, #tpu.memory_space<vmem>>, vector<1x1x64xf32>
    %101 = vector.shape_cast %100 : vector<1x1x64xf32> to vector<1x64xf32>
    %102 = vector.shape_cast %101 : vector<1x64xf32> to vector<1x1x64xf32>
    %103 = vector.broadcast %102 : vector<1x1x64xf32> to vector<16x16x64xf32>
    %104 = arith.mulf %99, %103 : vector<16x16x64xf32>
    %c2_108 = arith.constant 2 : index
    %c0_109 = arith.constant 0 : index
    %c0_110 = arith.constant 0 : index
    %105 = vector.load %arg6[%c2_108, %c0_109, %c0_110] : memref<3x1x64xf32, #tpu.memory_space<vmem>>, vector<1x1x64xf32>
    %106 = vector.shape_cast %105 : vector<1x1x64xf32> to vector<1x64xf32>
    %107 = vector.shape_cast %106 : vector<1x64xf32> to vector<1x1x64xf32>
    %108 = vector.broadcast %107 : vector<1x1x64xf32> to vector<16x16x64xf32>
    %109 = arith.addf %104, %108 : vector<16x16x64xf32>
    %cst_111 = arith.constant 0.000000e+00 : f32
    %110 = vector.broadcast %cst_111 : f32 to vector<16x16x64xf32>
    %111 = arith.maximumf %109, %110 : vector<16x16x64xf32>
    %c1_112 = arith.constant 1 : index
    %c1_113 = arith.constant 1 : index
    %c0_114 = arith.constant 0 : index
    %112 = vector.load %arg11[%c1_112, %c1_113, %c0_114] : memref<17x17x64xf32, #tpu.memory_space<vmem>>, vector<16x16x64xf32>
    tpu.vector_store %arg11[%c1_112, %c1_113, %c0_114], %111 {strides = array<i32>} : memref<17x17x64xf32, #tpu.memory_space<vmem>>, vector<16x16x64xf32>,
    %c0_115 = arith.constant 0 : index
    %c0_116 = arith.constant 0 : index
    %c0_117 = arith.constant 0 : index
    %113 = vector.load %arg7[%c0_115, %c0_116, %c0_117] : memref<2x2x64xf32, #tpu.memory_space<vmem>>, vector<2x2x64xf32>
    %cst_118 = arith.constant 0.000000e+00 : f32
    %114 = vector.broadcast %cst_118 : f32 to vector<16x16x1xf32>
    %c0_119 = arith.constant 0 : index
    %c0_120 = arith.constant 0 : index
    %c0_121 = arith.constant 0 : index
    %115 = vector.load %arg11[%c0_119, %c0_120, %c0_121] : memref<17x17x64xf32, #tpu.memory_space<vmem>>, vector<16x16x64xf32>
    %116 = vector.extract_strided_slice %113 {offsets = [0, 0, 0], sizes = [1, 1, 64], strides = [1, 1, 1]} : vector<2x2x64xf32> to vector<1x1x64xf32>
    %117 = vector.shape_cast %116 : vector<1x1x64xf32> to vector<64xf32>
    %118 = vector.shape_cast %117 : vector<64xf32> to vector<1x1x64xf32>
    %119 = vector.broadcast %118 : vector<1x1x64xf32> to vector<16x16x64xf32>
    %120 = arith.mulf %115, %119 : vector<16x16x64xf32>
    %cst_122 = arith.constant dense<0.000000e+00> : vector<16x16xf32>
    %121 = vector.multi_reduction <add>, %120, %cst_122 [2] : vector<16x16x64xf32> to vector<16x16xf32>
    %122 = vector.shape_cast %121 : vector<16x16xf32> to vector<16x16x1xf32>
    %123 = arith.addf %114, %122 : vector<16x16x1xf32>
    %c0_123 = arith.constant 0 : index
    %c1_124 = arith.constant 1 : index
    %c0_125 = arith.constant 0 : index
    %124 = vector.load %arg11[%c0_123, %c1_124, %c0_125] : memref<17x17x64xf32, #tpu.memory_space<vmem>>, vector<16x16x64xf32>
    %125 = vector.extract_strided_slice %113 {offsets = [0, 1, 0], sizes = [1, 1, 64], strides = [1, 1, 1]} : vector<2x2x64xf32> to vector<1x1x64xf32>
    %126 = vector.shape_cast %125 : vector<1x1x64xf32> to vector<64xf32>
    %127 = vector.shape_cast %126 : vector<64xf32> to vector<1x1x64xf32>
    %128 = vector.broadcast %127 : vector<1x1x64xf32> to vector<16x16x64xf32>
    %129 = arith.mulf %124, %128 : vector<16x16x64xf32>
    %cst_126 = arith.constant dense<0.000000e+00> : vector<16x16xf32>
    %130 = vector.multi_reduction <add>, %129, %cst_126 [2] : vector<16x16x64xf32> to vector<16x16xf32>
    %131 = vector.shape_cast %130 : vector<16x16xf32> to vector<16x16x1xf32>
    %132 = arith.addf %123, %131 : vector<16x16x1xf32>
    %c1_127 = arith.constant 1 : index
    %c0_128 = arith.constant 0 : index
    %c0_129 = arith.constant 0 : index
    %133 = vector.load %arg11[%c1_127, %c0_128, %c0_129] : memref<17x17x64xf32, #tpu.memory_space<vmem>>, vector<16x16x64xf32>
    %134 = vector.extract_strided_slice %113 {offsets = [1, 0, 0], sizes = [1, 1, 64], strides = [1, 1, 1]} : vector<2x2x64xf32> to vector<1x1x64xf32>
    %135 = vector.shape_cast %134 : vector<1x1x64xf32> to vector<64xf32>
    %136 = vector.shape_cast %135 : vector<64xf32> to vector<1x1x64xf32>
    %137 = vector.broadcast %136 : vector<1x1x64xf32> to vector<16x16x64xf32>
    %138 = arith.mulf %133, %137 : vector<16x16x64xf32>
    %cst_130 = arith.constant dense<0.000000e+00> : vector<16x16xf32>
    %139 = vector.multi_reduction <add>, %138, %cst_130 [2] : vector<16x16x64xf32> to vector<16x16xf32>
    %140 = vector.shape_cast %139 : vector<16x16xf32> to vector<16x16x1xf32>
    %141 = arith.addf %132, %140 : vector<16x16x1xf32>
    %c1_131 = arith.constant 1 : index
    %c1_132 = arith.constant 1 : index
    %c0_133 = arith.constant 0 : index
    %142 = vector.load %arg11[%c1_131, %c1_132, %c0_133] : memref<17x17x64xf32, #tpu.memory_space<vmem>>, vector<16x16x64xf32>
    %143 = vector.extract_strided_slice %113 {offsets = [1, 1, 0], sizes = [1, 1, 64], strides = [1, 1, 1]} : vector<2x2x64xf32> to vector<1x1x64xf32>
    %144 = vector.shape_cast %143 : vector<1x1x64xf32> to vector<64xf32>
    %145 = vector.shape_cast %144 : vector<64xf32> to vector<1x1x64xf32>
    %146 = vector.broadcast %145 : vector<1x1x64xf32> to vector<16x16x64xf32>
    %147 = arith.mulf %142, %146 : vector<16x16x64xf32>
    %cst_134 = arith.constant dense<0.000000e+00> : vector<16x16xf32>
    %148 = vector.multi_reduction <add>, %147, %cst_134 [2] : vector<16x16x64xf32> to vector<16x16xf32>
    %149 = vector.shape_cast %148 : vector<16x16xf32> to vector<16x16x1xf32>
    %150 = arith.addf %141, %149 : vector<16x16x1xf32>
    %c0_135 = arith.constant 0 : index
    %c0_136 = arith.constant 0 : index
    %c0_137 = arith.constant 0 : index
    %c0_138 = arith.constant 0 : index
    %151 = vector.load %arg1[%c0_135, %c0_136, %c0_137, %c0_138] : memref<1x16x16x1xf32, #tpu.memory_space<vmem>>, vector<1x16x16x1xf32>
    %152 = vector.shape_cast %151 : vector<1x16x16x1xf32> to vector<16x16x1xf32>
    %153 = arith.subf %152, %150 : vector<16x16x1xf32>
    %c0_139 = arith.constant 0 : index
    %c0_140 = arith.constant 0 : index
    %c0_141 = arith.constant 0 : index
    %c0_142 = arith.constant 0 : index
    %154 = vector.load %arg8[%c0_139, %c0_140, %c0_141, %c0_142] : memref<1x16x16x1xf32, #tpu.memory_space<vmem>>, vector<1x16x16x1xf32>
    %155 = vector.shape_cast %154 : vector<1x16x16x1xf32> to vector<16x16x1xf32>
    %156 = vector.shape_cast %153 : vector<16x16x1xf32> to vector<1x16x16x1xf32>
    tpu.vector_store %arg8[%c0_139, %c0_140, %c0_141, %c0_142], %156 {strides = array<i32>} : memref<1x16x16x1xf32, #tpu.memory_space<vmem>>, vector<1x16x16x1xf32>,
    return
  }
  func.func @transform_0(%arg0: i32) -> (i32, i32, i32, i32) {
    %c0_i32 = arith.constant 0 : i32
    %c0_i32_0 = arith.constant 0 : i32
    %c0_i32_1 = arith.constant 0 : i32
    %c0_i32_2 = arith.constant 0 : i32
    return %arg0, %c0_i32, %c0_i32_0, %c0_i32_1 : i32, i32, i32, i32
  }
  func.func @transform_1(%arg0: i32) -> (i32, i32, i32) {
    %c0_i32 = arith.constant 0 : i32
    %c0_i32_0 = arith.constant 0 : i32
    %c0_i32_1 = arith.constant 0 : i32
    %c0_i32_2 = arith.constant 0 : i32
    return %c0_i32, %c0_i32_0, %c0_i32_1 : i32, i32, i32
  }
  func.func @transform_2(%arg0: i32) -> (i32, i32) {
    %c0_i32 = arith.constant 0 : i32
    %c0_i32_0 = arith.constant 0 : i32
    %c0_i32_1 = arith.constant 0 : i32
    return %c0_i32, %c0_i32_0 : i32, i32
  }
  func.func @transform_3(%arg0: i32) -> (i32, i32, i32) {
    %c0_i32 = arith.constant 0 : i32
    %c0_i32_0 = arith.constant 0 : i32
    %c0_i32_1 = arith.constant 0 : i32
    %c0_i32_2 = arith.constant 0 : i32
    return %c0_i32, %c0_i32_0, %c0_i32_1 : i32, i32, i32
  }
  func.func @transform_4(%arg0: i32) -> (i32, i32, i32) {
    %c0_i32 = arith.constant 0 : i32
    %c0_i32_0 = arith.constant 0 : i32
    %c0_i32_1 = arith.constant 0 : i32
    %c0_i32_2 = arith.constant 0 : i32
    return %c0_i32, %c0_i32_0, %c0_i32_1 : i32, i32, i32
  }
  func.func @transform_5(%arg0: i32) -> (i32, i32, i32) {
    %c0_i32 = arith.constant 0 : i32
    %c0_i32_0 = arith.constant 0 : i32
    %c0_i32_1 = arith.constant 0 : i32
    %c0_i32_2 = arith.constant 0 : i32
    return %c0_i32, %c0_i32_0, %c0_i32_1 : i32, i32, i32
  }
  func.func @transform_6(%arg0: i32) -> (i32, i32, i32) {
    %c0_i32 = arith.constant 0 : i32
    %c0_i32_0 = arith.constant 0 : i32
    %c0_i32_1 = arith.constant 0 : i32
    %c0_i32_2 = arith.constant 0 : i32
    return %c0_i32, %c0_i32_0, %c0_i32_1 : i32, i32, i32
  }
  func.func @transform_7(%arg0: i32) -> (i32, i32, i32, i32) {
    %c0_i32 = arith.constant 0 : i32
    %c0_i32_0 = arith.constant 0 : i32
    %c0_i32_1 = arith.constant 0 : i32
    %c0_i32_2 = arith.constant 0 : i32
    return %arg0, %c0_i32, %c0_i32_0, %c0_i32_1 : i32, i32, i32, i32
  }
}

</mosaic_0001>

<llo_original>
// kernel: dncnn_forward.1
$region0: #{dncnn_forward.1}
  #allocation0 [shape = 'u32[]', space=smem, size = 0x4, offset = 0x4, fixed_abs, tag = 'smem constant byte address 0x4 - core index']
  #allocation1 [shape = 'u32[144,128]{1,0:T(1,128)}', space=vmem, size = 0x12000, scoped, tag = 'internal scratch']
  #allocation2 [shape = 'f32[17,17,1]{2,1,0:T(8,128)}', space=vmem, size = 0x33000, scoped, tag = 'scratch operand']
  #allocation3 [shape = 'f32[17,17,64]{2,1,0:T(8,128)}', space=vmem, size = 0x33000, scoped, tag = 'scratch operand']
  #allocation4 [shape = 'f32[17,17,64]{2,1,0:T(8,128)}', space=vmem, size = 0x33000, scoped, tag = 'scratch operand']
  %s0 = inlined_call_operand.vmem [shape: f32[2,16,16,1], index: 0, kind: input, shape index: {}]
  %s1 = inlined_call_operand.vmem [shape: f32[2,2,64], index: 1, kind: input, shape index: {}]
  %s2 = inlined_call_operand.vmem [shape: f32[1,64], index: 2, kind: input, shape index: {}]
  %s3 = inlined_call_operand.hbm [shape: f32[3,256,64], index: 3, kind: input, shape index: {}]
  %s4 = inlined_call_operand.vmem [shape: f32[3,1,64], index: 4, kind: input, shape index: {}]
  %s5 = inlined_call_operand.vmem [shape: f32[3,1,64], index: 5, kind: input, shape index: {}]
  %s6 = inlined_call_operand.vmem [shape: f32[2,2,64], index: 6, kind: input, shape index: {}]
  %s7 = inlined_call_operand.vmem [shape: f32[2,16,16,1], index: 7, kind: output, shape index: {}]
  %s8 = sld [smem:[#allocation0]]
  $region65: #{dncnn_forward.1} parent=0
    _
  %s10 = ssub.s32 1, %s8
  %s11 = scalar_select 0, %s10, %s8
  $region1: #{dncnn_forward.1} parent=0
    #allocation5 [shape = 'u8[393216]{0}', space=vmem, size = 0x60000, scoped, tag = 'input window, operand 3, single buffered']
    #allocation6 [shape = 's32[2]{0}', space=sflag, size = 0x8, scoped, tag = 'scoped memory for dncnn_forward.1']
    %12 = vsyncpa [#allocation6], 0
    loop: start=0, step=1, limit=4
    $region2: #{dncnn_forward.1} parent=1 // loop_pre_header
      _
    $region3: #{dncnn_forward.1} parent=1 // loop_header
      %s14 = sphi 0, %s18
      %p15 = scmp.ge.s32.totalorder %s14, 4
      %s24 = sphi 0, %s26
      %s27 = sphi 0, %s24
      %s28 = sphi 0, %s27
      %s44 = sphi 0, %s28
      %s48 = sphi 0, %s48
      %s50 = sphi 0, %s48
      %s51 = sphi 0, %s50
      %s65 = sphi 0, %s51
      %s69 = sphi 0, %s69
      %s71 = sphi 0, %s69
      %s72 = sphi 0, %s71
      %s86 = sphi 0, %s72
      %s90 = sphi 0, %s90
      %s92 = sphi 0, %s90
      %s93 = sphi 0, %s92
      %s107 = sphi 0, %s93
      %s111 = sphi 0, %s111
      %s113 = sphi 0, %s111
      %s114 = sphi 0, %s113
      %s128 = sphi 0, %s114
      %s132 = sphi 0, %s132
      %s134 = sphi 0, %s132
      %s135 = sphi 0, %s134
      %s149 = sphi 0, %s135
      %s153 = sphi 0, %s153
      %s155 = sphi 0, %s153
      %s156 = sphi 0, %s155
      %s170 = sphi 0, %s156
      %s176 = sphi 0, %s178
      %s179 = sphi 0, %s176
      %s180 = sphi 0, %s179
      %s196 = sphi 0, %s180
    $region4: #{dncnn_forward.1} parent=1 // loop_header_branch
      %17 = sbr.rel (%p15) target = $region8
    $region5: #{dncnn_forward.1} parent=1 // loop_body
      %s19 = ssub.s32 %s14, 1
      %s20 = ssub.s32 %s14, 2
      %s21 = sadd.s32 %s14, 1
      %s22 = ssub.s32 %s14, %s21
      %p23 = scmp.eq.s32.totalorder %s22, 0
      %s25 = sadd.s32 %s24, 1
      %s26 = scalar_select %p23, %s24, %s25
      %p29 = pneg %p23
      %p30 = scmp.eq.s32.totalorder %s14, 1
      %p31 = por %p29, %p30
      %p32 = scmp.ne.s32.totalorder %s24, %s27
      %p33 = scmp.eq.s32.totalorder %s14, 0
      %p34 = por %p32, %p33
      %p35 = scmp.ne.s32.totalorder %s24, %s27
      %p36 = scmp.eq.s32.totalorder %s19, 1
      %p37 = por %p35, %p36
      %p38 = scmp.ne.s32.totalorder %s27, %s28
      %p39 = scmp.eq.s32.totalorder %s19, 0
      %p40 = por %p38, %p39
      %p41 = scmp.ne.s32.totalorder %s27, %s28
      %p42 = scmp.eq.s32.totalorder %s20, 1
      %p43 = por %p41, %p42
      %p45 = scmp.ne.s32.totalorder %s28, %s44
      %p46 = scmp.eq.s32.totalorder %s20, 0
      %p47 = por %p45, %p46
      %s49 = sadd.s32 %s48, 1
      %p52 = scmp.eq.s32.totalorder %s14, 1
      %p53 = scmp.ne.s32.totalorder %s48, %s50
      %p54 = scmp.eq.s32.totalorder %s14, 0
      %p55 = por %p53, %p54
      %p56 = scmp.ne.s32.totalorder %s48, %s50
      %p57 = scmp.eq.s32.totalorder %s19, 1
      %p58 = por %p56, %p57
      %p59 = scmp.ne.s32.totalorder %s50, %s51
      %p60 = scmp.eq.s32.totalorder %s19, 0
      %p61 = por %p59, %p60
      %p62 = scmp.ne.s32.totalorder %s50, %s51
      %p63 = scmp.eq.s32.totalorder %s20, 1
      %p64 = por %p62, %p63
      %p66 = scmp.ne.s32.totalorder %s51, %s65
      %p67 = scmp.eq.s32.totalorder %s20, 0
      %p68 = por %p66, %p67
      %s70 = sadd.s32 %s69, 1
      %p73 = scmp.eq.s32.totalorder %s14, 1
      %p74 = scmp.ne.s32.totalorder %s69, %s71
      %p75 = scmp.eq.s32.totalorder %s14, 0
      %p76 = por %p74, %p75
      %p77 = scmp.ne.s32.totalorder %s69, %s71
      %p78 = scmp.eq.s32.totalorder %s19, 1
      %p79 = por %p77, %p78
      %p80 = scmp.ne.s32.totalorder %s71, %s72
      %p81 = scmp.eq.s32.totalorder %s19, 0
      %p82 = por %p80, %p81
      %p83 = scmp.ne.s32.totalorder %s71, %s72
      %p84 = scmp.eq.s32.totalorder %s20, 1
      %p85 = por %p83, %p84
      %p87 = scmp.ne.s32.totalorder %s72, %s86
      %p88 = scmp.eq.s32.totalorder %s20, 0
      %p89 = por %p87, %p88
      %s91 = sadd.s32 %s90, 1
      %p94 = scmp.eq.s32.totalorder %s14, 1
      %p95 = scmp.ne.s32.totalorder %s90, %s92
      %p96 = scmp.eq.s32.totalorder %s14, 0
      %p97 = por %p95, %p96
      %p98 = scmp.ne.s32.totalorder %s90, %s92
      %p99 = scmp.eq.s32.totalorder %s19, 1
      %p100 = por %p98, %p99
      %p101 = scmp.ne.s32.totalorder %s92, %s93
      %p102 = scmp.eq.s32.totalorder %s19, 0
      %p103 = por %p101, %p102
      %p104 = scmp.ne.s32.totalorder %s92, %s93
      %p105 = scmp.eq.s32.totalorder %s20, 1
      %p106 = por %p104, %p105
      %p108 = scmp.ne.s32.totalorder %s93, %s107
      %p109 = scmp.eq.s32.totalorder %s20, 0
      %p110 = por %p108, %p109
      %s112 = sadd.s32 %s111, 1
      %p115 = scmp.eq.s32.totalorder %s14, 1
      %p116 = scmp.ne.s32.totalorder %s111, %s113
      %p117 = scmp.eq.s32.totalorder %s14, 0
      %p118 = por %p116, %p117
      %p119 = scmp.ne.s32.totalorder %s111, %s113
      %p120 = scmp.eq.s32.totalorder %s19, 1
      %p121 = por %p119, %p120
      %p122 = scmp.ne.s32.totalorder %s113, %s114
      %p123 = scmp.eq.s32.totalorder %s19, 0
      %p124 = por %p122, %p123
      %p125 = scmp.ne.s32.totalorder %s113, %s114
      %p126 = scmp.eq.s32.totalorder %s20, 1
      %p127 = por %p125, %p126
      %p129 = scmp.ne.s32.totalorder %s114, %s128
      %p130 = scmp.eq.s32.totalorder %s20, 0
      %p131 = por %p129, %p130
      %s133 = sadd.s32 %s132, 1
      %p136 = scmp.eq.s32.totalorder %s14, 1
      %p137 = scmp.ne.s32.totalorder %s132, %s134
      %p138 = scmp.eq.s32.totalorder %s14, 0
      %p139 = por %p137, %p138
      %p140 = scmp.ne.s32.totalorder %s132, %s134
      %p141 = scmp.eq.s32.totalorder %s19, 1
      %p142 = por %p140, %p141
      %p143 = scmp.ne.s32.totalorder %s134, %s135
      %p144 = scmp.eq.s32.totalorder %s19, 0
      %p145 = por %p143, %p144
      %p146 = scmp.ne.s32.totalorder %s134, %s135
      %p147 = scmp.eq.s32.totalorder %s20, 1
      %p148 = por %p146, %p147
      %p150 = scmp.ne.s32.totalorder %s135, %s149
      %p151 = scmp.eq.s32.totalorder %s20, 0
      %p152 = por %p150, %p151
      %s154 = sadd.s32 %s153, 1
      %p157 = scmp.eq.s32.totalorder %s14, 1
      %p158 = scmp.ne.s32.totalorder %s153, %s155
      %p159 = scmp.eq.s32.totalorder %s14, 0
      %p160 = por %p158, %p159
      %p161 = scmp.ne.s32.totalorder %s153, %s155
      %p162 = scmp.eq.s32.totalorder %s19, 1
      %p163 = por %p161, %p162
      %p164 = scmp.ne.s32.totalorder %s155, %s156
      %p165 = scmp.eq.s32.totalorder %s19, 0
      %p166 = por %p164, %p165
      %p167 = scmp.ne.s32.totalorder %s155, %s156
      %p168 = scmp.eq.s32.totalorder %s20, 1
      %p169 = por %p167, %p168
      %p171 = scmp.ne.s32.totalorder %s156, %s170
      %p172 = scmp.eq.s32.totalorder %s20, 0
      %p173 = por %p171, %p172
      %s174 = ssub.s32 %s14, %s21
      %p175 = scmp.eq.s32.totalorder %s174, 0
      %s177 = sadd.s32 %s176, 1
      %s178 = scalar_select %p175, %s176, %s177
      %p181 = pneg %p175
      %p182 = scmp.eq.s32.totalorder %s14, 1
      %p183 = por %p181, %p182
      %p184 = scmp.ne.s32.totalorder %s176, %s179
      %p185 = scmp.eq.s32.totalorder %s14, 0
      %p186 = por %p184, %p185
      %p187 = scmp.ne.s32.totalorder %s176, %s179
      %p188 = scmp.eq.s32.totalorder %s19, 1
      %p189 = por %p187, %p188
      %p190 = scmp.ne.s32.totalorder %s179, %s180
      %p191 = scmp.eq.s32.totalorder %s19, 0
      %p192 = por %p190, %p191
      %p193 = scmp.ne.s32.totalorder %s179, %s180
      %p194 = scmp.eq.s32.totalorder %s20, 1
      %p195 = por %p193, %p194
      %p197 = scmp.ne.s32.totalorder %s180, %s196
      %p198 = scmp.eq.s32.totalorder %s20, 0
      %p199 = por %p197, %p198
      %p200 = scmp.le.s32.totalorder 1, %s14
      %p201 = scmp.lt.s32.totalorder %s14, 3
      %p202 = pnand %p200, %p201
      %p203 = pneg %p202
      // Predicated region
      $region9: #{dncnn_forward.1} parent=5 // pred_check
        _
      $region10: #{dncnn_forward.1} parent=5 // pred_check_branch
        %205 = sbr.rel (%p202) target = $region12
      $region11: #{dncnn_forward.1} parent=5 // pred_region
        %s206 = ssub.s32 %s14, 1
        // Predicated region
        $region13: #{dncnn_forward.1} parent=11 // pred_check
          %p207 = pneg %p61
        $region14: #{dncnn_forward.1} parent=11 // pred_check_branch
          %209 = sbr.rel (%p207) target = $region16
        $region15: #{dncnn_forward.1} parent=11 // pred_region
          _
        $region16: #{dncnn_forward.1} parent=11 // pred_fallthru
          _
        // Predicated region
        $region17: #{dncnn_forward.1} parent=11 // pred_check
          %p210 = pneg %p82
        $region18: #{dncnn_forward.1} parent=11 // pred_check_branch
          %212 = sbr.rel (%p210) target = $region20
        $region19: #{dncnn_forward.1} parent=11 // pred_region
          _
        $region20: #{dncnn_forward.1} parent=11 // pred_fallthru
          _
        // Predicated region
        $region21: #{dncnn_forward.1} parent=11 // pred_check
          %p213 = pneg %p103
        $region22: #{dncnn_forward.1} parent=11 // pred_check_branch
          %215 = sbr.rel (%p213) target = $region24
        $region23: #{dncnn_forward.1} parent=11 // pred_region
          %s217 = ssub.s32 12288, 12288
          %218 = vsyncadd [#allocation6], %s217
          %s219 = sshll.u32 [#allocation5], 4
          %s220 = int_to_ptr.vmem [resolvable:$true] %s219
          %225 = dma.hbm_to_vmem [thread:$0]  %s3, 12288, %s220, [#allocation6], 128, 128, 8
        $region24: #{dncnn_forward.1} parent=11 // pred_fallthru
          _
        // Predicated region
        $region25: #{dncnn_forward.1} parent=11 // pred_check
          %p226 = pneg %p124
        $region26: #{dncnn_forward.1} parent=11 // pred_check_branch
          %228 = sbr.rel (%p226) target = $region28
        $region27: #{dncnn_forward.1} parent=11 // pred_region
          _
        $region28: #{dncnn_forward.1} parent=11 // pred_fallthru
          _
        // Predicated region
        $region29: #{dncnn_forward.1} parent=11 // pred_check
          %p229 = pneg %p145
        $region30: #{dncnn_forward.1} parent=11 // pred_check_branch
          %231 = sbr.rel (%p229) target = $region32
        $region31: #{dncnn_forward.1} parent=11 // pred_region
          _
        $region32: #{dncnn_forward.1} parent=11 // pred_fallthru
          _
        // Predicated region
        $region33: #{dncnn_forward.1} parent=11 // pred_check
          %p232 = pneg %p166
        $region34: #{dncnn_forward.1} parent=11 // pred_check_branch
          %234 = sbr.rel (%p232) target = $region36
        $region35: #{dncnn_forward.1} parent=11 // pred_region
          _
        $region36: #{dncnn_forward.1} parent=11 // pred_fallthru
          _
      $region12: #{dncnn_forward.1} parent=5 // pred_fallthru
        _
      %p235 = scmp.lt.s32.totalorder %s14, 2
      // Predicated region
      $region37: #{dncnn_forward.1} parent=5 // pred_check
        %p236 = pneg %p235
      $region38: #{dncnn_forward.1} parent=5 // pred_check_branch
        %238 = sbr.rel (%p236) target = $region40
      $region39: #{dncnn_forward.1} parent=5 // pred_region
        // Predicated region
        $region41: #{dncnn_forward.1} parent=39 // pred_check
          %p239 = pneg %p34
        $region42: #{dncnn_forward.1} parent=39 // pred_check_branch
          %241 = sbr.rel (%p239) target = $region44
        $region43: #{dncnn_forward.1} parent=39 // pred_region
          %p242 = scmp.lt.s32.totalorder %s14, 1
          %s243 = scalar_select %p242, %s14, 1
          %s244 = smul.addr %s243, 32
          %s245 = smul.addr %s244, 8
          %s246 = scalar_lea.vmem %s0, %s245
        $region44: #{dncnn_forward.1} parent=39 // pred_fallthru
          _
      $region40: #{dncnn_forward.1} parent=5 // pred_fallthru
        _
      %p247 = scmp.le.s32.totalorder 1, %s14
      %p248 = scmp.lt.s32.totalorder %s14, 3
      %p249 = pnand %p247, %p248
      %p250 = pneg %p249
      // Predicated region
      $region45: #{dncnn_forward.1} parent=5 // pred_check
        _
      $region46: #{dncnn_forward.1} parent=5 // pred_check_branch
        %252 = sbr.rel (%p249) target = $region48
      $region47: #{dncnn_forward.1} parent=5 // pred_region
        %s253 = ssub.s32 %s14, 1
        // Predicated region
        $region49: #{dncnn_forward.1} parent=47 // pred_check
          %p254 = pneg %p103
        $region50: #{dncnn_forward.1} parent=47 // pred_check_branch
          %256 = sbr.rel (%p254) target = $region52
        $region51: #{dncnn_forward.1} parent=47 // pred_region
          %257 = dma.done [#allocation6], 12288
        $region52: #{dncnn_forward.1} parent=47 // pred_fallthru
          _
        %p258 = scmp.lt.s32.totalorder %s19, 1
        %s259 = scalar_select %p258, %s19, 1
        %s260 = smul.addr %s259, 32
        %s261 = smul.addr %s260, 8
        %s262 = scalar_lea.vmem %s0, %s261
        %p263 = pneg %p40
        %p264 = pneg %p37
        %p265 = pneg %p61
        %p266 = pneg %p58
        %p267 = pneg %p82
        %p268 = pneg %p79
        %p269 = pneg %p103
        %p270 = pneg %p100
        %p271 = pneg %p124
        %p272 = pneg %p121
        %p273 = pneg %p145
        %p274 = pneg %p142
        %p275 = pneg %p166
        %p276 = pneg %p163
        %p277 = pneg %p192
        %p278 = pneg %p189
        %p279 = scmp.lt.s32.totalorder %s19, 1
        %s280 = scalar_select %p279, %s19, 1
        %s281 = smul.addr %s280, 32
        %s282 = smul.addr %s281, 8
        %s283 = scalar_lea.vmem %s7, %s282
        %p284 = scmp.lt.s32.totalorder %s19, 1
        %s285 = scalar_select %p284, %s19, 1
        %s286 = smul.addr %s285, 32
        %s287 = smul.addr %s286, 8
        %s288 = scalar_lea.vmem %s0, %s287
        %p289 = scmp.lt.s32.totalorder %s19, 1
        %s290 = scalar_select %p289, %s19, 1
        %s291 = smul.addr %s290, 32
        %s292 = smul.addr %s291, 8
        %s293 = scalar_lea.vmem %s7, %s292
        %vm294 = vcmask 7168
        %295 = vst.msk [vmem:[#allocation2] sm:$0xff] %vm294, 0.0
        %296 = vst.msk [vmem:[#allocation2 + $0x8] sm:$0xff] %vm294, 0.0
        %vm297 = vcmask 0
        %298 = vst.msk [vmem:[#allocation2 + $0x10] sm:$0x1] %vm297, 0.0
        %299 = vst.msk [vmem:[#allocation2 + $0x18] sm:$0xff] %vm294, 0.0
        %300 = vst.msk [vmem:[#allocation2 + $0x20] sm:$0xff] %vm294, 0.0
        %301 = vst.msk [vmem:[#allocation2 + $0x28] sm:$0x1] %vm297, 0.0
        %302 = vst.msk [vmem:[#allocation2 + $0x30] sm:$0xff] %vm294, 0.0
        %303 = vst.msk [vmem:[#allocation2 + $0x38] sm:$0xff] %vm294, 0.0
        %304 = vst.msk [vmem:[#allocation2 + $0x40] sm:$0x1] %vm297, 0.0
        %305 = vst.msk [vmem:[#allocation2 + $0x48] sm:$0xff] %vm294, 0.0
        %306 = vst.msk [vmem:[#allocation2 + $0x50] sm:$0xff] %vm294, 0.0
        %307 = vst.msk [vmem:[#allocation2 + $0x58] sm:$0x1] %vm297, 0.0
        %308 = vst.msk [vmem:[#allocation2 + $0x60] sm:$0xff] %vm294, 0.0
        %309 = vst.msk [vmem:[#allocation2 + $0x68] sm:$0xff] %vm294, 0.0
        %310 = vst.msk [vmem:[#allocation2 + $0x70] sm:$0x1] %vm297, 0.0
        %311 = vst.msk [vmem:[#allocation2 + $0x78] sm:$0xff] %vm294, 0.0
        %312 = vst.msk [vmem:[#allocation2 + $0x80] sm:$0xff] %vm294, 0.0
        %313 = vst.msk [vmem:[#allocation2 + $0x88] sm:$0x1] %vm297, 0.0
        %314 = vst.msk [vmem:[#allocation2 + $0x90] sm:$0xff] %vm294, 0.0
        %315 = vst.msk [vmem:[#allocation2 + $0x98] sm:$0xff] %vm294, 0.0
        %316 = vst.msk [vmem:[#allocation2 + $0xa0] sm:$0x1] %vm297, 0.0
        %317 = vst.msk [vmem:[#allocation2 + $0xa8] sm:$0xff] %vm294, 0.0
        %318 = vst.msk [vmem:[#allocation2 + $0xb0] sm:$0xff] %vm294, 0.0
        %319 = vst.msk [vmem:[#allocation2 + $0xb8] sm:$0x1] %vm297, 0.0
        %320 = vst.msk [vmem:[#allocation2 + $0xc0] sm:$0xff] %vm294, 0.0
        %321 = vst.msk [vmem:[#allocation2 + $0xc8] sm:$0xff] %vm294, 0.0
        %322 = vst.msk [vmem:[#allocation2 + $0xd0] sm:$0x1] %vm297, 0.0
        %323 = vst.msk [vmem:[#allocation2 + $0xd8] sm:$0xff] %vm294, 0.0
        %324 = vst.msk [vmem:[#allocation2 + $0xe0] sm:$0xff] %vm294, 0.0
        %325 = vst.msk [vmem:[#allocation2 + $0xe8] sm:$0x1] %vm297, 0.0
        %326 = vst.msk [vmem:[#allocation2 + $0xf0] sm:$0xff] %vm294, 0.0
        %327 = vst.msk [vmem:[#allocation2 + $0xf8] sm:$0xff] %vm294, 0.0
        %328 = vst.msk [vmem:[#allocation2 + $0x100] sm:$0x1] %vm297, 0.0
        %329 = vst.msk [vmem:[#allocation2 + $0x108] sm:$0xff] %vm294, 0.0
        %330 = vst.msk [vmem:[#allocation2 + $0x110] sm:$0xff] %vm294, 0.0
        %331 = vst.msk [vmem:[#allocation2 + $0x118] sm:$0x1] %vm297, 0.0
        %332 = vst.msk [vmem:[#allocation2 + $0x120] sm:$0xff] %vm294, 0.0
        %333 = vst.msk [vmem:[#allocation2 + $0x128] sm:$0xff] %vm294, 0.0
        %334 = vst.msk [vmem:[#allocation2 + $0x130] sm:$0x1] %vm297, 0.0
        %335 = vst.msk [vmem:[#allocation2 + $0x138] sm:$0xff] %vm294, 0.0
        %336 = vst.msk [vmem:[#allocation2 + $0x140] sm:$0xff] %vm294, 0.0
        %337 = vst.msk [vmem:[#allocation2 + $0x148] sm:$0x1] %vm297, 0.0
        %338 = vst.msk [vmem:[#allocation2 + $0x150] sm:$0xff] %vm294, 0.0
        %339 = vst.msk [vmem:[#allocation2 + $0x158] sm:$0xff] %vm294, 0.0
        %340 = vst.msk [vmem:[#allocation2 + $0x160] sm:$0x1] %vm297, 0.0
        %341 = vst.msk [vmem:[#allocation2 + $0x168] sm:$0xff] %vm294, 0.0
        %342 = vst.msk [vmem:[#allocation2 + $0x170] sm:$0xff] %vm294, 0.0
        %343 = vst.msk [vmem:[#allocation2 + $0x178] sm:$0x1] %vm297, 0.0
        %344 = vst.msk [vmem:[#allocation2 + $0x180] sm:$0xff] %vm294, 0.0
        %345 = vst.msk [vmem:[#allocation2 + $0x188] sm:$0xff] %vm294, 0.0
        %346 = vst.msk [vmem:[#allocation2 + $0x190] sm:$0x1] %vm297, 0.0
        %vm347 = vcmask 523264
        %348 = vst.msk [vmem:[#allocation3] sm:$0xff] %vm347, 0.0
        %349 = vst.msk [vmem:[#allocation3 + $0x8] sm:$0xff] %vm347, 0.0
        %vm350 = vcmask 516096
        %351 = vst.msk [vmem:[#allocation3 + $0x10] sm:$0x1] %vm350, 0.0
        %352 = vst.msk [vmem:[#allocation3 + $0x18] sm:$0xff] %vm347, 0.0
        %353 = vst.msk [vmem:[#allocation3 + $0x20] sm:$0xff] %vm347, 0.0
        %354 = vst.msk [vmem:[#allocation3 + $0x28] sm:$0x1] %vm350, 0.0
        %355 = vst.msk [vmem:[#allocation3 + $0x30] sm:$0xff] %vm347, 0.0
        %356 = vst.msk [vmem:[#allocation3 + $0x38] sm:$0xff] %vm347, 0.0
        %357 = vst.msk [vmem:[#allocation3 + $0x40] sm:$0x1] %vm350, 0.0
        %358 = vst.msk [vmem:[#allocation3 + $0x48] sm:$0xff] %vm347, 0.0
        %359 = vst.msk [vmem:[#allocation3 + $0x50] sm:$0xff] %vm347, 0.0
        %360 = vst.msk [vmem:[#allocation3 + $0x58] sm:$0x1] %vm350, 0.0
        %361 = vst.msk [vmem:[#allocation3 + $0x60] sm:$0xff] %vm347, 0.0
        %362 = vst.msk [vmem:[#allocation3 + $0x68] sm:$0xff] %vm347, 0.0
        %363 = vst.msk [vmem:[#allocation3 + $0x70] sm:$0x1] %vm350, 0.0
        %364 = vst.msk [vmem:[#allocation3 + $0x78] sm:$0xff] %vm347, 0.0
        %365 = vst.msk [vmem:[#allocation3 + $0x80] sm:$0xff] %vm347, 0.0
        %366 = vst.msk [vmem:[#allocation3 + $0x88] sm:$0x1] %vm350, 0.0
        %367 = vst.msk [vmem:[#allocation3 + $0x90] sm:$0xff] %vm347, 0.0
        %368 = vst.msk [vmem:[#allocation3 + $0x98] sm:$0xff] %vm347, 0.0
        %369 = vst.msk [vmem:[#allocation3 + $0xa0] sm:$0x1] %vm350, 0.0
        %370 = vst.msk [vmem:[#allocation3 + $0xa8] sm:$0xff] %vm347, 0.0
        %371 = vst.msk [vmem:[#allocation3 + $0xb0] sm:$0xff] %vm347, 0.0
        %372 = vst.msk [vmem:[#allocation3 + $0xb8] sm:$0x1] %vm350, 0.0
        %373 = vst.msk [vmem:[#allocation3 + $0xc0] sm:$0xff] %vm347, 0.0
        %374 = vst.msk [vmem:[#allocation3 + $0xc8] sm:$0xff] %vm347, 0.0
        %375 = vst.msk [vmem:[#allocation3 + $0xd0] sm:$0x1] %vm350, 0.0
        %376 = vst.msk [vmem:[#allocation3 + $0xd8] sm:$0xff] %vm347, 0.0
        %377 = vst.msk [vmem:[#allocation3 + $0xe0] sm:$0xff] %vm347, 0.0
        %378 = vst.msk [vmem:[#allocation3 + $0xe8] sm:$0x1] %vm350, 0.0
        %379 = vst.msk [vmem:[#allocation3 + $0xf0] sm:$0xff] %vm347, 0.0
        %380 = vst.msk [vmem:[#allocation3 + $0xf8] sm:$0xff] %vm347, 0.0
        %381 = vst.msk [vmem:[#allocation3 + $0x100] sm:$0x1] %vm350, 0.0
        %382 = vst.msk [vmem:[#allocation3 + $0x108] sm:$0xff] %vm347, 0.0
        %383 = vst.msk [vmem:[#allocation3 + $0x110] sm:$0xff] %vm347, 0.0
        %384 = vst.msk [vmem:[#allocation3 + $0x118] sm:$0x1] %vm350, 0.0
        %385 = vst.msk [vmem:[#allocation3 + $0x120] sm:$0xff] %vm347, 0.0
        %386 = vst.msk [vmem:[#allocation3 + $0x128] sm:$0xff] %vm347, 0.0
        %387 = vst.msk [vmem:[#allocation3 + $0x130] sm:$0x1] %vm350, 0.0
        %388 = vst.msk [vmem:[#allocation3 + $0x138] sm:$0xff] %vm347, 0.0
        %389 = vst.msk [vmem:[#allocation3 + $0x140] sm:$0xff] %vm347, 0.0
        %390 = vst.msk [vmem:[#allocation3 + $0x148] sm:$0x1] %vm350, 0.0
        %391 = vst.msk [vmem:[#allocation3 + $0x150] sm:$0xff] %vm347, 0.0
        %392 = vst.msk [vmem:[#allocation3 + $0x158] sm:$0xff] %vm347, 0.0
        %393 = vst.msk [vmem:[#allocation3 + $0x160] sm:$0x1] %vm350, 0.0
        %394 = vst.msk [vmem:[#allocation3 + $0x168] sm:$0xff] %vm347, 0.0
        %395 = vst.msk [vmem:[#allocation3 + $0x170] sm:$0xff] %vm347, 0.0
        %396 = vst.msk [vmem:[#allocation3 + $0x178] sm:$0x1] %vm350, 0.0
        %397 = vst.msk [vmem:[#allocation3 + $0x180] sm:$0xff] %vm347, 0.0
        %398 = vst.msk [vmem:[#allocation3 + $0x188] sm:$0xff] %vm347, 0.0
        %399 = vst.msk [vmem:[#allocation3 + $0x190] sm:$0x1] %vm350, 0.0
        %400 = vst.msk [vmem:[#allocation4] sm:$0xff] %vm347, 0.0
        %401 = vst.msk [vmem:[#allocation4 + $0x8] sm:$0xff] %vm347, 0.0
        %402 = vst.msk [vmem:[#allocation4 + $0x10] sm:$0x1] %vm350, 0.0
        %403 = vst.msk [vmem:[#allocation4 + $0x18] sm:$0xff] %vm347, 0.0
        %404 = vst.msk [vmem:[#allocation4 + $0x20] sm:$0xff] %vm347, 0.0
        %405 = vst.msk [vmem:[#allocation4 + $0x28] sm:$0x1] %vm350, 0.0
        %406 = vst.msk [vmem:[#allocation4 + $0x30] sm:$0xff] %vm347, 0.0
        %407 = vst.msk [vmem:[#allocation4 + $0x38] sm:$0xff] %vm347, 0.0
        %408 = vst.msk [vmem:[#allocation4 + $0x40] sm:$0x1] %vm350, 0.0
        %409 = vst.msk [vmem:[#allocation4 + $0x48] sm:$0xff] %vm347, 0.0
        %410 = vst.msk [vmem:[#allocation4 + $0x50] sm:$0xff] %vm347, 0.0
        %411 = vst.msk [vmem:[#allocation4 + $0x58] sm:$0x1] %vm350, 0.0
        %412 = vst.msk [vmem:[#allocation4 + $0x60] sm:$0xff] %vm347, 0.0
        %413 = vst.msk [vmem:[#allocation4 + $0x68] sm:$0xff] %vm347, 0.0
        %414 = vst.msk [vmem:[#allocation4 + $0x70] sm:$0x1] %vm350, 0.0
        %415 = vst.msk [vmem:[#allocation4 + $0x78] sm:$0xff] %vm347, 0.0
        %416 = vst.msk [vmem:[#allocation4 + $0x80] sm:$0xff] %vm347, 0.0
        %417 = vst.msk [vmem:[#allocation4 + $0x88] sm:$0x1] %vm350, 0.0
        %418 = vst.msk [vmem:[#allocation4 + $0x90] sm:$0xff] %vm347, 0.0
        %419 = vst.msk [vmem:[#allocation4 + $0x98] sm:$0xff] %vm347, 0.0
        %420 = vst.msk [vmem:[#allocation4 + $0xa0] sm:$0x1] %vm350, 0.0
        %421 = vst.msk [vmem:[#allocation4 + $0xa8] sm:$0xff] %vm347, 0.0
        %422 = vst.msk [vmem:[#allocation4 + $0xb0] sm:$0xff] %vm347, 0.0
        %423 = vst.msk [vmem:[#allocation4 + $0xb8] sm:$0x1] %vm350, 0.0
        %424 = vst.msk [vmem:[#allocation4 + $0xc0] sm:$0xff] %vm347, 0.0
        %425 = vst.msk [vmem:[#allocation4 + $0xc8] sm:$0xff] %vm347, 0.0
        %426 = vst.msk [vmem:[#allocation4 + $0xd0] sm:$0x1] %vm350, 0.0
        %427 = vst.msk [vmem:[#allocation4 + $0xd8] sm:$0xff] %vm347, 0.0
        %428 = vst.msk [vmem:[#allocation4 + $0xe0] sm:$0xff] %vm347, 0.0
        %429 = vst.msk [vmem:[#allocation4 + $0xe8] sm:$0x1] %vm350, 0.0
        %430 = vst.msk [vmem:[#allocation4 + $0xf0] sm:$0xff] %vm347, 0.0
        %431 = vst.msk [vmem:[#allocation4 + $0xf8] sm:$0xff] %vm347, 0.0
        %432 = vst.msk [vmem:[#allocation4 + $0x100] sm:$0x1] %vm350, 0.0
        %433 = vst.msk [vmem:[#allocation4 + $0x108] sm:$0xff] %vm347, 0.0
        %434 = vst.msk [vmem:[#allocation4 + $0x110] sm:$0xff] %vm347, 0.0
        %435 = vst.msk [vmem:[#allocation4 + $0x118] sm:$0x1] %vm350, 0.0
        %436 = vst.msk [vmem:[#allocation4 + $0x120] sm:$0xff] %vm347, 0.0
        %437 = vst.msk [vmem:[#allocation4 + $0x128] sm:$0xff] %vm347, 0.0
        %438 = vst.msk [vmem:[#allocation4 + $0x130] sm:$0x1] %vm350, 0.0
        %439 = vst.msk [vmem:[#allocation4 + $0x138] sm:$0xff] %vm347, 0.0
        %440 = vst.msk [vmem:[#allocation4 + $0x140] sm:$0xff] %vm347, 0.0
        %441 = vst.msk [vmem:[#allocation4 + $0x148] sm:$0x1] %vm350, 0.0
        %442 = vst.msk [vmem:[#allocation4 + $0x150] sm:$0xff] %vm347, 0.0
        %443 = vst.msk [vmem:[#allocation4 + $0x158] sm:$0xff] %vm347, 0.0
        %444 = vst.msk [vmem:[#allocation4 + $0x160] sm:$0x1] %vm350, 0.0
        %445 = vst.msk [vmem:[#allocation4 + $0x168] sm:$0xff] %vm347, 0.0
        %446 = vst.msk [vmem:[#allocation4 + $0x170] sm:$0xff] %vm347, 0.0
        %447 = vst.msk [vmem:[#allocation4 + $0x178] sm:$0x1] %vm350, 0.0
        %448 = vst.msk [vmem:[#allocation4 + $0x180] sm:$0xff] %vm347, 0.0
        %449 = vst.msk [vmem:[#allocation4 + $0x188] sm:$0xff] %vm347, 0.0
        %450 = vst.msk [vmem:[#allocation4 + $0x190] sm:$0x1] %vm350, 0.0
        %v451 = vld [vmem:[%s288] sm:$0xff]
        %v452 = vld [vmem:[%s288 + $0x8] sm:$0xff]
        %v453 = vld [vmem:[%s288 + $0x10] sm:$0xff]
        %v454 = vld [vmem:[%s288 + $0x18] sm:$0xff]
        %v455 = vld [vmem:[%s288 + $0x20] sm:$0xff]
        %v456 = vld [vmem:[%s288 + $0x28] sm:$0xff]
        %v457 = vld [vmem:[%s288 + $0x30] sm:$0xff]
        %v458 = vld [vmem:[%s288 + $0x38] sm:$0xff]
        %v459 = vld [vmem:[%s288 + $0x40] sm:$0xff]
        %v460 = vld [vmem:[%s288 + $0x48] sm:$0xff]
        %v461 = vld [vmem:[%s288 + $0x50] sm:$0xff]
        %v462 = vld [vmem:[%s288 + $0x58] sm:$0xff]
        %v463 = vld [vmem:[%s288 + $0x60] sm:$0xff]
        %v464 = vld [vmem:[%s288 + $0x68] sm:$0xff]
        %v465 = vld [vmem:[%s288 + $0x70] sm:$0xff]
        %v466 = vld [vmem:[%s288 + $0x78] sm:$0xff]
        %v467 = vld [vmem:[%s288 + $0x80] sm:$0xff]
        %v468 = vld [vmem:[%s288 + $0x88] sm:$0xff]
        %v469 = vld [vmem:[%s288 + $0x90] sm:$0xff]
        %v470 = vld [vmem:[%s288 + $0x98] sm:$0xff]
        %v471 = vld [vmem:[%s288 + $0xa0] sm:$0xff]
        %v472 = vld [vmem:[%s288 + $0xa8] sm:$0xff]
        %v473 = vld [vmem:[%s288 + $0xb0] sm:$0xff]
        %v474 = vld [vmem:[%s288 + $0xb8] sm:$0xff]
        %v475 = vld [vmem:[%s288 + $0xc0] sm:$0xff]
        %v476 = vld [vmem:[%s288 + $0xc8] sm:$0xff]
        %v477 = vld [vmem:[%s288 + $0xd0] sm:$0xff]
        %v478 = vld [vmem:[%s288 + $0xd8] sm:$0xff]
        %v479 = vld [vmem:[%s288 + $0xe0] sm:$0xff]
        %v480 = vld [vmem:[%s288 + $0xe8] sm:$0xff]
        %v481 = vld [vmem:[%s288 + $0xf0] sm:$0xff]
        %v482 = vld [vmem:[%s288 + $0xf8] sm:$0xff]
        %s483 = scalar_lea.vmem [#allocation2], 24
        %484 = vst.msk [vmem:[%s483 + $0x1] sm:$0xff] %vm294, %v451
        %485 = vst.msk [vmem:[%s483 + $0x9] sm:$0xff] %vm294, %v452
        %486 = vst.msk [vmem:[%s483 + $0x19] sm:$0xff] %vm294, %v453
        %487 = vst.msk [vmem:[%s483 + $0x21] sm:$0xff] %vm294, %v454
        %488 = vst.msk [vmem:[%s483 + $0x31] sm:$0xff] %vm294, %v455
        %489 = vst.msk [vmem:[%s483 + $0x39] sm:$0xff] %vm294, %v456
        %490 = vst.msk [vmem:[%s483 + $0x49] sm:$0xff] %vm294, %v457
        %491 = vst.msk [vmem:[%s483 + $0x51] sm:$0xff] %vm294, %v458
        %492 = vst.msk [vmem:[%s483 + $0x61] sm:$0xff] %vm294, %v459
        %493 = vst.msk [vmem:[%s483 + $0x69] sm:$0xff] %vm294, %v460
        %494 = vst.msk [vmem:[%s483 + $0x79] sm:$0xff] %vm294, %v461
        %495 = vst.msk [vmem:[%s483 + $0x81] sm:$0xff] %vm294, %v462
        %496 = vst.msk [vmem:[%s483 + $0x91] sm:$0xff] %vm294, %v463
        %497 = vst.msk [vmem:[%s483 + $0x99] sm:$0xff] %vm294, %v464
        %498 = vst.msk [vmem:[%s483 + $0xa9] sm:$0xff] %vm294, %v465
        %499 = vst.msk [vmem:[%s483 + $0xb1] sm:$0xff] %vm294, %v466
        %500 = vst.msk [vmem:[%s483 + $0xc1] sm:$0xff] %vm294, %v467
        %501 = vst.msk [vmem:[%s483 + $0xc9] sm:$0xff] %vm294, %v468
        %502 = vst.msk [vmem:[%s483 + $0xd9] sm:$0xff] %vm294, %v469
        %503 = vst.msk [vmem:[%s483 + $0xe1] sm:$0xff] %vm294, %v470
        %504 = vst.msk [vmem:[%s483 + $0xf1] sm:$0xff] %vm294, %v471
        %505 = vst.msk [vmem:[%s483 + $0xf9] sm:$0xff] %vm294, %v472
        %506 = vst.msk [vmem:[%s483 + $0x109] sm:$0xff] %vm294, %v473
        %507 = vst.msk [vmem:[%s483 + $0x111] sm:$0xff] %vm294, %v474
        %508 = vst.msk [vmem:[%s483 + $0x121] sm:$0xff] %vm294, %v475
        %509 = vst.msk [vmem:[%s483 + $0x129] sm:$0xff] %vm294, %v476
        %510 = vst.msk [vmem:[%s483 + $0x139] sm:$0xff] %vm294, %v477
        %511 = vst.msk [vmem:[%s483 + $0x141] sm:$0xff] %vm294, %v478
        %512 = vst.msk [vmem:[%s483 + $0x151] sm:$0xff] %vm294, %v479
        %513 = vst.msk [vmem:[%s483 + $0x159] sm:$0xff] %vm294, %v480
        %514 = vst.msk [vmem:[%s483 + $0x169] sm:$0xff] %vm294, %v481
        %515 = vst.msk [vmem:[%s483 + $0x171] sm:$0xff] %vm294, %v482
        %v516 = vld [vmem:[%s1] sm:$0x3]
        %v517 = vld [vmem:[%s1 + $0x2] sm:$0x3]
        %v518 = vld [vmem:[#allocation2] sm:$0xff]
        %v519 = vld [vmem:[#allocation2 + $0x8] sm:$0xff]
        %v520 = vld [vmem:[#allocation2 + $0x18] sm:$0xff]
        %v521 = vld [vmem:[#allocation2 + $0x20] sm:$0xff]
        %v522 = vld [vmem:[#allocation2 + $0x30] sm:$0xff]
        %v523 = vld [vmem:[#allocation2 + $0x38] sm:$0xff]
        %v524 = vld [vmem:[#allocation2 + $0x48] sm:$0xff]
        %v525 = vld [vmem:[#allocation2 + $0x50] sm:$0xff]
        %v526 = vld [vmem:[#allocation2 + $0x60] sm:$0xff]
        %v527 = vld [vmem:[#allocation2 + $0x68] sm:$0xff]
        %v528 = vld [vmem:[#allocation2 + $0x78] sm:$0xff]
        %v529 = vld [vmem:[#allocation2 + $0x80] sm:$0xff]
        %v530 = vld [vmem:[#allocation2 + $0x90] sm:$0xff]
        %v531 = vld [vmem:[#allocation2 + $0x98] sm:$0xff]
        %v532 = vld [vmem:[#allocation2 + $0xa8] sm:$0xff]
        %v533 = vld [vmem:[#allocation2 + $0xb0] sm:$0xff]
        %v534 = vld [vmem:[#allocation2 + $0xc0] sm:$0xff]
        %v535 = vld [vmem:[#allocation2 + $0xc8] sm:$0xff]
        %v536 = vld [vmem:[#allocation2 + $0xd8] sm:$0xff]
        %v537 = vld [vmem:[#allocation2 + $0xe0] sm:$0xff]
        %v538 = vld [vmem:[#allocation2 + $0xf0] sm:$0xff]
        %v539 = vld [vmem:[#allocation2 + $0xf8] sm:$0xff]
        %v540 = vld [vmem:[#allocation2 + $0x108] sm:$0xff]
        %v541 = vld [vmem:[#allocation2 + $0x110] sm:$0xff]
        %v542 = vld [vmem:[#allocation2 + $0x120] sm:$0xff]
        %v543 = vld [vmem:[#allocation2 + $0x128] sm:$0xff]
        %v544 = vld [vmem:[#allocation2 + $0x138] sm:$0xff]
        %v545 = vld [vmem:[#allocation2 + $0x140] sm:$0xff]
        %v546 = vld [vmem:[#allocation2 + $0x150] sm:$0xff]
        %v547 = vld [vmem:[#allocation2 + $0x158] sm:$0xff]
        %v548 = vld [vmem:[#allocation2 + $0x168] sm:$0xff]
        %v549 = vld [vmem:[#allocation2 + $0x170] sm:$0xff]
        %551 = vset.pattern.permute.xlu0 0
        %552 = vperm.xlu0 %551, %v518
        %v553 = vpop.permute.xlu0 %552
        %556 = vset.pattern.permute.xlu0 0
        %557 = vperm.xlu0 %556, %v519
        %v558 = vpop.permute.xlu0 %557
        %561 = vset.pattern.permute.xlu0 0
        %562 = vperm.xlu0 %561, %v520
        %v563 = vpop.permute.xlu0 %562
        %566 = vset.pattern.permute.xlu0 0
        %567 = vperm.xlu0 %566, %v521
        %v568 = vpop.permute.xlu0 %567
        %571 = vset.pattern.permute.xlu0 0
        %572 = vperm.xlu0 %571, %v522
        %v573 = vpop.permute.xlu0 %572
        %576 = vset.pattern.permute.xlu0 0
        %577 = vperm.xlu0 %576, %v523
        %v578 = vpop.permute.xlu0 %577
        %581 = vset.pattern.permute.xlu0 0
        %582 = vperm.xlu0 %581, %v524
        %v583 = vpop.permute.xlu0 %582
        %586 = vset.pattern.permute.xlu0 0
        %587 = vperm.xlu0 %586, %v525
        %v588 = vpop.permute.xlu0 %587
        %591 = vset.pattern.permute.xlu0 0
        %592 = vperm.xlu0 %591, %v526
        %v593 = vpop.permute.xlu0 %592
        %596 = vset.pattern.permute.xlu0 0
        %597 = vperm.xlu0 %596, %v527
        %v598 = vpop.permute.xlu0 %597
        %601 = vset.pattern.permute.xlu0 0
        %602 = vperm.xlu0 %601, %v528
        %v603 = vpop.permute.xlu0 %602
        %606 = vset.pattern.permute.xlu0 0
        %607 = vperm.xlu0 %606, %v529
        %v608 = vpop.permute.xlu0 %607
        %611 = vset.pattern.permute.xlu0 0
        %612 = vperm.xlu0 %611, %v530
        %v613 = vpop.permute.xlu0 %612
        %616 = vset.pattern.permute.xlu0 0
        %617 = vperm.xlu0 %616, %v531
        %v618 = vpop.permute.xlu0 %617
        %621 = vset.pattern.permute.xlu0 0
        %622 = vperm.xlu0 %621, %v532
        %v623 = vpop.permute.xlu0 %622
        %626 = vset.pattern.permute.xlu0 0
        %627 = vperm.xlu0 %626, %v533
        %v628 = vpop.permute.xlu0 %627
        %631 = vset.pattern.permute.xlu0 0
        %632 = vperm.xlu0 %631, %v534
        %v633 = vpop.permute.xlu0 %632
        %636 = vset.pattern.permute.xlu0 0
        %637 = vperm.xlu0 %636, %v535
        %v638 = vpop.permute.xlu0 %637
        %641 = vset.pattern.permute.xlu0 0
        %642 = vperm.xlu0 %641, %v536
        %v643 = vpop.permute.xlu0 %642
        %646 = vset.pattern.permute.xlu0 0
        %647 = vperm.xlu0 %646, %v537
        %v648 = vpop.permute.xlu0 %647
        %651 = vset.pattern.permute.xlu0 0
        %652 = vperm.xlu0 %651, %v538
        %v653 = vpop.permute.xlu0 %652
        %656 = vset.pattern.permute.xlu0 0
        %657 = vperm.xlu0 %656, %v539
        %v658 = vpop.permute.xlu0 %657
        %661 = vset.pattern.permute.xlu0 0
        %662 = vperm.xlu0 %661, %v540
        %v663 = vpop.permute.xlu0 %662
        %666 = vset.pattern.permute.xlu0 0
        %667 = vperm.xlu0 %666, %v541
        %v668 = vpop.permute.xlu0 %667
        %671 = vset.pattern.permute.xlu0 0
        %672 = vperm.xlu0 %671, %v542
        %v673 = vpop.permute.xlu0 %672
        %676 = vset.pattern.permute.xlu0 0
        %677 = vperm.xlu0 %676, %v543
        %v678 = vpop.permute.xlu0 %677
        %681 = vset.pattern.permute.xlu0 0
        %682 = vperm.xlu0 %681, %v544
        %v683 = vpop.permute.xlu0 %682
        %686 = vset.pattern.permute.xlu0 0
        %687 = vperm.xlu0 %686, %v545
        %v688 = vpop.permute.xlu0 %687
        %691 = vset.pattern.permute.xlu0 0
        %692 = vperm.xlu0 %691, %v546
        %v693 = vpop.permute.xlu0 %692
        %696 = vset.pattern.permute.xlu0 0
        %697 = vperm.xlu0 %696, %v547
        %v698 = vpop.permute.xlu0 %697
        %701 = vset.pattern.permute.xlu0 0
        %702 = vperm.xlu0 %701, %v548
        %v703 = vpop.permute.xlu0 %702
        %706 = vset.pattern.permute.xlu0 0
        %707 = vperm.xlu0 %706, %v549
        %v708 = vpop.permute.xlu0 %707
        %v710 = vlaneseq
        %v711 = vshrl.u32 %v710, 7
        %v712 = vsub.s32 0, %v711
        %v713 = vrot.slane %v516, %v712
        %v714 = vmul.f32 %v553, %v713
        %v715 = vmul.f32 %v558, %v713
        %v716 = vmul.f32 %v563, %v713
        %v717 = vmul.f32 %v568, %v713
        %v718 = vmul.f32 %v573, %v713
        %v719 = vmul.f32 %v578, %v713
        %v720 = vmul.f32 %v583, %v713
        %v721 = vmul.f32 %v588, %v713
        %v722 = vmul.f32 %v593, %v713
        %v723 = vmul.f32 %v598, %v713
        %v724 = vmul.f32 %v603, %v713
        %v725 = vmul.f32 %v608, %v713
        %v726 = vmul.f32 %v613, %v713
        %v727 = vmul.f32 %v618, %v713
        %v728 = vmul.f32 %v623, %v713
        %v729 = vmul.f32 %v628, %v713
        %v730 = vmul.f32 %v633, %v713
        %v731 = vmul.f32 %v638, %v713
        %v732 = vmul.f32 %v643, %v713
        %v733 = vmul.f32 %v648, %v713
        %v734 = vmul.f32 %v653, %v713
        %v735 = vmul.f32 %v658, %v713
        %v736 = vmul.f32 %v663, %v713
        %v737 = vmul.f32 %v668, %v713
        %v738 = vmul.f32 %v673, %v713
        %v739 = vmul.f32 %v678, %v713
        %v740 = vmul.f32 %v683, %v713
        %v741 = vmul.f32 %v688, %v713
        %v742 = vmul.f32 %v693, %v713
        %v743 = vmul.f32 %v698, %v713
        %v744 = vmul.f32 %v703, %v713
        %v745 = vmul.f32 %v708, %v713
        %v746 = vadd.f32 %v714, 0.0
        %v747 = vadd.f32 %v715, 0.0
        %v748 = vadd.f32 %v716, 0.0
        %v749 = vadd.f32 %v717, 0.0
        %v750 = vadd.f32 %v718, 0.0
        %v751 = vadd.f32 %v719, 0.0
        %v752 = vadd.f32 %v720, 0.0
        %v753 = vadd.f32 %v721, 0.0
        %v754 = vadd.f32 %v722, 0.0
        %v755 = vadd.f32 %v723, 0.0
        %v756 = vadd.f32 %v724, 0.0
        %v757 = vadd.f32 %v725, 0.0
        %v758 = vadd.f32 %v726, 0.0
        %v759 = vadd.f32 %v727, 0.0
        %v760 = vadd.f32 %v728, 0.0
        %v761 = vadd.f32 %v729, 0.0
        %v762 = vadd.f32 %v730, 0.0
        %v763 = vadd.f32 %v731, 0.0
        %v764 = vadd.f32 %v732, 0.0
        %v765 = vadd.f32 %v733, 0.0
        %v766 = vadd.f32 %v734, 0.0
        %v767 = vadd.f32 %v735, 0.0
        %v768 = vadd.f32 %v736, 0.0
        %v769 = vadd.f32 %v737, 0.0
        %v770 = vadd.f32 %v738, 0.0
        %v771 = vadd.f32 %v739, 0.0
        %v772 = vadd.f32 %v740, 0.0
        %v773 = vadd.f32 %v741, 0.0
        %v774 = vadd.f32 %v742, 0.0
        %v775 = vadd.f32 %v743, 0.0
        %v776 = vadd.f32 %v744, 0.0
        %v777 = vadd.f32 %v745, 0.0
        %v778 = vld [vmem:[#allocation2 + $0x1] sm:$0xff]
        %v779 = vld [vmem:[#allocation2 + $0x9] sm:$0xff]
        %v780 = vld [vmem:[#allocation2 + $0x19] sm:$0xff]
        %v781 = vld [vmem:[#allocation2 + $0x21] sm:$0xff]
        %v782 = vld [vmem:[#allocation2 + $0x31] sm:$0xff]
        %v783 = vld [vmem:[#allocation2 + $0x39] sm:$0xff]
        %v784 = vld [vmem:[#allocation2 + $0x49] sm:$0xff]
        %v785 = vld [vmem:[#allocation2 + $0x51] sm:$0xff]
        %v786 = vld [vmem:[#allocation2 + $0x61] sm:$0xff]
        %v787 = vld [vmem:[#allocation2 + $0x69] sm:$0xff]
        %v788 = vld [vmem:[#allocation2 + $0x79] sm:$0xff]
        %v789 = vld [vmem:[#allocation2 + $0x81] sm:$0xff]
        %v790 = vld [vmem:[#allocation2 + $0x91] sm:$0xff]
        %v791 = vld [vmem:[#allocation2 + $0x99] sm:$0xff]
        %v792 = vld [vmem:[#allocation2 + $0xa9] sm:$0xff]
        %v793 = vld [vmem:[#allocation2 + $0xb1] sm:$0xff]
        %v794 = vld [vmem:[#allocation2 + $0xc1] sm:$0xff]
        %v795 = vld [vmem:[#allocation2 + $0xc9] sm:$0xff]
        %v796 = vld [vmem:[#allocation2 + $0xd9] sm:$0xff]
        %v797 = vld [vmem:[#allocation2 + $0xe1] sm:$0xff]
        %v798 = vld [vmem:[#allocation2 + $0xf1] sm:$0xff]
        %v799 = vld [vmem:[#allocation2 + $0xf9] sm:$0xff]
        %v800 = vld [vmem:[#allocation2 + $0x109] sm:$0xff]
        %v801 = vld [vmem:[#allocation2 + $0x111] sm:$0xff]
        %v802 = vld [vmem:[#allocation2 + $0x121] sm:$0xff]
        %v803 = vld [vmem:[#allocation2 + $0x129] sm:$0xff]
        %v804 = vld [vmem:[#allocation2 + $0x139] sm:$0xff]
        %v805 = vld [vmem:[#allocation2 + $0x141] sm:$0xff]
        %v806 = vld [vmem:[#allocation2 + $0x151] sm:$0xff]
        %v807 = vld [vmem:[#allocation2 + $0x159] sm:$0xff]
        %v808 = vld [vmem:[#allocation2 + $0x169] sm:$0xff]
        %v809 = vld [vmem:[#allocation2 + $0x171] sm:$0xff]
        %811 = vset.pattern.permute.xlu0 0
        %812 = vperm.xlu0 %811, %v778
        %v813 = vpop.permute.xlu0 %812
        %816 = vset.pattern.permute.xlu0 0
        %817 = vperm.xlu0 %816, %v779
        %v818 = vpop.permute.xlu0 %817
        %821 = vset.pattern.permute.xlu0 0
        %822 = vperm.xlu0 %821, %v780
        %v823 = vpop.permute.xlu0 %822
        %826 = vset.pattern.permute.xlu0 0
        %827 = vperm.xlu0 %826, %v781
        %v828 = vpop.permute.xlu0 %827
        %831 = vset.pattern.permute.xlu0 0
        %832 = vperm.xlu0 %831, %v782
        %v833 = vpop.permute.xlu0 %832
        %836 = vset.pattern.permute.xlu0 0
        %837 = vperm.xlu0 %836, %v783
        %v838 = vpop.permute.xlu0 %837
        %841 = vset.pattern.permute.xlu0 0
        %842 = vperm.xlu0 %841, %v784
        %v843 = vpop.permute.xlu0 %842
        %846 = vset.pattern.permute.xlu0 0
        %847 = vperm.xlu0 %846, %v785
        %v848 = vpop.permute.xlu0 %847
        %851 = vset.pattern.permute.xlu0 0
        %852 = vperm.xlu0 %851, %v786
        %v853 = vpop.permute.xlu0 %852
        %856 = vset.pattern.permute.xlu0 0
        %857 = vperm.xlu0 %856, %v787
        %v858 = vpop.permute.xlu0 %857
        %861 = vset.pattern.permute.xlu0 0
        %862 = vperm.xlu0 %861, %v788
        %v863 = vpop.permute.xlu0 %862
        %866 = vset.pattern.permute.xlu0 0
        %867 = vperm.xlu0 %866, %v789
        %v868 = vpop.permute.xlu0 %867
        %871 = vset.pattern.permute.xlu0 0
        %872 = vperm.xlu0 %871, %v790
        %v873 = vpop.permute.xlu0 %872
        %876 = vset.pattern.permute.xlu0 0
        %877 = vperm.xlu0 %876, %v791
        %v878 = vpop.permute.xlu0 %877
        %881 = vset.pattern.permute.xlu0 0
        %882 = vperm.xlu0 %881, %v792
        %v883 = vpop.permute.xlu0 %882
        %886 = vset.pattern.permute.xlu0 0
        %887 = vperm.xlu0 %886, %v793
        %v888 = vpop.permute.xlu0 %887
        %891 = vset.pattern.permute.xlu0 0
        %892 = vperm.xlu0 %891, %v794
        %v893 = vpop.permute.xlu0 %892
        %896 = vset.pattern.permute.xlu0 0
        %897 = vperm.xlu0 %896, %v795
        %v898 = vpop.permute.xlu0 %897
        %901 = vset.pattern.permute.xlu0 0
        %902 = vperm.xlu0 %901, %v796
        %v903 = vpop.permute.xlu0 %902
        %906 = vset.pattern.permute.xlu0 0
        %907 = vperm.xlu0 %906, %v797
        %v908 = vpop.permute.xlu0 %907
        %911 = vset.pattern.permute.xlu0 0
        %912 = vperm.xlu0 %911, %v798
        %v913 = vpop.permute.xlu0 %912
        %916 = vset.pattern.permute.xlu0 0
        %917 = vperm.xlu0 %916, %v799
        %v918 = vpop.permute.xlu0 %917
        %921 = vset.pattern.permute.xlu0 0
        %922 = vperm.xlu0 %921, %v800
        %v923 = vpop.permute.xlu0 %922
        %926 = vset.pattern.permute.xlu0 0
        %927 = vperm.xlu0 %926, %v801
        %v928 = vpop.permute.xlu0 %927
        %931 = vset.pattern.permute.xlu0 0
        %932 = vperm.xlu0 %931, %v802
        %v933 = vpop.permute.xlu0 %932
        %936 = vset.pattern.permute.xlu0 0
        %937 = vperm.xlu0 %936, %v803
        %v938 = vpop.permute.xlu0 %937
        %941 = vset.pattern.permute.xlu0 0
        %942 = vperm.xlu0 %941, %v804
        %v943 = vpop.permute.xlu0 %942
        %946 = vset.pattern.permute.xlu0 0
        %947 = vperm.xlu0 %946, %v805
        %v948 = vpop.permute.xlu0 %947
        %951 = vset.pattern.permute.xlu0 0
        %952 = vperm.xlu0 %951, %v806
        %v953 = vpop.permute.xlu0 %952
        %956 = vset.pattern.permute.xlu0 0
        %957 = vperm.xlu0 %956, %v807
        %v958 = vpop.permute.xlu0 %957
        %961 = vset.pattern.permute.xlu0 0
        %962 = vperm.xlu0 %961, %v808
        %v963 = vpop.permute.xlu0 %962
        %966 = vset.pattern.permute.xlu0 0
        %967 = vperm.xlu0 %966, %v809
        %v968 = vpop.permute.xlu0 %967
        %v970 = vlaneseq
        %v971 = vshrl.u32 %v970, 7
        %v972 = vsub.s32 1, %v971
        %v973 = vrot.slane %v516, %v972
        %v974 = vmul.f32 %v813, %v973
        %v975 = vmul.f32 %v818, %v973
        %v976 = vmul.f32 %v823, %v973
        %v977 = vmul.f32 %v828, %v973
        %v978 = vmul.f32 %v833, %v973
        %v979 = vmul.f32 %v838, %v973
        %v980 = vmul.f32 %v843, %v973
        %v981 = vmul.f32 %v848, %v973
        %v982 = vmul.f32 %v853, %v973
        %v983 = vmul.f32 %v858, %v973
        %v984 = vmul.f32 %v863, %v973
        %v985 = vmul.f32 %v868, %v973
        %v986 = vmul.f32 %v873, %v973
        %v987 = vmul.f32 %v878, %v973
        %v988 = vmul.f32 %v883, %v973
        %v989 = vmul.f32 %v888, %v973
        %v990 = vmul.f32 %v893, %v973
        %v991 = vmul.f32 %v898, %v973
        %v992 = vmul.f32 %v903, %v973
        %v993 = vmul.f32 %v908, %v973
        %v994 = vmul.f32 %v913, %v973
        %v995 = vmul.f32 %v918, %v973
        %v996 = vmul.f32 %v923, %v973
        %v997 = vmul.f32 %v928, %v973
        %v998 = vmul.f32 %v933, %v973
        %v999 = vmul.f32 %v938, %v973
        %v1000 = vmul.f32 %v943, %v973
        %v1001 = vmul.f32 %v948, %v973
        %v1002 = vmul.f32 %v953, %v973
        %v1003 = vmul.f32 %v958, %v973
        %v1004 = vmul.f32 %v963, %v973
        %v1005 = vmul.f32 %v968, %v973
        %v1006 = vadd.f32 %v746, %v974
        %v1007 = vadd.f32 %v747, %v975
        %v1008 = vadd.f32 %v748, %v976
        %v1009 = vadd.f32 %v749, %v977
        %v1010 = vadd.f32 %v750, %v978
        %v1011 = vadd.f32 %v751, %v979
        %v1012 = vadd.f32 %v752, %v980
        %v1013 = vadd.f32 %v753, %v981
        %v1014 = vadd.f32 %v754, %v982
        %v1015 = vadd.f32 %v755, %v983
        %v1016 = vadd.f32 %v756, %v984
        %v1017 = vadd.f32 %v757, %v985
        %v1018 = vadd.f32 %v758, %v986
        %v1019 = vadd.f32 %v759, %v987
        %v1020 = vadd.f32 %v760, %v988
        %v1021 = vadd.f32 %v761, %v989
        %v1022 = vadd.f32 %v762, %v990
        %v1023 = vadd.f32 %v763, %v991
        %v1024 = vadd.f32 %v764, %v992
        %v1025 = vadd.f32 %v765, %v993
        %v1026 = vadd.f32 %v766, %v994
        %v1027 = vadd.f32 %v767, %v995
        %v1028 = vadd.f32 %v768, %v996
        %v1029 = vadd.f32 %v769, %v997
        %v1030 = vadd.f32 %v770, %v998
        %v1031 = vadd.f32 %v771, %v999
        %v1032 = vadd.f32 %v772, %v1000
        %v1033 = vadd.f32 %v773, %v1001
        %v1034 = vadd.f32 %v774, %v1002
        %v1035 = vadd.f32 %v775, %v1003
        %v1036 = vadd.f32 %v776, %v1004
        %v1037 = vadd.f32 %v777, %v1005
        %v1038 = vld [vmem:[%s483] sm:$0xff]
        %v1039 = vld [vmem:[%s483 + $0x8] sm:$0xff]
        %v1040 = vld [vmem:[%s483 + $0x18] sm:$0xff]
        %v1041 = vld [vmem:[%s483 + $0x20] sm:$0xff]
        %v1042 = vld [vmem:[%s483 + $0x30] sm:$0xff]
        %v1043 = vld [vmem:[%s483 + $0x38] sm:$0xff]
        %v1044 = vld [vmem:[%s483 + $0x48] sm:$0xff]
        %v1045 = vld [vmem:[%s483 + $0x50] sm:$0xff]
        %v1046 = vld [vmem:[%s483 + $0x60] sm:$0xff]
        %v1047 = vld [vmem:[%s483 + $0x68] sm:$0xff]
        %v1048 = vld [vmem:[%s483 + $0x78] sm:$0xff]
        %v1049 = vld [vmem:[%s483 + $0x80] sm:$0xff]
        %v1050 = vld [vmem:[%s483 + $0x90] sm:$0xff]
        %v1051 = vld [vmem:[%s483 + $0x98] sm:$0xff]
        %v1052 = vld [vmem:[%s483 + $0xa8] sm:$0xff]
        %v1053 = vld [vmem:[%s483 + $0xb0] sm:$0xff]
        %v1054 = vld [vmem:[%s483 + $0xc0] sm:$0xff]
        %v1055 = vld [vmem:[%s483 + $0xc8] sm:$0xff]
        %v1056 = vld [vmem:[%s483 + $0xd8] sm:$0xff]
        %v1057 = vld [vmem:[%s483 + $0xe0] sm:$0xff]
        %v1058 = vld [vmem:[%s483 + $0xf0] sm:$0xff]
        %v1059 = vld [vmem:[%s483 + $0xf8] sm:$0xff]
        %v1060 = vld [vmem:[%s483 + $0x108] sm:$0xff]
        %v1061 = vld [vmem:[%s483 + $0x110] sm:$0xff]
        %v1062 = vld [vmem:[%s483 + $0x120] sm:$0xff]
        %v1063 = vld [vmem:[%s483 + $0x128] sm:$0xff]
        %v1064 = vld [vmem:[%s483 + $0x138] sm:$0xff]
        %v1065 = vld [vmem:[%s483 + $0x140] sm:$0xff]
        %v1066 = vld [vmem:[%s483 + $0x150] sm:$0xff]
        %v1067 = vld [vmem:[%s483 + $0x158] sm:$0xff]
        %v1068 = vld [vmem:[%s483 + $0x168] sm:$0xff]
        %v1069 = vld [vmem:[%s483 + $0x170] sm:$0xff]
        %1071 = vset.pattern.permute.xlu0 0
        %1072 = vperm.xlu0 %1071, %v1038
        %v1073 = vpop.permute.xlu0 %1072
        %1076 = vset.pattern.permute.xlu0 0
        %1077 = vperm.xlu0 %1076, %v1039
        %v1078 = vpop.permute.xlu0 %1077
        %1081 = vset.pattern.permute.xlu0 0
        %1082 = vperm.xlu0 %1081, %v1040
        %v1083 = vpop.permute.xlu0 %1082
        %1086 = vset.pattern.permute.xlu0 0
        %1087 = vperm.xlu0 %1086, %v1041
        %v1088 = vpop.permute.xlu0 %1087
        %1091 = vset.pattern.permute.xlu0 0
        %1092 = vperm.xlu0 %1091, %v1042
        %v1093 = vpop.permute.xlu0 %1092
        %1096 = vset.pattern.permute.xlu0 0
        %1097 = vperm.xlu0 %1096, %v1043
        %v1098 = vpop.permute.xlu0 %1097
        %1101 = vset.pattern.permute.xlu0 0
        %1102 = vperm.xlu0 %1101, %v1044
        %v1103 = vpop.permute.xlu0 %1102
        %1106 = vset.pattern.permute.xlu0 0
        %1107 = vperm.xlu0 %1106, %v1045
        %v1108 = vpop.permute.xlu0 %1107
        %1111 = vset.pattern.permute.xlu0 0
        %1112 = vperm.xlu0 %1111, %v1046
        %v1113 = vpop.permute.xlu0 %1112
        %1116 = vset.pattern.permute.xlu0 0
        %1117 = vperm.xlu0 %1116, %v1047
        %v1118 = vpop.permute.xlu0 %1117
        %1121 = vset.pattern.permute.xlu0 0
        %1122 = vperm.xlu0 %1121, %v1048
        %v1123 = vpop.permute.xlu0 %1122
        %1126 = vset.pattern.permute.xlu0 0
        %1127 = vperm.xlu0 %1126, %v1049
        %v1128 = vpop.permute.xlu0 %1127
        %1131 = vset.pattern.permute.xlu0 0
        %1132 = vperm.xlu0 %1131, %v1050
        %v1133 = vpop.permute.xlu0 %1132
        %1136 = vset.pattern.permute.xlu0 0
        %1137 = vperm.xlu0 %1136, %v1051
        %v1138 = vpop.permute.xlu0 %1137
        %1141 = vset.pattern.permute.xlu0 0
        %1142 = vperm.xlu0 %1141, %v1052
        %v1143 = vpop.permute.xlu0 %1142
        %1146 = vset.pattern.permute.xlu0 0
        %1147 = vperm.xlu0 %1146, %v1053
        %v1148 = vpop.permute.xlu0 %1147
        %1151 = vset.pattern.permute.xlu0 0
        %1152 = vperm.xlu0 %1151, %v1054
        %v1153 = vpop.permute.xlu0 %1152
        %1156 = vset.pattern.permute.xlu0 0
        %1157 = vperm.xlu0 %1156, %v1055
        %v1158 = vpop.permute.xlu0 %1157
        %1161 = vset.pattern.permute.xlu0 0
        %1162 = vperm.xlu0 %1161, %v1056
        %v1163 = vpop.permute.xlu0 %1162
        %1166 = vset.pattern.permute.xlu0 0
        %1167 = vperm.xlu0 %1166, %v1057
        %v1168 = vpop.permute.xlu0 %1167
        %1171 = vset.pattern.permute.xlu0 0
        %1172 = vperm.xlu0 %1171, %v1058
        %v1173 = vpop.permute.xlu0 %1172
        %1176 = vset.pattern.permute.xlu0 0
        %1177 = vperm.xlu0 %1176, %v1059
        %v1178 = vpop.permute.xlu0 %1177
        %1181 = vset.pattern.permute.xlu0 0
        %1182 = vperm.xlu0 %1181, %v1060
        %v1183 = vpop.permute.xlu0 %1182
        %1186 = vset.pattern.permute.xlu0 0
        %1187 = vperm.xlu0 %1186, %v1061
        %v1188 = vpop.permute.xlu0 %1187
        %1191 = vset.pattern.permute.xlu0 0
        %1192 = vperm.xlu0 %1191, %v1062
        %v1193 = vpop.permute.xlu0 %1192
        %1196 = vset.pattern.permute.xlu0 0
        %1197 = vperm.xlu0 %1196, %v1063
        %v1198 = vpop.permute.xlu0 %1197
        %1201 = vset.pattern.permute.xlu0 0
        %1202 = vperm.xlu0 %1201, %v1064
        %v1203 = vpop.permute.xlu0 %1202
        %1206 = vset.pattern.permute.xlu0 0
        %1207 = vperm.xlu0 %1206, %v1065
        %v1208 = vpop.permute.xlu0 %1207
        %1211 = vset.pattern.permute.xlu0 0
        %1212 = vperm.xlu0 %1211, %v1066
        %v1213 = vpop.permute.xlu0 %1212
        %1216 = vset.pattern.permute.xlu0 0
        %1217 = vperm.xlu0 %1216, %v1067
        %v1218 = vpop.permute.xlu0 %1217
        %1221 = vset.pattern.permute.xlu0 0
        %1222 = vperm.xlu0 %1221, %v1068
        %v1223 = vpop.permute.xlu0 %1222
        %1226 = vset.pattern.permute.xlu0 0
        %1227 = vperm.xlu0 %1226, %v1069
        %v1228 = vpop.permute.xlu0 %1227
        %v1230 = vlaneseq
        %v1231 = vshrl.u32 %v1230, 7
        %v1232 = vsub.s32 0, %v1231
        %v1233 = vrot.slane %v517, %v1232
        %v1234 = vmul.f32 %v1073, %v1233
        %v1235 = vmul.f32 %v1078, %v1233
        %v1236 = vmul.f32 %v1083, %v1233
        %v1237 = vmul.f32 %v1088, %v1233
        %v1238 = vmul.f32 %v1093, %v1233
        %v1239 = vmul.f32 %v1098, %v1233
        %v1240 = vmul.f32 %v1103, %v1233
        %v1241 = vmul.f32 %v1108, %v1233
        %v1242 = vmul.f32 %v1113, %v1233
        %v1243 = vmul.f32 %v1118, %v1233
        %v1244 = vmul.f32 %v1123, %v1233
        %v1245 = vmul.f32 %v1128, %v1233
        %v1246 = vmul.f32 %v1133, %v1233
        %v1247 = vmul.f32 %v1138, %v1233
        %v1248 = vmul.f32 %v1143, %v1233
        %v1249 = vmul.f32 %v1148, %v1233
        %v1250 = vmul.f32 %v1153, %v1233
        %v1251 = vmul.f32 %v1158, %v1233
        %v1252 = vmul.f32 %v1163, %v1233
        %v1253 = vmul.f32 %v1168, %v1233
        %v1254 = vmul.f32 %v1173, %v1233
        %v1255 = vmul.f32 %v1178, %v1233
        %v1256 = vmul.f32 %v1183, %v1233
        %v1257 = vmul.f32 %v1188, %v1233
        %v1258 = vmul.f32 %v1193, %v1233
        %v1259 = vmul.f32 %v1198, %v1233
        %v1260 = vmul.f32 %v1203, %v1233
        %v1261 = vmul.f32 %v1208, %v1233
        %v1262 = vmul.f32 %v1213, %v1233
        %v1263 = vmul.f32 %v1218, %v1233
        %v1264 = vmul.f32 %v1223, %v1233
        %v1265 = vmul.f32 %v1228, %v1233
        %v1266 = vadd.f32 %v1006, %v1234
        %v1267 = vadd.f32 %v1007, %v1235
        %v1268 = vadd.f32 %v1008, %v1236
        %v1269 = vadd.f32 %v1009, %v1237
        %v1270 = vadd.f32 %v1010, %v1238
        %v1271 = vadd.f32 %v1011, %v1239
        %v1272 = vadd.f32 %v1012, %v1240
        %v1273 = vadd.f32 %v1013, %v1241
        %v1274 = vadd.f32 %v1014, %v1242
        %v1275 = vadd.f32 %v1015, %v1243
        %v1276 = vadd.f32 %v1016, %v1244
        %v1277 = vadd.f32 %v1017, %v1245
        %v1278 = vadd.f32 %v1018, %v1246
        %v1279 = vadd.f32 %v1019, %v1247
        %v1280 = vadd.f32 %v1020, %v1248
        %v1281 = vadd.f32 %v1021, %v1249
        %v1282 = vadd.f32 %v1022, %v1250
        %v1283 = vadd.f32 %v1023, %v1251
        %v1284 = vadd.f32 %v1024, %v1252
        %v1285 = vadd.f32 %v1025, %v1253
        %v1286 = vadd.f32 %v1026, %v1254
        %v1287 = vadd.f32 %v1027, %v1255
        %v1288 = vadd.f32 %v1028, %v1256
        %v1289 = vadd.f32 %v1029, %v1257
        %v1290 = vadd.f32 %v1030, %v1258
        %v1291 = vadd.f32 %v1031, %v1259
        %v1292 = vadd.f32 %v1032, %v1260
        %v1293 = vadd.f32 %v1033, %v1261
        %v1294 = vadd.f32 %v1034, %v1262
        %v1295 = vadd.f32 %v1035, %v1263
        %v1296 = vadd.f32 %v1036, %v1264
        %v1297 = vadd.f32 %v1037, %v1265
        %v1298 = vld [vmem:[%s483 + $0x1] sm:$0xff]
        %v1299 = vld [vmem:[%s483 + $0x9] sm:$0xff]
        %v1300 = vld [vmem:[%s483 + $0x19] sm:$0xff]
        %v1301 = vld [vmem:[%s483 + $0x21] sm:$0xff]
        %v1302 = vld [vmem:[%s483 + $0x31] sm:$0xff]
        %v1303 = vld [vmem:[%s483 + $0x39] sm:$0xff]
        %v1304 = vld [vmem:[%s483 + $0x49] sm:$0xff]
        %v1305 = vld [vmem:[%s483 + $0x51] sm:$0xff]
        %v1306 = vld [vmem:[%s483 + $0x61] sm:$0xff]
        %v1307 = vld [vmem:[%s483 + $0x69] sm:$0xff]
        %v1308 = vld [vmem:[%s483 + $0x79] sm:$0xff]
        %v1309 = vld [vmem:[%s483 + $0x81] sm:$0xff]
        %v1310 = vld [vmem:[%s483 + $0x91] sm:$0xff]
        %v1311 = vld [vmem:[%s483 + $0x99] sm:$0xff]
        %v1312 = vld [vmem:[%s483 + $0xa9] sm:$0xff]
        %v1313 = vld [vmem:[%s483 + $0xb1] sm:$0xff]
        %v1314 = vld [vmem:[%s483 + $0xc1] sm:$0xff]
        %v1315 = vld [vmem:[%s483 + $0xc9] sm:$0xff]
        %v1316 = vld [vmem:[%s483 + $0xd9] sm:$0xff]
        %v1317 = vld [vmem:[%s483 + $0xe1] sm:$0xff]
        %v1318 = vld [vmem:[%s483 + $0xf1] sm:$0xff]
        %v1319 = vld [vmem:[%s483 + $0xf9] sm:$0xff]
        %v1320 = vld [vmem:[%s483 + $0x109] sm:$0xff]
        %v1321 = vld [vmem:[%s483 + $0x111] sm:$0xff]
        %v1322 = vld [vmem:[%s483 + $0x121] sm:$0xff]
        %v1323 = vld [vmem:[%s483 + $0x129] sm:$0xff]
        %v1324 = vld [vmem:[%s483 + $0x139] sm:$0xff]
        %v1325 = vld [vmem:[%s483 + $0x141] sm:$0xff]
        %v1326 = vld [vmem:[%s483 + $0x151] sm:$0xff]
        %v1327 = vld [vmem:[%s483 + $0x159] sm:$0xff]
        %v1328 = vld [vmem:[%s483 + $0x169] sm:$0xff]
        %v1329 = vld [vmem:[%s483 + $0x171] sm:$0xff]
        %1331 = vset.pattern.permute.xlu0 0
        %1332 = vperm.xlu0 %1331, %v1298
        %v1333 = vpop.permute.xlu0 %1332
        %1336 = vset.pattern.permute.xlu0 0
        %1337 = vperm.xlu0 %1336, %v1299
        %v1338 = vpop.permute.xlu0 %1337
        %1341 = vset.pattern.permute.xlu0 0
        %1342 = vperm.xlu0 %1341, %v1300
        %v1343 = vpop.permute.xlu0 %1342
        %1346 = vset.pattern.permute.xlu0 0
        %1347 = vperm.xlu0 %1346, %v1301
        %v1348 = vpop.permute.xlu0 %1347
        %1351 = vset.pattern.permute.xlu0 0
        %1352 = vperm.xlu0 %1351, %v1302
        %v1353 = vpop.permute.xlu0 %1352
        %1356 = vset.pattern.permute.xlu0 0
        %1357 = vperm.xlu0 %1356, %v1303
        %v1358 = vpop.permute.xlu0 %1357
        %1361 = vset.pattern.permute.xlu0 0
        %1362 = vperm.xlu0 %1361, %v1304
        %v1363 = vpop.permute.xlu0 %1362
        %1366 = vset.pattern.permute.xlu0 0
        %1367 = vperm.xlu0 %1366, %v1305
        %v1368 = vpop.permute.xlu0 %1367
        %1371 = vset.pattern.permute.xlu0 0
        %1372 = vperm.xlu0 %1371, %v1306
        %v1373 = vpop.permute.xlu0 %1372
        %1376 = vset.pattern.permute.xlu0 0
        %1377 = vperm.xlu0 %1376, %v1307
        %v1378 = vpop.permute.xlu0 %1377
        %1381 = vset.pattern.permute.xlu0 0
        %1382 = vperm.xlu0 %1381, %v1308
        %v1383 = vpop.permute.xlu0 %1382
        %1386 = vset.pattern.permute.xlu0 0
        %1387 = vperm.xlu0 %1386, %v1309
        %v1388 = vpop.permute.xlu0 %1387
        %1391 = vset.pattern.permute.xlu0 0
        %1392 = vperm.xlu0 %1391, %v1310
        %v1393 = vpop.permute.xlu0 %1392
        %1396 = vset.pattern.permute.xlu0 0
        %1397 = vperm.xlu0 %1396, %v1311
        %v1398 = vpop.permute.xlu0 %1397
        %1401 = vset.pattern.permute.xlu0 0
        %1402 = vperm.xlu0 %1401, %v1312
        %v1403 = vpop.permute.xlu0 %1402
        %1406 = vset.pattern.permute.xlu0 0
        %1407 = vperm.xlu0 %1406, %v1313
        %v1408 = vpop.permute.xlu0 %1407
        %1411 = vset.pattern.permute.xlu0 0
        %1412 = vperm.xlu0 %1411, %v1314
        %v1413 = vpop.permute.xlu0 %1412
        %1416 = vset.pattern.permute.xlu0 0
        %1417 = vperm.xlu0 %1416, %v1315
        %v1418 = vpop.permute.xlu0 %1417
        %1421 = vset.pattern.permute.xlu0 0
        %1422 = vperm.xlu0 %1421, %v1316
        %v1423 = vpop.permute.xlu0 %1422
        %1426 = vset.pattern.permute.xlu0 0
        %1427 = vperm.xlu0 %1426, %v1317
        %v1428 = vpop.permute.xlu0 %1427
        %1431 = vset.pattern.permute.xlu0 0
        %1432 = vperm.xlu0 %1431, %v1318
        %v1433 = vpop.permute.xlu0 %1432
        %1436 = vset.pattern.permute.xlu0 0
        %1437 = vperm.xlu0 %1436, %v1319
        %v1438 = vpop.permute.xlu0 %1437
        %1441 = vset.pattern.permute.xlu0 0
        %1442 = vperm.xlu0 %1441, %v1320
        %v1443 = vpop.permute.xlu0 %1442
        %1446 = vset.pattern.permute.xlu0 0
        %1447 = vperm.xlu0 %1446, %v1321
        %v1448 = vpop.permute.xlu0 %1447
        %1451 = vset.pattern.permute.xlu0 0
        %1452 = vperm.xlu0 %1451, %v1322
        %v1453 = vpop.permute.xlu0 %1452
        %1456 = vset.pattern.permute.xlu0 0
        %1457 = vperm.xlu0 %1456, %v1323
        %v1458 = vpop.permute.xlu0 %1457
        %1461 = vset.pattern.permute.xlu0 0
        %1462 = vperm.xlu0 %1461, %v1324
        %v1463 = vpop.permute.xlu0 %1462
        %1466 = vset.pattern.permute.xlu0 0
        %1467 = vperm.xlu0 %1466, %v1325
        %v1468 = vpop.permute.xlu0 %1467
        %1471 = vset.pattern.permute.xlu0 0
        %1472 = vperm.xlu0 %1471, %v1326
        %v1473 = vpop.permute.xlu0 %1472
        %1476 = vset.pattern.permute.xlu0 0
        %1477 = vperm.xlu0 %1476, %v1327
        %v1478 = vpop.permute.xlu0 %1477
        %1481 = vset.pattern.permute.xlu0 0
        %1482 = vperm.xlu0 %1481, %v1328
        %v1483 = vpop.permute.xlu0 %1482
        %1486 = vset.pattern.permute.xlu0 0
        %1487 = vperm.xlu0 %1486, %v1329
        %v1488 = vpop.permute.xlu0 %1487
        %v1490 = vlaneseq
        %v1491 = vshrl.u32 %v1490, 7
        %v1492 = vsub.s32 1, %v1491
        %v1493 = vrot.slane %v517, %v1492
        %v1494 = vmul.f32 %v1333, %v1493
        %v1495 = vmul.f32 %v1338, %v1493
        %v1496 = vmul.f32 %v1343, %v1493
        %v1497 = vmul.f32 %v1348, %v1493
        %v1498 = vmul.f32 %v1353, %v1493
        %v1499 = vmul.f32 %v1358, %v1493
        %v1500 = vmul.f32 %v1363, %v1493
        %v1501 = vmul.f32 %v1368, %v1493
        %v1502 = vmul.f32 %v1373, %v1493
        %v1503 = vmul.f32 %v1378, %v1493
        %v1504 = vmul.f32 %v1383, %v1493
        %v1505 = vmul.f32 %v1388, %v1493
        %v1506 = vmul.f32 %v1393, %v1493
        %v1507 = vmul.f32 %v1398, %v1493
        %v1508 = vmul.f32 %v1403, %v1493
        %v1509 = vmul.f32 %v1408, %v1493
        %v1510 = vmul.f32 %v1413, %v1493
        %v1511 = vmul.f32 %v1418, %v1493
        %v1512 = vmul.f32 %v1423, %v1493
        %v1513 = vmul.f32 %v1428, %v1493
        %v1514 = vmul.f32 %v1433, %v1493
        %v1515 = vmul.f32 %v1438, %v1493
        %v1516 = vmul.f32 %v1443, %v1493
        %v1517 = vmul.f32 %v1448, %v1493
        %v1518 = vmul.f32 %v1453, %v1493
        %v1519 = vmul.f32 %v1458, %v1493
        %v1520 = vmul.f32 %v1463, %v1493
        %v1521 = vmul.f32 %v1468, %v1493
        %v1522 = vmul.f32 %v1473, %v1493
        %v1523 = vmul.f32 %v1478, %v1493
        %v1524 = vmul.f32 %v1483, %v1493
        %v1525 = vmul.f32 %v1488, %v1493
        %v1526 = vadd.f32 %v1266, %v1494
        %v1527 = vadd.f32 %v1267, %v1495
        %v1528 = vadd.f32 %v1268, %v1496
        %v1529 = vadd.f32 %v1269, %v1497
        %v1530 = vadd.f32 %v1270, %v1498
        %v1531 = vadd.f32 %v1271, %v1499
        %v1532 = vadd.f32 %v1272, %v1500
        %v1533 = vadd.f32 %v1273, %v1501
        %v1534 = vadd.f32 %v1274, %v1502
        %v1535 = vadd.f32 %v1275, %v1503
        %v1536 = vadd.f32 %v1276, %v1504
        %v1537 = vadd.f32 %v1277, %v1505
        %v1538 = vadd.f32 %v1278, %v1506
        %v1539 = vadd.f32 %v1279, %v1507
        %v1540 = vadd.f32 %v1280, %v1508
        %v1541 = vadd.f32 %v1281, %v1509
        %v1542 = vadd.f32 %v1282, %v1510
        %v1543 = vadd.f32 %v1283, %v1511
        %v1544 = vadd.f32 %v1284, %v1512
        %v1545 = vadd.f32 %v1285, %v1513
        %v1546 = vadd.f32 %v1286, %v1514
        %v1547 = vadd.f32 %v1287, %v1515
        %v1548 = vadd.f32 %v1288, %v1516
        %v1549 = vadd.f32 %v1289, %v1517
        %v1550 = vadd.f32 %v1290, %v1518
        %v1551 = vadd.f32 %v1291, %v1519
        %v1552 = vadd.f32 %v1292, %v1520
        %v1553 = vadd.f32 %v1293, %v1521
        %v1554 = vadd.f32 %v1294, %v1522
        %v1555 = vadd.f32 %v1295, %v1523
        %v1556 = vadd.f32 %v1296, %v1524
        %v1557 = vadd.f32 %v1297, %v1525
        %v1558 = vld [vmem:[%s2] sm:$0x1]
        %v1560 = vlaneseq
        %v1561 = vshrl.u32 %v1560, 7
        %v1562 = vsub.s32 0, %v1561
        %v1563 = vrot.slane %v1558, %v1562
        %v1565 = vadd.f32 %v1526, %v1563
        %v1566 = vadd.f32 %v1527, %v1563
        %v1567 = vadd.f32 %v1528, %v1563
        %v1568 = vadd.f32 %v1529, %v1563
        %v1569 = vadd.f32 %v1530, %v1563
        %v1570 = vadd.f32 %v1531, %v1563
        %v1571 = vadd.f32 %v1532, %v1563
        %v1572 = vadd.f32 %v1533, %v1563
        %v1573 = vadd.f32 %v1534, %v1563
        %v1574 = vadd.f32 %v1535, %v1563
        %v1575 = vadd.f32 %v1536, %v1563
        %v1576 = vadd.f32 %v1537, %v1563
        %v1577 = vadd.f32 %v1538, %v1563
        %v1578 = vadd.f32 %v1539, %v1563
        %v1579 = vadd.f32 %v1540, %v1563
        %v1580 = vadd.f32 %v1541, %v1563
        %v1581 = vadd.f32 %v1542, %v1563
        %v1582 = vadd.f32 %v1543, %v1563
        %v1583 = vadd.f32 %v1544, %v1563
        %v1584 = vadd.f32 %v1545, %v1563
        %v1585 = vadd.f32 %v1546, %v1563
        %v1586 = vadd.f32 %v1547, %v1563
        %v1587 = vadd.f32 %v1548, %v1563
        %v1588 = vadd.f32 %v1549, %v1563
        %v1589 = vadd.f32 %v1550, %v1563
        %v1590 = vadd.f32 %v1551, %v1563
        %v1591 = vadd.f32 %v1552, %v1563
        %v1592 = vadd.f32 %v1553, %v1563
        %v1593 = vadd.f32 %v1554, %v1563
        %v1594 = vadd.f32 %v1555, %v1563
        %v1595 = vadd.f32 %v1556, %v1563
        %v1596 = vadd.f32 %v1557, %v1563
        %v1597 = vmax.f32 %v1565, 0.0
        %v1598 = vmax.f32 %v1566, 0.0
        %v1599 = vmax.f32 %v1567, 0.0
        %v1600 = vmax.f32 %v1568, 0.0
        %v1601 = vmax.f32 %v1569, 0.0
        %v1602 = vmax.f32 %v1570, 0.0
        %v1603 = vmax.f32 %v1571, 0.0
        %v1604 = vmax.f32 %v1572, 0.0
        %v1605 = vmax.f32 %v1573, 0.0
        %v1606 = vmax.f32 %v1574, 0.0
        %v1607 = vmax.f32 %v1575, 0.0
        %v1608 = vmax.f32 %v1576, 0.0
        %v1609 = vmax.f32 %v1577, 0.0
        %v1610 = vmax.f32 %v1578, 0.0
        %v1611 = vmax.f32 %v1579, 0.0
        %v1612 = vmax.f32 %v1580, 0.0
        %v1613 = vmax.f32 %v1581, 0.0
        %v1614 = vmax.f32 %v1582, 0.0
        %v1615 = vmax.f32 %v1583, 0.0
        %v1616 = vmax.f32 %v1584, 0.0
        %v1617 = vmax.f32 %v1585, 0.0
        %v1618 = vmax.f32 %v1586, 0.0
        %v1619 = vmax.f32 %v1587, 0.0
        %v1620 = vmax.f32 %v1588, 0.0
        %v1621 = vmax.f32 %v1589, 0.0
        %v1622 = vmax.f32 %v1590, 0.0
        %v1623 = vmax.f32 %v1591, 0.0
        %v1624 = vmax.f32 %v1592, 0.0
        %v1625 = vmax.f32 %v1593, 0.0
        %v1626 = vmax.f32 %v1594, 0.0
        %v1627 = vmax.f32 %v1595, 0.0
        %v1628 = vmax.f32 %v1596, 0.0
        %s1629 = scalar_lea.vmem [#allocation3], 24
        %1630 = vst.msk [vmem:[%s1629 + $0x1] sm:$0xff] %vm347, %v1597
        %1631 = vst.msk [vmem:[%s1629 + $0x9] sm:$0xff] %vm347, %v1598
        %1632 = vst.msk [vmem:[%s1629 + $0x19] sm:$0xff] %vm347, %v1599
        %1633 = vst.msk [vmem:[%s1629 + $0x21] sm:$0xff] %vm347, %v1600
        %1634 = vst.msk [vmem:[%s1629 + $0x31] sm:$0xff] %vm347, %v1601
        %1635 = vst.msk [vmem:[%s1629 + $0x39] sm:$0xff] %vm347, %v1602
        %1636 = vst.msk [vmem:[%s1629 + $0x49] sm:$0xff] %vm347, %v1603
        %1637 = vst.msk [vmem:[%s1629 + $0x51] sm:$0xff] %vm347, %v1604
        %1638 = vst.msk [vmem:[%s1629 + $0x61] sm:$0xff] %vm347, %v1605
        %1639 = vst.msk [vmem:[%s1629 + $0x69] sm:$0xff] %vm347, %v1606
        %1640 = vst.msk [vmem:[%s1629 + $0x79] sm:$0xff] %vm347, %v1607
        %1641 = vst.msk [vmem:[%s1629 + $0x81] sm:$0xff] %vm347, %v1608
        %1642 = vst.msk [vmem:[%s1629 + $0x91] sm:$0xff] %vm347, %v1609
        %1643 = vst.msk [vmem:[%s1629 + $0x99] sm:$0xff] %vm347, %v1610
        %1644 = vst.msk [vmem:[%s1629 + $0xa9] sm:$0xff] %vm347, %v1611
        %1645 = vst.msk [vmem:[%s1629 + $0xb1] sm:$0xff] %vm347, %v1612
        %1646 = vst.msk [vmem:[%s1629 + $0xc1] sm:$0xff] %vm347, %v1613
        %1647 = vst.msk [vmem:[%s1629 + $0xc9] sm:$0xff] %vm347, %v1614
        %1648 = vst.msk [vmem:[%s1629 + $0xd9] sm:$0xff] %vm347, %v1615
        %1649 = vst.msk [vmem:[%s1629 + $0xe1] sm:$0xff] %vm347, %v1616
        %1650 = vst.msk [vmem:[%s1629 + $0xf1] sm:$0xff] %vm347, %v1617
        %1651 = vst.msk [vmem:[%s1629 + $0xf9] sm:$0xff] %vm347, %v1618
        %1652 = vst.msk [vmem:[%s1629 + $0x109] sm:$0xff] %vm347, %v1619
        %1653 = vst.msk [vmem:[%s1629 + $0x111] sm:$0xff] %vm347, %v1620
        %1654 = vst.msk [vmem:[%s1629 + $0x121] sm:$0xff] %vm347, %v1621
        %1655 = vst.msk [vmem:[%s1629 + $0x129] sm:$0xff] %vm347, %v1622
        %1656 = vst.msk [vmem:[%s1629 + $0x139] sm:$0xff] %vm347, %v1623
        %1657 = vst.msk [vmem:[%s1629 + $0x141] sm:$0xff] %vm347, %v1624
        %1658 = vst.msk [vmem:[%s1629 + $0x151] sm:$0xff] %vm347, %v1625
        %1659 = vst.msk [vmem:[%s1629 + $0x159] sm:$0xff] %vm347, %v1626
        %1660 = vst.msk [vmem:[%s1629 + $0x169] sm:$0xff] %vm347, %v1627
        %1661 = vst.msk [vmem:[%s1629 + $0x171] sm:$0xff] %vm347, %v1628
        %v1662 = vld [vmem:[#allocation3] sm:$0xff]
        %v1663 = vld [vmem:[#allocation3 + $0x8] sm:$0xff]
        %v1664 = vld [vmem:[#allocation3 + $0x18] sm:$0xff]
        %v1665 = vld [vmem:[#allocation3 + $0x20] sm:$0xff]
        %v1666 = vld [vmem:[#allocation3 + $0x30] sm:$0xff]
        %v1667 = vld [vmem:[#allocation3 + $0x38] sm:$0xff]
        %v1668 = vld [vmem:[#allocation3 + $0x48] sm:$0xff]
        %v1669 = vld [vmem:[#allocation3 + $0x50] sm:$0xff]
        %v1670 = vld [vmem:[#allocation3 + $0x60] sm:$0xff]
        %v1671 = vld [vmem:[#allocation3 + $0x68] sm:$0xff]
        %v1672 = vld [vmem:[#allocation3 + $0x78] sm:$0xff]
        %v1673 = vld [vmem:[#allocation3 + $0x80] sm:$0xff]
        %v1674 = vld [vmem:[#allocation3 + $0x90] sm:$0xff]
        %v1675 = vld [vmem:[#allocation3 + $0x98] sm:$0xff]
        %v1676 = vld [vmem:[#allocation3 + $0xa8] sm:$0xff]
        %v1677 = vld [vmem:[#allocation3 + $0xb0] sm:$0xff]
        %v1678 = vld [vmem:[#allocation3 + $0xc0] sm:$0xff]
        %v1679 = vld [vmem:[#allocation3 + $0xc8] sm:$0xff]
        %v1680 = vld [vmem:[#allocation3 + $0xd8] sm:$0xff]
        %v1681 = vld [vmem:[#allocation3 + $0xe0] sm:$0xff]
        %v1682 = vld [vmem:[#allocation3 + $0xf0] sm:$0xff]
        %v1683 = vld [vmem:[#allocation3 + $0xf8] sm:$0xff]
        %v1684 = vld [vmem:[#allocation3 + $0x108] sm:$0xff]
        %v1685 = vld [vmem:[#allocation3 + $0x110] sm:$0xff]
        %v1686 = vld [vmem:[#allocation3 + $0x120] sm:$0xff]
        %v1687 = vld [vmem:[#allocation3 + $0x128] sm:$0xff]
        %v1688 = vld [vmem:[#allocation3 + $0x138] sm:$0xff]
        %v1689 = vld [vmem:[#allocation3 + $0x140] sm:$0xff]
        %v1690 = vld [vmem:[#allocation3 + $0x150] sm:$0xff]
        %v1691 = vld [vmem:[#allocation3 + $0x158] sm:$0xff]
        %v1692 = vld [vmem:[#allocation3 + $0x168] sm:$0xff]
        %v1693 = vld [vmem:[#allocation3 + $0x170] sm:$0xff]
        %v1694 = vld [vmem:[#allocation3 + $0x1] sm:$0xff]
        %v1695 = vld [vmem:[#allocation3 + $0x9] sm:$0xff]
        %v1696 = vld [vmem:[#allocation3 + $0x19] sm:$0xff]
        %v1697 = vld [vmem:[#allocation3 + $0x21] sm:$0xff]
        %v1698 = vld [vmem:[#allocation3 + $0x31] sm:$0xff]
        %v1699 = vld [vmem:[#allocation3 + $0x39] sm:$0xff]
        %v1700 = vld [vmem:[#allocation3 + $0x49] sm:$0xff]
        %v1701 = vld [vmem:[#allocation3 + $0x51] sm:$0xff]
        %v1702 = vld [vmem:[#allocation3 + $0x61] sm:$0xff]
        %v1703 = vld [vmem:[#allocation3 + $0x69] sm:$0xff]
        %v1704 = vld [vmem:[#allocation3 + $0x79] sm:$0xff]
        %v1705 = vld [vmem:[#allocation3 + $0x81] sm:$0xff]
        %v1706 = vld [vmem:[#allocation3 + $0x91] sm:$0xff]
        %v1707 = vld [vmem:[#allocation3 + $0x99] sm:$0xff]
        %v1708 = vld [vmem:[#allocation3 + $0xa9] sm:$0xff]
        %v1709 = vld [vmem:[#allocation3 + $0xb1] sm:$0xff]
        %v1710 = vld [vmem:[#allocation3 + $0xc1] sm:$0xff]
        %v1711 = vld [vmem:[#allocation3 + $0xc9] sm:$0xff]
        %v1712 = vld [vmem:[#allocation3 + $0xd9] sm:$0xff]
        %v1713 = vld [vmem:[#allocation3 + $0xe1] sm:$0xff]
        %v1714 = vld [vmem:[#allocation3 + $0xf1] sm:$0xff]
        %v1715 = vld [vmem:[#allocation3 + $0xf9] sm:$0xff]
        %v1716 = vld [vmem:[#allocation3 + $0x109] sm:$0xff]
        %v1717 = vld [vmem:[#allocation3 + $0x111] sm:$0xff]
        %v1718 = vld [vmem:[#allocation3 + $0x121] sm:$0xff]
        %v1719 = vld [vmem:[#allocation3 + $0x129] sm:$0xff]
        %v1720 = vld [vmem:[#allocation3 + $0x139] sm:$0xff]
        %v1721 = vld [vmem:[#allocation3 + $0x141] sm:$0xff]
        %v1722 = vld [vmem:[#allocation3 + $0x151] sm:$0xff]
        %v1723 = vld [vmem:[#allocation3 + $0x159] sm:$0xff]
        %v1724 = vld [vmem:[#allocation3 + $0x169] sm:$0xff]
        %v1725 = vld [vmem:[#allocation3 + $0x171] sm:$0xff]
        %v1726 = vld [vmem:[%s1629] sm:$0xff]
        %v1727 = vld [vmem:[%s1629 + $0x8] sm:$0xff]
        %v1728 = vld [vmem:[%s1629 + $0x18] sm:$0xff]
        %v1729 = vld [vmem:[%s1629 + $0x20] sm:$0xff]
        %v1730 = vld [vmem:[%s1629 + $0x30] sm:$0xff]
        %v1731 = vld [vmem:[%s1629 + $0x38] sm:$0xff]
        %v1732 = vld [vmem:[%s1629 + $0x48] sm:$0xff]
        %v1733 = vld [vmem:[%s1629 + $0x50] sm:$0xff]
        %v1734 = vld [vmem:[%s1629 + $0x60] sm:$0xff]
        %v1735 = vld [vmem:[%s1629 + $0x68] sm:$0xff]
        %v1736 = vld [vmem:[%s1629 + $0x78] sm:$0xff]
        %v1737 = vld [vmem:[%s1629 + $0x80] sm:$0xff]
        %v1738 = vld [vmem:[%s1629 + $0x90] sm:$0xff]
        %v1739 = vld [vmem:[%s1629 + $0x98] sm:$0xff]
        %v1740 = vld [vmem:[%s1629 + $0xa8] sm:$0xff]
        %v1741 = vld [vmem:[%s1629 + $0xb0] sm:$0xff]
        %v1742 = vld [vmem:[%s1629 + $0xc0] sm:$0xff]
        %v1743 = vld [vmem:[%s1629 + $0xc8] sm:$0xff]
        %v1744 = vld [vmem:[%s1629 + $0xd8] sm:$0xff]
        %v1745 = vld [vmem:[%s1629 + $0xe0] sm:$0xff]
        %v1746 = vld [vmem:[%s1629 + $0xf0] sm:$0xff]
        %v1747 = vld [vmem:[%s1629 + $0xf8] sm:$0xff]
        %v1748 = vld [vmem:[%s1629 + $0x108] sm:$0xff]
        %v1749 = vld [vmem:[%s1629 + $0x110] sm:$0xff]
        %v1750 = vld [vmem:[%s1629 + $0x120] sm:$0xff]
        %v1751 = vld [vmem:[%s1629 + $0x128] sm:$0xff]
        %v1752 = vld [vmem:[%s1629 + $0x138] sm:$0xff]
        %v1753 = vld [vmem:[%s1629 + $0x140] sm:$0xff]
        %v1754 = vld [vmem:[%s1629 + $0x150] sm:$0xff]
        %v1755 = vld [vmem:[%s1629 + $0x158] sm:$0xff]
        %v1756 = vld [vmem:[%s1629 + $0x168] sm:$0xff]
        %v1757 = vld [vmem:[%s1629 + $0x170] sm:$0xff]
        %v1758 = vld [vmem:[%s1629 + $0x1] sm:$0xff]
        %v1759 = vld [vmem:[%s1629 + $0x9] sm:$0xff]
        %v1760 = vld [vmem:[%s1629 + $0x19] sm:$0xff]
        %v1761 = vld [vmem:[%s1629 + $0x21] sm:$0xff]
        %v1762 = vld [vmem:[%s1629 + $0x31] sm:$0xff]
        %v1763 = vld [vmem:[%s1629 + $0x39] sm:$0xff]
        %v1764 = vld [vmem:[%s1629 + $0x49] sm:$0xff]
        %v1765 = vld [vmem:[%s1629 + $0x51] sm:$0xff]
        %v1766 = vld [vmem:[%s1629 + $0x61] sm:$0xff]
        %v1767 = vld [vmem:[%s1629 + $0x69] sm:$0xff]
        %v1768 = vld [vmem:[%s1629 + $0x79] sm:$0xff]
        %v1769 = vld [vmem:[%s1629 + $0x81] sm:$0xff]
        %v1770 = vld [vmem:[%s1629 + $0x91] sm:$0xff]
        %v1771 = vld [vmem:[%s1629 + $0x99] sm:$0xff]
        %v1772 = vld [vmem:[%s1629 + $0xa9] sm:$0xff]
        %v1773 = vld [vmem:[%s1629 + $0xb1] sm:$0xff]
        %v1774 = vld [vmem:[%s1629 + $0xc1] sm:$0xff]
        %v1775 = vld [vmem:[%s1629 + $0xc9] sm:$0xff]
        %v1776 = vld [vmem:[%s1629 + $0xd9] sm:$0xff]
        %v1777 = vld [vmem:[%s1629 + $0xe1] sm:$0xff]
        %v1778 = vld [vmem:[%s1629 + $0xf1] sm:$0xff]
        %v1779 = vld [vmem:[%s1629 + $0xf9] sm:$0xff]
        %v1780 = vld [vmem:[%s1629 + $0x109] sm:$0xff]
        %v1781 = vld [vmem:[%s1629 + $0x111] sm:$0xff]
        %v1782 = vld [vmem:[%s1629 + $0x121] sm:$0xff]
        %v1783 = vld [vmem:[%s1629 + $0x129] sm:$0xff]
        %v1784 = vld [vmem:[%s1629 + $0x139] sm:$0xff]
        %v1785 = vld [vmem:[%s1629 + $0x141] sm:$0xff]
        %v1786 = vld [vmem:[%s1629 + $0x151] sm:$0xff]
        %v1787 = vld [vmem:[%s1629 + $0x159] sm:$0xff]
        %v1788 = vld [vmem:[%s1629 + $0x169] sm:$0xff]
        %v1789 = vld [vmem:[%s1629 + $0x171] sm:$0xff]
        %1822 = vrot.lane.b32.xlu0 %v1694, 64
        %v1823 = vpop.permute.xlu0 %1822
        %1824 = vrot.lane.b32.xlu0 %v1695, 64
        %v1825 = vpop.permute.xlu0 %1824
        %1826 = vrot.lane.b32.xlu0 %v1696, 64
        %v1827 = vpop.permute.xlu0 %1826
        %1828 = vrot.lane.b32.xlu0 %v1697, 64
        %v1829 = vpop.permute.xlu0 %1828
        %1830 = vrot.lane.b32.xlu0 %v1698, 64
        %v1831 = vpop.permute.xlu0 %1830
        %1832 = vrot.lane.b32.xlu0 %v1699, 64
        %v1833 = vpop.permute.xlu0 %1832
        %1834 = vrot.lane.b32.xlu0 %v1700, 64
        %v1835 = vpop.permute.xlu0 %1834
        %1836 = vrot.lane.b32.xlu0 %v1701, 64
        %v1837 = vpop.permute.xlu0 %1836
        %1838 = vrot.lane.b32.xlu0 %v1702, 64
        %v1839 = vpop.permute.xlu0 %1838
        %1840 = vrot.lane.b32.xlu0 %v1703, 64
        %v1841 = vpop.permute.xlu0 %1840
        %1842 = vrot.lane.b32.xlu0 %v1704, 64
        %v1843 = vpop.permute.xlu0 %1842
        %1844 = vrot.lane.b32.xlu0 %v1705, 64
        %v1845 = vpop.permute.xlu0 %1844
        %1846 = vrot.lane.b32.xlu0 %v1706, 64
        %v1847 = vpop.permute.xlu0 %1846
        %1848 = vrot.lane.b32.xlu0 %v1707, 64
        %v1849 = vpop.permute.xlu0 %1848
        %1850 = vrot.lane.b32.xlu0 %v1708, 64
        %v1851 = vpop.permute.xlu0 %1850
        %1852 = vrot.lane.b32.xlu0 %v1709, 64
        %v1853 = vpop.permute.xlu0 %1852
        %1854 = vrot.lane.b32.xlu0 %v1710, 64
        %v1855 = vpop.permute.xlu0 %1854
        %1856 = vrot.lane.b32.xlu0 %v1711, 64
        %v1857 = vpop.permute.xlu0 %1856
        %1858 = vrot.lane.b32.xlu0 %v1712, 64
        %v1859 = vpop.permute.xlu0 %1858
        %1860 = vrot.lane.b32.xlu0 %v1713, 64
        %v1861 = vpop.permute.xlu0 %1860
        %1862 = vrot.lane.b32.xlu0 %v1714, 64
        %v1863 = vpop.permute.xlu0 %1862
        %1864 = vrot.lane.b32.xlu0 %v1715, 64
        %v1865 = vpop.permute.xlu0 %1864
        %1866 = vrot.lane.b32.xlu0 %v1716, 64
        %v1867 = vpop.permute.xlu0 %1866
        %1868 = vrot.lane.b32.xlu0 %v1717, 64
        %v1869 = vpop.permute.xlu0 %1868
        %1870 = vrot.lane.b32.xlu0 %v1718, 64
        %v1871 = vpop.permute.xlu0 %1870
        %1872 = vrot.lane.b32.xlu0 %v1719, 64
        %v1873 = vpop.permute.xlu0 %1872
        %1874 = vrot.lane.b32.xlu0 %v1720, 64
        %v1875 = vpop.permute.xlu0 %1874
        %1876 = vrot.lane.b32.xlu0 %v1721, 64
        %v1877 = vpop.permute.xlu0 %1876
        %1878 = vrot.lane.b32.xlu0 %v1722, 64
        %v1879 = vpop.permute.xlu0 %1878
        %1880 = vrot.lane.b32.xlu0 %v1723, 64
        %v1881 = vpop.permute.xlu0 %1880
        %1882 = vrot.lane.b32.xlu0 %v1724, 64
        %v1883 = vpop.permute.xlu0 %1882
        %1884 = vrot.lane.b32.xlu0 %v1725, 64
        %v1885 = vpop.permute.xlu0 %1884
        %1950 = vrot.lane.b32.xlu0 %v1758, 64
        %v1951 = vpop.permute.xlu0 %1950
        %1952 = vrot.lane.b32.xlu0 %v1759, 64
        %v1953 = vpop.permute.xlu0 %1952
        %1954 = vrot.lane.b32.xlu0 %v1760, 64
        %v1955 = vpop.permute.xlu0 %1954
        %1956 = vrot.lane.b32.xlu0 %v1761, 64
        %v1957 = vpop.permute.xlu0 %1956
        %1958 = vrot.lane.b32.xlu0 %v1762, 64
        %v1959 = vpop.permute.xlu0 %1958
        %1960 = vrot.lane.b32.xlu0 %v1763, 64
        %v1961 = vpop.permute.xlu0 %1960
        %1962 = vrot.lane.b32.xlu0 %v1764, 64
        %v1963 = vpop.permute.xlu0 %1962
        %1964 = vrot.lane.b32.xlu0 %v1765, 64
        %v1965 = vpop.permute.xlu0 %1964
        %1966 = vrot.lane.b32.xlu0 %v1766, 64
        %v1967 = vpop.permute.xlu0 %1966
        %1968 = vrot.lane.b32.xlu0 %v1767, 64
        %v1969 = vpop.permute.xlu0 %1968
        %1970 = vrot.lane.b32.xlu0 %v1768, 64
        %v1971 = vpop.permute.xlu0 %1970
        %1972 = vrot.lane.b32.xlu0 %v1769, 64
        %v1973 = vpop.permute.xlu0 %1972
        %1974 = vrot.lane.b32.xlu0 %v1770, 64
        %v1975 = vpop.permute.xlu0 %1974
        %1976 = vrot.lane.b32.xlu0 %v1771, 64
        %v1977 = vpop.permute.xlu0 %1976
        %1978 = vrot.lane.b32.xlu0 %v1772, 64
        %v1979 = vpop.permute.xlu0 %1978
        %1980 = vrot.lane.b32.xlu0 %v1773, 64
        %v1981 = vpop.permute.xlu0 %1980
        %1982 = vrot.lane.b32.xlu0 %v1774, 64
        %v1983 = vpop.permute.xlu0 %1982
        %1984 = vrot.lane.b32.xlu0 %v1775, 64
        %v1985 = vpop.permute.xlu0 %1984
        %1986 = vrot.lane.b32.xlu0 %v1776, 64
        %v1987 = vpop.permute.xlu0 %1986
        %1988 = vrot.lane.b32.xlu0 %v1777, 64
        %v1989 = vpop.permute.xlu0 %1988
        %1990 = vrot.lane.b32.xlu0 %v1778, 64
        %v1991 = vpop.permute.xlu0 %1990
        %1992 = vrot.lane.b32.xlu0 %v1779, 64
        %v1993 = vpop.permute.xlu0 %1992
        %1994 = vrot.lane.b32.xlu0 %v1780, 64
        %v1995 = vpop.permute.xlu0 %1994
        %1996 = vrot.lane.b32.xlu0 %v1781, 64
        %v1997 = vpop.permute.xlu0 %1996
        %1998 = vrot.lane.b32.xlu0 %v1782, 64
        %v1999 = vpop.permute.xlu0 %1998
        %2000 = vrot.lane.b32.xlu0 %v1783, 64
        %v2001 = vpop.permute.xlu0 %2000
        %2002 = vrot.lane.b32.xlu0 %v1784, 64
        %v2003 = vpop.permute.xlu0 %2002
        %2004 = vrot.lane.b32.xlu0 %v1785, 64
        %v2005 = vpop.permute.xlu0 %2004
        %2006 = vrot.lane.b32.xlu0 %v1786, 64
        %v2007 = vpop.permute.xlu0 %2006
        %2008 = vrot.lane.b32.xlu0 %v1787, 64
        %v2009 = vpop.permute.xlu0 %2008
        %2010 = vrot.lane.b32.xlu0 %v1788, 64
        %v2011 = vpop.permute.xlu0 %2010
        %2012 = vrot.lane.b32.xlu0 %v1789, 64
        %v2013 = vpop.permute.xlu0 %2012
        %v2046 = vsel %vm347, %v1662, %v1823
        %v2047 = vsel %vm347, %v1663, %v1825
        %v2048 = vsel %vm347, %v1664, %v1827
        %v2049 = vsel %vm347, %v1665, %v1829
        %v2050 = vsel %vm347, %v1666, %v1831
        %v2051 = vsel %vm347, %v1667, %v1833
        %v2052 = vsel %vm347, %v1668, %v1835
        %v2053 = vsel %vm347, %v1669, %v1837
        %v2054 = vsel %vm347, %v1670, %v1839
        %v2055 = vsel %vm347, %v1671, %v1841
        %v2056 = vsel %vm347, %v1672, %v1843
        %v2057 = vsel %vm347, %v1673, %v1845
        %v2058 = vsel %vm347, %v1674, %v1847
        %v2059 = vsel %vm347, %v1675, %v1849
        %v2060 = vsel %vm347, %v1676, %v1851
        %v2061 = vsel %vm347, %v1677, %v1853
        %v2062 = vsel %vm347, %v1678, %v1855
        %v2063 = vsel %vm347, %v1679, %v1857
        %v2064 = vsel %vm347, %v1680, %v1859
        %v2065 = vsel %vm347, %v1681, %v1861
        %v2066 = vsel %vm347, %v1682, %v1863
        %v2067 = vsel %vm347, %v1683, %v1865
        %v2068 = vsel %vm347, %v1684, %v1867
        %v2069 = vsel %vm347, %v1685, %v1869
        %v2070 = vsel %vm347, %v1686, %v1871
        %v2071 = vsel %vm347, %v1687, %v1873
        %v2072 = vsel %vm347, %v1688, %v1875
        %v2073 = vsel %vm347, %v1689, %v1877
        %v2074 = vsel %vm347, %v1690, %v1879
        %v2075 = vsel %vm347, %v1691, %v1881
        %v2076 = vsel %vm347, %v1692, %v1883
        %v2077 = vsel %vm347, %v1693, %v1885
        %v2078 = vsel %vm347, %v1726, %v1951
        %v2079 = vsel %vm347, %v1727, %v1953
        %v2080 = vsel %vm347, %v1728, %v1955
        %v2081 = vsel %vm347, %v1729, %v1957
        %v2082 = vsel %vm347, %v1730, %v1959
        %v2083 = vsel %vm347, %v1731, %v1961
        %v2084 = vsel %vm347, %v1732, %v1963
        %v2085 = vsel %vm347, %v1733, %v1965
        %v2086 = vsel %vm347, %v1734, %v1967
        %v2087 = vsel %vm347, %v1735, %v1969
        %v2088 = vsel %vm347, %v1736, %v1971
        %v2089 = vsel %vm347, %v1737, %v1973
        %v2090 = vsel %vm347, %v1738, %v1975
        %v2091 = vsel %vm347, %v1739, %v1977
        %v2092 = vsel %vm347, %v1740, %v1979
        %v2093 = vsel %vm347, %v1741, %v1981
        %v2094 = vsel %vm347, %v1742, %v1983
        %v2095 = vsel %vm347, %v1743, %v1985
        %v2096 = vsel %vm347, %v1744, %v1987
        %v2097 = vsel %vm347, %v1745, %v1989
        %v2098 = vsel %vm347, %v1746, %v1991
        %v2099 = vsel %vm347, %v1747, %v1993
        %v2100 = vsel %vm347, %v1748, %v1995
        %v2101 = vsel %vm347, %v1749, %v1997
        %v2102 = vsel %vm347, %v1750, %v1999
        %v2103 = vsel %vm347, %v1751, %v2001
        %v2104 = vsel %vm347, %v1752, %v2003
        %v2105 = vsel %vm347, %v1753, %v2005
        %v2106 = vsel %vm347, %v1754, %v2007
        %v2107 = vsel %vm347, %v1755, %v2009
        %v2108 = vsel %vm347, %v1756, %v2011
        %v2109 = vsel %vm347, %v1757, %v2013
        %v2110 = vld [vmem:[#allocation5] sm:$0xff]
        %v2111 = vld [vmem:[#allocation5 + $0x8] sm:$0xff]
        %v2112 = vld [vmem:[#allocation5 + $0x10] sm:$0xff]
        %v2113 = vld [vmem:[#allocation5 + $0x18] sm:$0xff]
        %v2114 = vld [vmem:[#allocation5 + $0x20] sm:$0xff]
        %v2115 = vld [vmem:[#allocation5 + $0x28] sm:$0xff]
        %v2116 = vld [vmem:[#allocation5 + $0x30] sm:$0xff]
        %v2117 = vld [vmem:[#allocation5 + $0x38] sm:$0xff]
        %v2118 = vld [vmem:[#allocation5 + $0x40] sm:$0xff]
        %v2119 = vld [vmem:[#allocation5 + $0x48] sm:$0xff]
        %v2120 = vld [vmem:[#allocation5 + $0x50] sm:$0xff]
        %v2121 = vld [vmem:[#allocation5 + $0x58] sm:$0xff]
        %v2122 = vld [vmem:[#allocation5 + $0x60] sm:$0xff]
        %v2123 = vld [vmem:[#allocation5 + $0x68] sm:$0xff]
        %v2124 = vld [vmem:[#allocation5 + $0x70] sm:$0xff]
        %v2125 = vld [vmem:[#allocation5 + $0x78] sm:$0xff]
        %v2126 = vld [vmem:[#allocation5 + $0x80] sm:$0xff]
        %v2127 = vld [vmem:[#allocation5 + $0x88] sm:$0xff]
        %v2128 = vld [vmem:[#allocation5 + $0x90] sm:$0xff]
        %v2129 = vld [vmem:[#allocation5 + $0x98] sm:$0xff]
        %v2130 = vld [vmem:[#allocation5 + $0xa0] sm:$0xff]
        %v2131 = vld [vmem:[#allocation5 + $0xa8] sm:$0xff]
        %v2132 = vld [vmem:[#allocation5 + $0xb0] sm:$0xff]
        %v2133 = vld [vmem:[#allocation5 + $0xb8] sm:$0xff]
        %v2134 = vld [vmem:[#allocation5 + $0xc0] sm:$0xff]
        %v2135 = vld [vmem:[#allocation5 + $0xc8] sm:$0xff]
        %v2136 = vld [vmem:[#allocation5 + $0xd0] sm:$0xff]
        %v2137 = vld [vmem:[#allocation5 + $0xd8] sm:$0xff]
        %v2138 = vld [vmem:[#allocation5 + $0xe0] sm:$0xff]
        %v2139 = vld [vmem:[#allocation5 + $0xe8] sm:$0xff]
        %v2140 = vld [vmem:[#allocation5 + $0xf0] sm:$0xff]
        %v2141 = vld [vmem:[#allocation5 + $0xf8] sm:$0xff]
        %2142 = vmatprep.subr.mxu0 0.0
        %2143 = vmatpush1.msra.mxu0 %v2110
        %2144 = vmatprep.subr.mxu0 0.0
        %2145 = vmatpush1.msra.mxu0 %v2111
        %2146 = vmatprep.subr.mxu0 0.0
        %2147 = vmatpush1.msra.mxu0 %v2112
        %2148 = vmatprep.subr.mxu0 0.0
        %2149 = vmatpush1.msra.mxu0 %v2113
        %2150 = vmatprep.subr.mxu0 0.0
        %2151 = vmatpush1.msra.mxu0 %v2114
        %2152 = vmatprep.subr.mxu0 0.0
        %2153 = vmatpush1.msra.mxu0 %v2115
        %2154 = vmatprep.subr.mxu0 0.0
        %2155 = vmatpush1.msra.mxu0 %v2116
        %2156 = vmatprep.subr.mxu0 0.0
        %2157 = vmatpush1.msra.mxu0 %v2117
        %2158 = vmatprep.subr.mxu0 0.0
        %2159 = vmatpush1.msra.mxu0 %v2118
        %2160 = vmatprep.subr.mxu0 0.0
        %2161 = vmatpush1.msra.mxu0 %v2119
        %2162 = vmatprep.subr.mxu0 0.0
        %2163 = vmatpush1.msra.mxu0 %v2120
        %2164 = vmatprep.subr.mxu0 0.0
        %2165 = vmatpush1.msra.mxu0 %v2121
        %2166 = vmatprep.subr.mxu0 0.0
        %2167 = vmatpush1.msra.mxu0 %v2122
        %2168 = vmatprep.subr.mxu0 0.0
        %2169 = vmatpush1.msra.mxu0 %v2123
        %2170 = vmatprep.subr.mxu0 0.0
        %2171 = vmatpush1.msra.mxu0 %v2124
        %2172 = vmatprep.subr.mxu0 0.0
        %2173 = vmatpush1.msra.mxu0 %v2125
        %2174 = vmatprep.subr.mxu0 0.0
        %2175 = vmatpush1.msra.mxu0 %v2126
        %2176 = vmatprep.subr.mxu0 0.0
        %2177 = vmatpush1.msra.mxu0 %v2127
        %2178 = vmatprep.subr.mxu0 0.0
        %2179 = vmatpush1.msra.mxu0 %v2128
        %2180 = vmatprep.subr.mxu0 0.0
        %2181 = vmatpush1.msra.mxu0 %v2129
        %2182 = vmatprep.subr.mxu0 0.0
        %2183 = vmatpush1.msra.mxu0 %v2130
        %2184 = vmatprep.subr.mxu0 0.0
        %2185 = vmatpush1.msra.mxu0 %v2131
        %2186 = vmatprep.subr.mxu0 0.0
        %2187 = vmatpush1.msra.mxu0 %v2132
        %2188 = vmatprep.subr.mxu0 0.0
        %2189 = vmatpush1.msra.mxu0 %v2133
        %2190 = vmatprep.subr.mxu0 0.0
        %2191 = vmatpush1.msra.mxu0 %v2134
        %2192 = vmatprep.subr.mxu0 0.0
        %2193 = vmatpush1.msra.mxu0 %v2135
        %2194 = vmatprep.subr.mxu0 0.0
        %2195 = vmatpush1.msra.mxu0 %v2136
        %2196 = vmatprep.subr.mxu0 0.0
        %2197 = vmatpush1.msra.mxu0 %v2137
        %2198 = vmatprep.subr.mxu0 0.0
        %2199 = vmatpush1.msra.mxu0 %v2138
        %2200 = vmatprep.subr.mxu0 0.0
        %2201 = vmatpush1.msra.mxu0 %v2139
        %2202 = vmatprep.subr.mxu0 0.0
        %2203 = vmatpush1.msra.mxu0 %v2140
        %2204 = vmatprep.subr.mxu0 0.0
        %2205 = vmatpush1.msra.mxu0 %v2141
        %2206 = vmatprep.mubr.f32.mxu0 %v2078
        %2207 = vmatmul.mubr.f32.gmra.mrb[0].mxu0 %v2046
        %v2208 = vpop.f32.mrb[0].mxu0
        %v2209 = vadd.f32 0.0, %v2208
        %v2210 = vpop.f32.mrb[0].mxu0
        %2211 = vmatprep.mubr.f32.mxu0 %v2079
        %2212 = vmatmul.mubr.f32.gmra.mrb[0].mxu0 %v2047
        %v2213 = vpop.f32.mrb[0].mxu0
        %v2214 = vadd.f32 0.0, %v2213
        %v2215 = vpop.f32.mrb[0].mxu0
        %2216 = vmatprep.mubr.f32.mxu0 %v2080
        %2217 = vmatmul.mubr.f32.gmra.mrb[0].mxu0 %v2048
        %v2218 = vpop.f32.mrb[0].mxu0
        %v2219 = vadd.f32 0.0, %v2218
        %v2220 = vpop.f32.mrb[0].mxu0
        %2221 = vmatprep.mubr.f32.mxu0 %v2081
        %2222 = vmatmul.mubr.f32.gmra.mrb[0].mxu0 %v2049
        %v2223 = vpop.f32.mrb[0].mxu0
        %v2224 = vadd.f32 0.0, %v2223
        %v2225 = vpop.f32.mrb[0].mxu0
        %2226 = vmatprep.mubr.f32.mxu0 %v2082
        %2227 = vmatmul.mubr.f32.gmra.mrb[0].mxu0 %v2050
        %v2228 = vpop.f32.mrb[0].mxu0
        %v2229 = vadd.f32 0.0, %v2228
        %v2230 = vpop.f32.mrb[0].mxu0
        %2231 = vmatprep.mubr.f32.mxu0 %v2083
        %2232 = vmatmul.mubr.f32.gmra.mrb[0].mxu0 %v2051
        %v2233 = vpop.f32.mrb[0].mxu0
        %v2234 = vadd.f32 0.0, %v2233
        %v2235 = vpop.f32.mrb[0].mxu0
        %2236 = vmatprep.mubr.f32.mxu0 %v2084
        %2237 = vmatmul.mubr.f32.gmra.mrb[0].mxu0 %v2052
        %v2238 = vpop.f32.mrb[0].mxu0
        %v2239 = vadd.f32 0.0, %v2238
        %v2240 = vpop.f32.mrb[0].mxu0
        %2241 = vmatprep.mubr.f32.mxu0 %v2085
        %2242 = vmatmul.mubr.f32.gmra.mrb[0].mxu0 %v2053
        %v2243 = vpop.f32.mrb[0].mxu0
        %v2244 = vadd.f32 0.0, %v2243
        %v2245 = vpop.f32.mrb[0].mxu0
        %2246 = vmatprep.mubr.f32.mxu0 %v2086
        %2247 = vmatmul.mubr.f32.gmra.mrb[0].mxu0 %v2054
        %v2248 = vpop.f32.mrb[0].mxu0
        %v2249 = vadd.f32 0.0, %v2248
        %v2250 = vpop.f32.mrb[0].mxu0
        %2251 = vmatprep.mubr.f32.mxu0 %v2087
        %2252 = vmatmul.mubr.f32.gmra.mrb[0].mxu0 %v2055
        %v2253 = vpop.f32.mrb[0].mxu0
        %v2254 = vadd.f32 0.0, %v2253
        %v2255 = vpop.f32.mrb[0].mxu0
        %2256 = vmatprep.mubr.f32.mxu0 %v2088
        %2257 = vmatmul.mubr.f32.gmra.mrb[0].mxu0 %v2056
        %v2258 = vpop.f32.mrb[0].mxu0
        %v2259 = vadd.f32 0.0, %v2258
        %v2260 = vpop.f32.mrb[0].mxu0
        %2261 = vmatprep.mubr.f32.mxu0 %v2089
        %2262 = vmatmul.mubr.f32.gmra.mrb[0].mxu0 %v2057
        %v2263 = vpop.f32.mrb[0].mxu0
        %v2264 = vadd.f32 0.0, %v2263
        %v2265 = vpop.f32.mrb[0].mxu0
        %2266 = vmatprep.mubr.f32.mxu0 %v2090
        %2267 = vmatmul.mubr.f32.gmra.mrb[0].mxu0 %v2058
        %v2268 = vpop.f32.mrb[0].mxu0
        %v2269 = vadd.f32 0.0, %v2268
        %v2270 = vpop.f32.mrb[0].mxu0
        %2271 = vmatprep.mubr.f32.mxu0 %v2091
        %2272 = vmatmul.mubr.f32.gmra.mrb[0].mxu0 %v2059
        %v2273 = vpop.f32.mrb[0].mxu0
        %v2274 = vadd.f32 0.0, %v2273
        %v2275 = vpop.f32.mrb[0].mxu0
        %2276 = vmatprep.mubr.f32.mxu0 %v2092
        %2277 = vmatmul.mubr.f32.gmra.mrb[0].mxu0 %v2060
        %v2278 = vpop.f32.mrb[0].mxu0
        %v2279 = vadd.f32 0.0, %v2278
        %v2280 = vpop.f32.mrb[0].mxu0
        %2281 = vmatprep.mubr.f32.mxu0 %v2093
        %2282 = vmatmul.mubr.f32.gmra.mrb[0].mxu0 %v2061
        %v2283 = vpop.f32.mrb[0].mxu0
        %v2284 = vadd.f32 0.0, %v2283
        %v2285 = vpop.f32.mrb[0].mxu0
        %2286 = vmatprep.mubr.f32.mxu0 %v2094
        %2287 = vmatmul.mubr.f32.gmra.mrb[0].mxu0 %v2062
        %v2288 = vpop.f32.mrb[0].mxu0
        %v2289 = vadd.f32 0.0, %v2288
        %v2290 = vpop.f32.mrb[0].mxu0
        %2291 = vmatprep.mubr.f32.mxu0 %v2095
        %2292 = vmatmul.mubr.f32.gmra.mrb[0].mxu0 %v2063
        %v2293 = vpop.f32.mrb[0].mxu0
        %v2294 = vadd.f32 0.0, %v2293
        %v2295 = vpop.f32.mrb[0].mxu0
        %2296 = vmatprep.mubr.f32.mxu0 %v2096
        %2297 = vmatmul.mubr.f32.gmra.mrb[0].mxu0 %v2064
        %v2298 = vpop.f32.mrb[0].mxu0
        %v2299 = vadd.f32 0.0, %v2298
        %v2300 = vpop.f32.mrb[0].mxu0
        %2301 = vmatprep.mubr.f32.mxu0 %v2097
        %2302 = vmatmul.mubr.f32.gmra.mrb[0].mxu0 %v2065
        %v2303 = vpop.f32.mrb[0].mxu0
        %v2304 = vadd.f32 0.0, %v2303
        %v2305 = vpop.f32.mrb[0].mxu0
        %2306 = vmatprep.mubr.f32.mxu0 %v2098
        %2307 = vmatmul.mubr.f32.gmra.mrb[0].mxu0 %v2066
        %v2308 = vpop.f32.mrb[0].mxu0
        %v2309 = vadd.f32 0.0, %v2308
        %v2310 = vpop.f32.mrb[0].mxu0
        %2311 = vmatprep.mubr.f32.mxu0 %v2099
        %2312 = vmatmul.mubr.f32.gmra.mrb[0].mxu0 %v2067
        %v2313 = vpop.f32.mrb[0].mxu0
        %v2314 = vadd.f32 0.0, %v2313
        %v2315 = vpop.f32.mrb[0].mxu0
        %2316 = vmatprep.mubr.f32.mxu0 %v2100
        %2317 = vmatmul.mubr.f32.gmra.mrb[0].mxu0 %v2068
        %v2318 = vpop.f32.mrb[0].mxu0
        %v2319 = vadd.f32 0.0, %v2318
        %v2320 = vpop.f32.mrb[0].mxu0
        %2321 = vmatprep.mubr.f32.mxu0 %v2101
        %2322 = vmatmul.mubr.f32.gmra.mrb[0].mxu0 %v2069
        %v2323 = vpop.f32.mrb[0].mxu0
        %v2324 = vadd.f32 0.0, %v2323
        %v2325 = vpop.f32.mrb[0].mxu0
        %2326 = vmatprep.mubr.f32.mxu0 %v2102
        %2327 = vmatmul.mubr.f32.gmra.mrb[0].mxu0 %v2070
        %v2328 = vpop.f32.mrb[0].mxu0
        %v2329 = vadd.f32 0.0, %v2328
        %v2330 = vpop.f32.mrb[0].mxu0
        %2331 = vmatprep.mubr.f32.mxu0 %v2103
        %2332 = vmatmul.mubr.f32.gmra.mrb[0].mxu0 %v2071
        %v2333 = vpop.f32.mrb[0].mxu0
        %v2334 = vadd.f32 0.0, %v2333
        %v2335 = vpop.f32.mrb[0].mxu0
        %2336 = vmatprep.mubr.f32.mxu0 %v2104
        %2337 = vmatmul.mubr.f32.gmra.mrb[0].mxu0 %v2072
        %v2338 = vpop.f32.mrb[0].mxu0
        %v2339 = vadd.f32 0.0, %v2338
        %v2340 = vpop.f32.mrb[0].mxu0
        %2341 = vmatprep.mubr.f32.mxu0 %v2105
        %2342 = vmatmul.mubr.f32.gmra.mrb[0].mxu0 %v2073
        %v2343 = vpop.f32.mrb[0].mxu0
        %v2344 = vadd.f32 0.0, %v2343
        %v2345 = vpop.f32.mrb[0].mxu0
        %2346 = vmatprep.mubr.f32.mxu0 %v2106
        %2347 = vmatmul.mubr.f32.gmra.mrb[0].mxu0 %v2074
        %v2348 = vpop.f32.mrb[0].mxu0
        %v2349 = vadd.f32 0.0, %v2348
        %v2350 = vpop.f32.mrb[0].mxu0
        %2351 = vmatprep.mubr.f32.mxu0 %v2107
        %2352 = vmatmul.mubr.f32.gmra.mrb[0].mxu0 %v2075
        %v2353 = vpop.f32.mrb[0].mxu0
        %v2354 = vadd.f32 0.0, %v2353
        %v2355 = vpop.f32.mrb[0].mxu0
        %2356 = vmatprep.mubr.f32.mxu0 %v2108
        %2357 = vmatmul.mubr.f32.gmra.mrb[0].mxu0 %v2076
        %v2358 = vpop.f32.mrb[0].mxu0
        %v2359 = vadd.f32 0.0, %v2358
        %v2360 = vpop.f32.mrb[0].mxu0
        %2361 = vmatprep.mubr.f32.mxu0 %v2109
        %2362 = vmatmul.mubr.f32.gmra.mrb[0].mxu0 %v2077
        %v2363 = vpop.f32.mrb[0].mxu0
        %v2364 = vadd.f32 0.0, %v2363
        %v2365 = vpop.f32.mrb[0].mxu0
        %2366 = vdwg.mxu0
        %v2367 = vld [vmem:[%s4] sm:$0x1]
        %v2369 = vlaneseq
        %v2370 = vshrl.u32 %v2369, 7
        %v2371 = vsub.s32 0, %v2370
        %v2372 = vrot.slane %v2367, %v2371
        %v2374 = vmul.f32 %v2209, %v2372
        %v2375 = vmul.f32 %v2214, %v2372
        %v2376 = vmul.f32 %v2219, %v2372
        %v2377 = vmul.f32 %v2224, %v2372
        %v2378 = vmul.f32 %v2229, %v2372
        %v2379 = vmul.f32 %v2234, %v2372
        %v2380 = vmul.f32 %v2239, %v2372
        %v2381 = vmul.f32 %v2244, %v2372
        %v2382 = vmul.f32 %v2249, %v2372
        %v2383 = vmul.f32 %v2254, %v2372
        %v2384 = vmul.f32 %v2259, %v2372
        %v2385 = vmul.f32 %v2264, %v2372
        %v2386 = vmul.f32 %v2269, %v2372
        %v2387 = vmul.f32 %v2274, %v2372
        %v2388 = vmul.f32 %v2279, %v2372
        %v2389 = vmul.f32 %v2284, %v2372
        %v2390 = vmul.f32 %v2289, %v2372
        %v2391 = vmul.f32 %v2294, %v2372
        %v2392 = vmul.f32 %v2299, %v2372
        %v2393 = vmul.f32 %v2304, %v2372
        %v2394 = vmul.f32 %v2309, %v2372
        %v2395 = vmul.f32 %v2314, %v2372
        %v2396 = vmul.f32 %v2319, %v2372
        %v2397 = vmul.f32 %v2324, %v2372
        %v2398 = vmul.f32 %v2329, %v2372
        %v2399 = vmul.f32 %v2334, %v2372
        %v2400 = vmul.f32 %v2339, %v2372
        %v2401 = vmul.f32 %v2344, %v2372
        %v2402 = vmul.f32 %v2349, %v2372
        %v2403 = vmul.f32 %v2354, %v2372
        %v2404 = vmul.f32 %v2359, %v2372
        %v2405 = vmul.f32 %v2364, %v2372
        %v2406 = vld [vmem:[%s5] sm:$0x1]
        %v2408 = vlaneseq
        %v2409 = vshrl.u32 %v2408, 7
        %v2410 = vsub.s32 0, %v2409
        %v2411 = vrot.slane %v2406, %v2410
        %v2413 = vadd.f32 %v2374, %v2411
        %v2414 = vadd.f32 %v2375, %v2411
        %v2415 = vadd.f32 %v2376, %v2411
        %v2416 = vadd.f32 %v2377, %v2411
        %v2417 = vadd.f32 %v2378, %v2411
        %v2418 = vadd.f32 %v2379, %v2411
        %v2419 = vadd.f32 %v2380, %v2411
        %v2420 = vadd.f32 %v2381, %v2411
        %v2421 = vadd.f32 %v2382, %v2411
        %v2422 = vadd.f32 %v2383, %v2411
        %v2423 = vadd.f32 %v2384, %v2411
        %v2424 = vadd.f32 %v2385, %v2411
        %v2425 = vadd.f32 %v2386, %v2411
        %v2426 = vadd.f32 %v2387, %v2411
        %v2427 = vadd.f32 %v2388, %v2411
        %v2428 = vadd.f32 %v2389, %v2411
        %v2429 = vadd.f32 %v2390, %v2411
        %v2430 = vadd.f32 %v2391, %v2411
        %v2431 = vadd.f32 %v2392, %v2411
        %v2432 = vadd.f32 %v2393, %v2411
        %v2433 = vadd.f32 %v2394, %v2411
        %v2434 = vadd.f32 %v2395, %v2411
        %v2435 = vadd.f32 %v2396, %v2411
        %v2436 = vadd.f32 %v2397, %v2411
        %v2437 = vadd.f32 %v2398, %v2411
        %v2438 = vadd.f32 %v2399, %v2411
        %v2439 = vadd.f32 %v2400, %v2411
        %v2440 = vadd.f32 %v2401, %v2411
        %v2441 = vadd.f32 %v2402, %v2411
        %v2442 = vadd.f32 %v2403, %v2411
        %v2443 = vadd.f32 %v2404, %v2411
        %v2444 = vadd.f32 %v2405, %v2411
        %v2445 = vmax.f32 %v2413, 0.0
        %v2446 = vmax.f32 %v2414, 0.0
        %v2447 = vmax.f32 %v2415, 0.0
        %v2448 = vmax.f32 %v2416, 0.0
        %v2449 = vmax.f32 %v2417, 0.0
        %v2450 = vmax.f32 %v2418, 0.0
        %v2451 = vmax.f32 %v2419, 0.0
        %v2452 = vmax.f32 %v2420, 0.0
        %v2453 = vmax.f32 %v2421, 0.0
        %v2454 = vmax.f32 %v2422, 0.0
        %v2455 = vmax.f32 %v2423, 0.0
        %v2456 = vmax.f32 %v2424, 0.0
        %v2457 = vmax.f32 %v2425, 0.0
        %v2458 = vmax.f32 %v2426, 0.0
        %v2459 = vmax.f32 %v2427, 0.0
        %v2460 = vmax.f32 %v2428, 0.0
        %v2461 = vmax.f32 %v2429, 0.0
        %v2462 = vmax.f32 %v2430, 0.0
        %v2463 = vmax.f32 %v2431, 0.0
        %v2464 = vmax.f32 %v2432, 0.0
        %v2465 = vmax.f32 %v2433, 0.0
        %v2466 = vmax.f32 %v2434, 0.0
        %v2467 = vmax.f32 %v2435, 0.0
        %v2468 = vmax.f32 %v2436, 0.0
        %v2469 = vmax.f32 %v2437, 0.0
        %v2470 = vmax.f32 %v2438, 0.0
        %v2471 = vmax.f32 %v2439, 0.0
        %v2472 = vmax.f32 %v2440, 0.0
        %v2473 = vmax.f32 %v2441, 0.0
        %v2474 = vmax.f32 %v2442, 0.0
        %v2475 = vmax.f32 %v2443, 0.0
        %v2476 = vmax.f32 %v2444, 0.0
        %s2477 = scalar_lea.vmem [#allocation4], 24
        %2478 = vst.msk [vmem:[%s2477 + $0x1] sm:$0xff] %vm347, %v2445
        %2479 = vst.msk [vmem:[%s2477 + $0x9] sm:$0xff] %vm347, %v2446
        %2480 = vst.msk [vmem:[%s2477 + $0x19] sm:$0xff] %vm347, %v2447
        %2481 = vst.msk [vmem:[%s2477 + $0x21] sm:$0xff] %vm347, %v2448
        %2482 = vst.msk [vmem:[%s2477 + $0x31] sm:$0xff] %vm347, %v2449
        %2483 = vst.msk [vmem:[%s2477 + $0x39] sm:$0xff] %vm347, %v2450
        %2484 = vst.msk [vmem:[%s2477 + $0x49] sm:$0xff] %vm347, %v2451
        %2485 = vst.msk [vmem:[%s2477 + $0x51] sm:$0xff] %vm347, %v2452
        %2486 = vst.msk [vmem:[%s2477 + $0x61] sm:$0xff] %vm347, %v2453
        %2487 = vst.msk [vmem:[%s2477 + $0x69] sm:$0xff] %vm347, %v2454
        %2488 = vst.msk [vmem:[%s2477 + $0x79] sm:$0xff] %vm347, %v2455
        %2489 = vst.msk [vmem:[%s2477 + $0x81] sm:$0xff] %vm347, %v2456
        %2490 = vst.msk [vmem:[%s2477 + $0x91] sm:$0xff] %vm347, %v2457
        %2491 = vst.msk [vmem:[%s2477 + $0x99] sm:$0xff] %vm347, %v2458
        %2492 = vst.msk [vmem:[%s2477 + $0xa9] sm:$0xff] %vm347, %v2459
        %2493 = vst.msk [vmem:[%s2477 + $0xb1] sm:$0xff] %vm347, %v2460
        %2494 = vst.msk [vmem:[%s2477 + $0xc1] sm:$0xff] %vm347, %v2461
        %2495 = vst.msk [vmem:[%s2477 + $0xc9] sm:$0xff] %vm347, %v2462
        %2496 = vst.msk [vmem:[%s2477 + $0xd9] sm:$0xff] %vm347, %v2463
        %2497 = vst.msk [vmem:[%s2477 + $0xe1] sm:$0xff] %vm347, %v2464
        %2498 = vst.msk [vmem:[%s2477 + $0xf1] sm:$0xff] %vm347, %v2465
        %2499 = vst.msk [vmem:[%s2477 + $0xf9] sm:$0xff] %vm347, %v2466
        %2500 = vst.msk [vmem:[%s2477 + $0x109] sm:$0xff] %vm347, %v2467
        %2501 = vst.msk [vmem:[%s2477 + $0x111] sm:$0xff] %vm347, %v2468
        %2502 = vst.msk [vmem:[%s2477 + $0x121] sm:$0xff] %vm347, %v2469
        %2503 = vst.msk [vmem:[%s2477 + $0x129] sm:$0xff] %vm347, %v2470
        %2504 = vst.msk [vmem:[%s2477 + $0x139] sm:$0xff] %vm347, %v2471
        %2505 = vst.msk [vmem:[%s2477 + $0x141] sm:$0xff] %vm347, %v2472
        %2506 = vst.msk [vmem:[%s2477 + $0x151] sm:$0xff] %vm347, %v2473
        %2507 = vst.msk [vmem:[%s2477 + $0x159] sm:$0xff] %vm347, %v2474
        %2508 = vst.msk [vmem:[%s2477 + $0x169] sm:$0xff] %vm347, %v2475
        %2509 = vst.msk [vmem:[%s2477 + $0x171] sm:$0xff] %vm347, %v2476
        %v2510 = vld [vmem:[#allocation4] sm:$0xff]
        %v2511 = vld [vmem:[#allocation4 + $0x8] sm:$0xff]
        %v2512 = vld [vmem:[#allocation4 + $0x18] sm:$0xff]
        %v2513 = vld [vmem:[#allocation4 + $0x20] sm:$0xff]
        %v2514 = vld [vmem:[#allocation4 + $0x30] sm:$0xff]
        %v2515 = vld [vmem:[#allocation4 + $0x38] sm:$0xff]
        %v2516 = vld [vmem:[#allocation4 + $0x48] sm:$0xff]
        %v2517 = vld [vmem:[#allocation4 + $0x50] sm:$0xff]
        %v2518 = vld [vmem:[#allocation4 + $0x60] sm:$0xff]
        %v2519 = vld [vmem:[#allocation4 + $0x68] sm:$0xff]
        %v2520 = vld [vmem:[#allocation4 + $0x78] sm:$0xff]
        %v2521 = vld [vmem:[#allocation4 + $0x80] sm:$0xff]
        %v2522 = vld [vmem:[#allocation4 + $0x90] sm:$0xff]
        %v2523 = vld [vmem:[#allocation4 + $0x98] sm:$0xff]
        %v2524 = vld [vmem:[#allocation4 + $0xa8] sm:$0xff]
        %v2525 = vld [vmem:[#allocation4 + $0xb0] sm:$0xff]
        %v2526 = vld [vmem:[#allocation4 + $0xc0] sm:$0xff]
        %v2527 = vld [vmem:[#allocation4 + $0xc8] sm:$0xff]
        %v2528 = vld [vmem:[#allocation4 + $0xd8] sm:$0xff]
        %v2529 = vld [vmem:[#allocation4 + $0xe0] sm:$0xff]
        %v2530 = vld [vmem:[#allocation4 + $0xf0] sm:$0xff]
        %v2531 = vld [vmem:[#allocation4 + $0xf8] sm:$0xff]
        %v2532 = vld [vmem:[#allocation4 + $0x108] sm:$0xff]
        %v2533 = vld [vmem:[#allocation4 + $0x110] sm:$0xff]
        %v2534 = vld [vmem:[#allocation4 + $0x120] sm:$0xff]
        %v2535 = vld [vmem:[#allocation4 + $0x128] sm:$0xff]
        %v2536 = vld [vmem:[#allocation4 + $0x138] sm:$0xff]
        %v2537 = vld [vmem:[#allocation4 + $0x140] sm:$0xff]
        %v2538 = vld [vmem:[#allocation4 + $0x150] sm:$0xff]
        %v2539 = vld [vmem:[#allocation4 + $0x158] sm:$0xff]
        %v2540 = vld [vmem:[#allocation4 + $0x168] sm:$0xff]
        %v2541 = vld [vmem:[#allocation4 + $0x170] sm:$0xff]
        %v2542 = vld [vmem:[#allocation4 + $0x1] sm:$0xff]
        %v2543 = vld [vmem:[#allocation4 + $0x9] sm:$0xff]
        %v2544 = vld [vmem:[#allocation4 + $0x19] sm:$0xff]
        %v2545 = vld [vmem:[#allocation4 + $0x21] sm:$0xff]
        %v2546 = vld [vmem:[#allocation4 + $0x31] sm:$0xff]
        %v2547 = vld [vmem:[#allocation4 + $0x39] sm:$0xff]
        %v2548 = vld [vmem:[#allocation4 + $0x49] sm:$0xff]
        %v2549 = vld [vmem:[#allocation4 + $0x51] sm:$0xff]
        %v2550 = vld [vmem:[#allocation4 + $0x61] sm:$0xff]
        %v2551 = vld [vmem:[#allocation4 + $0x69] sm:$0xff]
        %v2552 = vld [vmem:[#allocation4 + $0x79] sm:$0xff]
        %v2553 = vld [vmem:[#allocation4 + $0x81] sm:$0xff]
        %v2554 = vld [vmem:[#allocation4 + $0x91] sm:$0xff]
        %v2555 = vld [vmem:[#allocation4 + $0x99] sm:$0xff]
        %v2556 = vld [vmem:[#allocation4 + $0xa9] sm:$0xff]
        %v2557 = vld [vmem:[#allocation4 + $0xb1] sm:$0xff]
        %v2558 = vld [vmem:[#allocation4 + $0xc1] sm:$0xff]
        %v2559 = vld [vmem:[#allocation4 + $0xc9] sm:$0xff]
        %v2560 = vld [vmem:[#allocation4 + $0xd9] sm:$0xff]
        %v2561 = vld [vmem:[#allocation4 + $0xe1] sm:$0xff]
        %v2562 = vld [vmem:[#allocation4 + $0xf1] sm:$0xff]
        %v2563 = vld [vmem:[#allocation4 + $0xf9] sm:$0xff]
        %v2564 = vld [vmem:[#allocation4 + $0x109] sm:$0xff]
        %v2565 = vld [vmem:[#allocation4 + $0x111] sm:$0xff]
        %v2566 = vld [vmem:[#allocation4 + $0x121] sm:$0xff]
        %v2567 = vld [vmem:[#allocation4 + $0x129] sm:$0xff]
        %v2568 = vld [vmem:[#allocation4 + $0x139] sm:$0xff]
        %v2569 = vld [vmem:[#allocation4 + $0x141] sm:$0xff]
        %v2570 = vld [vmem:[#allocation4 + $0x151] sm:$0xff]
        %v2571 = vld [vmem:[#allocation4 + $0x159] sm:$0xff]
        %v2572 = vld [vmem:[#allocation4 + $0x169] sm:$0xff]
        %v2573 = vld [vmem:[#allocation4 + $0x171] sm:$0xff]
        %v2574 = vld [vmem:[%s2477] sm:$0xff]
        %v2575 = vld [vmem:[%s2477 + $0x8] sm:$0xff]
        %v2576 = vld [vmem:[%s2477 + $0x18] sm:$0xff]
        %v2577 = vld [vmem:[%s2477 + $0x20] sm:$0xff]
        %v2578 = vld [vmem:[%s2477 + $0x30] sm:$0xff]
        %v2579 = vld [vmem:[%s2477 + $0x38] sm:$0xff]
        %v2580 = vld [vmem:[%s2477 + $0x48] sm:$0xff]
        %v2581 = vld [vmem:[%s2477 + $0x50] sm:$0xff]
        %v2582 = vld [vmem:[%s2477 + $0x60] sm:$0xff]
        %v2583 = vld [vmem:[%s2477 + $0x68] sm:$0xff]
        %v2584 = vld [vmem:[%s2477 + $0x78] sm:$0xff]
        %v2585 = vld [vmem:[%s2477 + $0x80] sm:$0xff]
        %v2586 = vld [vmem:[%s2477 + $0x90] sm:$0xff]
        %v2587 = vld [vmem:[%s2477 + $0x98] sm:$0xff]
        %v2588 = vld [vmem:[%s2477 + $0xa8] sm:$0xff]
        %v2589 = vld [vmem:[%s2477 + $0xb0] sm:$0xff]
        %v2590 = vld [vmem:[%s2477 + $0xc0] sm:$0xff]
        %v2591 = vld [vmem:[%s2477 + $0xc8] sm:$0xff]
        %v2592 = vld [vmem:[%s2477 + $0xd8] sm:$0xff]
        %v2593 = vld [vmem:[%s2477 + $0xe0] sm:$0xff]
        %v2594 = vld [vmem:[%s2477 + $0xf0] sm:$0xff]
        %v2595 = vld [vmem:[%s2477 + $0xf8] sm:$0xff]
        %v2596 = vld [vmem:[%s2477 + $0x108] sm:$0xff]
        %v2597 = vld [vmem:[%s2477 + $0x110] sm:$0xff]
        %v2598 = vld [vmem:[%s2477 + $0x120] sm:$0xff]
        %v2599 = vld [vmem:[%s2477 + $0x128] sm:$0xff]
        %v2600 = vld [vmem:[%s2477 + $0x138] sm:$0xff]
        %v2601 = vld [vmem:[%s2477 + $0x140] sm:$0xff]
        %v2602 = vld [vmem:[%s2477 + $0x150] sm:$0xff]
        %v2603 = vld [vmem:[%s2477 + $0x158] sm:$0xff]
        %v2604 = vld [vmem:[%s2477 + $0x168] sm:$0xff]
        %v2605 = vld [vmem:[%s2477 + $0x170] sm:$0xff]
        %v2606 = vld [vmem:[%s2477 + $0x1] sm:$0xff]
        %v2607 = vld [vmem:[%s2477 + $0x9] sm:$0xff]
        %v2608 = vld [vmem:[%s2477 + $0x19] sm:$0xff]
        %v2609 = vld [vmem:[%s2477 + $0x21] sm:$0xff]
        %v2610 = vld [vmem:[%s2477 + $0x31] sm:$0xff]
        %v2611 = vld [vmem:[%s2477 + $0x39] sm:$0xff]
        %v2612 = vld [vmem:[%s2477 + $0x49] sm:$0xff]
        %v2613 = vld [vmem:[%s2477 + $0x51] sm:$0xff]
        %v2614 = vld [vmem:[%s2477 + $0x61] sm:$0xff]
        %v2615 = vld [vmem:[%s2477 + $0x69] sm:$0xff]
        %v2616 = vld [vmem:[%s2477 + $0x79] sm:$0xff]
        %v2617 = vld [vmem:[%s2477 + $0x81] sm:$0xff]
        %v2618 = vld [vmem:[%s2477 + $0x91] sm:$0xff]
        %v2619 = vld [vmem:[%s2477 + $0x99] sm:$0xff]
        %v2620 = vld [vmem:[%s2477 + $0xa9] sm:$0xff]
        %v2621 = vld [vmem:[%s2477 + $0xb1] sm:$0xff]
        %v2622 = vld [vmem:[%s2477 + $0xc1] sm:$0xff]
        %v2623 = vld [vmem:[%s2477 + $0xc9] sm:$0xff]
        %v2624 = vld [vmem:[%s2477 + $0xd9] sm:$0xff]
        %v2625 = vld [vmem:[%s2477 + $0xe1] sm:$0xff]
        %v2626 = vld [vmem:[%s2477 + $0xf1] sm:$0xff]
        %v2627 = vld [vmem:[%s2477 + $0xf9] sm:$0xff]
        %v2628 = vld [vmem:[%s2477 + $0x109] sm:$0xff]
        %v2629 = vld [vmem:[%s2477 + $0x111] sm:$0xff]
        %v2630 = vld [vmem:[%s2477 + $0x121] sm:$0xff]
        %v2631 = vld [vmem:[%s2477 + $0x129] sm:$0xff]
        %v2632 = vld [vmem:[%s2477 + $0x139] sm:$0xff]
        %v2633 = vld [vmem:[%s2477 + $0x141] sm:$0xff]
        %v2634 = vld [vmem:[%s2477 + $0x151] sm:$0xff]
        %v2635 = vld [vmem:[%s2477 + $0x159] sm:$0xff]
        %v2636 = vld [vmem:[%s2477 + $0x169] sm:$0xff]
        %v2637 = vld [vmem:[%s2477 + $0x171] sm:$0xff]
        %2670 = vrot.lane.b32.xlu0 %v2542, 64
        %v2671 = vpop.permute.xlu0 %2670
        %2672 = vrot.lane.b32.xlu0 %v2543, 64
        %v2673 = vpop.permute.xlu0 %2672
        %2674 = vrot.lane.b32.xlu0 %v2544, 64
        %v2675 = vpop.permute.xlu0 %2674
        %2676 = vrot.lane.b32.xlu0 %v2545, 64
        %v2677 = vpop.permute.xlu0 %2676
        %2678 = vrot.lane.b32.xlu0 %v2546, 64
        %v2679 = vpop.permute.xlu0 %2678
        %2680 = vrot.lane.b32.xlu0 %v2547, 64
        %v2681 = vpop.permute.xlu0 %2680
        %2682 = vrot.lane.b32.xlu0 %v2548, 64
        %v2683 = vpop.permute.xlu0 %2682
        %2684 = vrot.lane.b32.xlu0 %v2549, 64
        %v2685 = vpop.permute.xlu0 %2684
        %2686 = vrot.lane.b32.xlu0 %v2550, 64
        %v2687 = vpop.permute.xlu0 %2686
        %2688 = vrot.lane.b32.xlu0 %v2551, 64
        %v2689 = vpop.permute.xlu0 %2688
        %2690 = vrot.lane.b32.xlu0 %v2552, 64
        %v2691 = vpop.permute.xlu0 %2690
        %2692 = vrot.lane.b32.xlu0 %v2553, 64
        %v2693 = vpop.permute.xlu0 %2692
        %2694 = vrot.lane.b32.xlu0 %v2554, 64
        %v2695 = vpop.permute.xlu0 %2694
        %2696 = vrot.lane.b32.xlu0 %v2555, 64
        %v2697 = vpop.permute.xlu0 %2696
        %2698 = vrot.lane.b32.xlu0 %v2556, 64
        %v2699 = vpop.permute.xlu0 %2698
        %2700 = vrot.lane.b32.xlu0 %v2557, 64
        %v2701 = vpop.permute.xlu0 %2700
        %2702 = vrot.lane.b32.xlu0 %v2558, 64
        %v2703 = vpop.permute.xlu0 %2702
        %2704 = vrot.lane.b32.xlu0 %v2559, 64
        %v2705 = vpop.permute.xlu0 %2704
        %2706 = vrot.lane.b32.xlu0 %v2560, 64
        %v2707 = vpop.permute.xlu0 %2706
        %2708 = vrot.lane.b32.xlu0 %v2561, 64
        %v2709 = vpop.permute.xlu0 %2708
        %2710 = vrot.lane.b32.xlu0 %v2562, 64
        %v2711 = vpop.permute.xlu0 %2710
        %2712 = vrot.lane.b32.xlu0 %v2563, 64
        %v2713 = vpop.permute.xlu0 %2712
        %2714 = vrot.lane.b32.xlu0 %v2564, 64
        %v2715 = vpop.permute.xlu0 %2714
        %2716 = vrot.lane.b32.xlu0 %v2565, 64
        %v2717 = vpop.permute.xlu0 %2716
        %2718 = vrot.lane.b32.xlu0 %v2566, 64
        %v2719 = vpop.permute.xlu0 %2718
        %2720 = vrot.lane.b32.xlu0 %v2567, 64
        %v2721 = vpop.permute.xlu0 %2720
        %2722 = vrot.lane.b32.xlu0 %v2568, 64
        %v2723 = vpop.permute.xlu0 %2722
        %2724 = vrot.lane.b32.xlu0 %v2569, 64
        %v2725 = vpop.permute.xlu0 %2724
        %2726 = vrot.lane.b32.xlu0 %v2570, 64
        %v2727 = vpop.permute.xlu0 %2726
        %2728 = vrot.lane.b32.xlu0 %v2571, 64
        %v2729 = vpop.permute.xlu0 %2728
        %2730 = vrot.lane.b32.xlu0 %v2572, 64
        %v2731 = vpop.permute.xlu0 %2730
        %2732 = vrot.lane.b32.xlu0 %v2573, 64
        %v2733 = vpop.permute.xlu0 %2732
        %2798 = vrot.lane.b32.xlu0 %v2606, 64
        %v2799 = vpop.permute.xlu0 %2798
        %2800 = vrot.lane.b32.xlu0 %v2607, 64
        %v2801 = vpop.permute.xlu0 %2800
        %2802 = vrot.lane.b32.xlu0 %v2608, 64
        %v2803 = vpop.permute.xlu0 %2802
        %2804 = vrot.lane.b32.xlu0 %v2609, 64
        %v2805 = vpop.permute.xlu0 %2804
        %2806 = vrot.lane.b32.xlu0 %v2610, 64
        %v2807 = vpop.permute.xlu0 %2806
        %2808 = vrot.lane.b32.xlu0 %v2611, 64
        %v2809 = vpop.permute.xlu0 %2808
        %2810 = vrot.lane.b32.xlu0 %v2612, 64
        %v2811 = vpop.permute.xlu0 %2810
        %2812 = vrot.lane.b32.xlu0 %v2613, 64
        %v2813 = vpop.permute.xlu0 %2812
        %2814 = vrot.lane.b32.xlu0 %v2614, 64
        %v2815 = vpop.permute.xlu0 %2814
        %2816 = vrot.lane.b32.xlu0 %v2615, 64
        %v2817 = vpop.permute.xlu0 %2816
        %2818 = vrot.lane.b32.xlu0 %v2616, 64
        %v2819 = vpop.permute.xlu0 %2818
        %2820 = vrot.lane.b32.xlu0 %v2617, 64
        %v2821 = vpop.permute.xlu0 %2820
        %2822 = vrot.lane.b32.xlu0 %v2618, 64
        %v2823 = vpop.permute.xlu0 %2822
        %2824 = vrot.lane.b32.xlu0 %v2619, 64
        %v2825 = vpop.permute.xlu0 %2824
        %2826 = vrot.lane.b32.xlu0 %v2620, 64
        %v2827 = vpop.permute.xlu0 %2826
        %2828 = vrot.lane.b32.xlu0 %v2621, 64
        %v2829 = vpop.permute.xlu0 %2828
        %2830 = vrot.lane.b32.xlu0 %v2622, 64
        %v2831 = vpop.permute.xlu0 %2830
        %2832 = vrot.lane.b32.xlu0 %v2623, 64
        %v2833 = vpop.permute.xlu0 %2832
        %2834 = vrot.lane.b32.xlu0 %v2624, 64
        %v2835 = vpop.permute.xlu0 %2834
        %2836 = vrot.lane.b32.xlu0 %v2625, 64
        %v2837 = vpop.permute.xlu0 %2836
        %2838 = vrot.lane.b32.xlu0 %v2626, 64
        %v2839 = vpop.permute.xlu0 %2838
        %2840 = vrot.lane.b32.xlu0 %v2627, 64
        %v2841 = vpop.permute.xlu0 %2840
        %2842 = vrot.lane.b32.xlu0 %v2628, 64
        %v2843 = vpop.permute.xlu0 %2842
        %2844 = vrot.lane.b32.xlu0 %v2629, 64
        %v2845 = vpop.permute.xlu0 %2844
        %2846 = vrot.lane.b32.xlu0 %v2630, 64
        %v2847 = vpop.permute.xlu0 %2846
        %2848 = vrot.lane.b32.xlu0 %v2631, 64
        %v2849 = vpop.permute.xlu0 %2848
        %2850 = vrot.lane.b32.xlu0 %v2632, 64
        %v2851 = vpop.permute.xlu0 %2850
        %2852 = vrot.lane.b32.xlu0 %v2633, 64
        %v2853 = vpop.permute.xlu0 %2852
        %2854 = vrot.lane.b32.xlu0 %v2634, 64
        %v2855 = vpop.permute.xlu0 %2854
        %2856 = vrot.lane.b32.xlu0 %v2635, 64
        %v2857 = vpop.permute.xlu0 %2856
        %2858 = vrot.lane.b32.xlu0 %v2636, 64
        %v2859 = vpop.permute.xlu0 %2858
        %2860 = vrot.lane.b32.xlu0 %v2637, 64
        %v2861 = vpop.permute.xlu0 %2860
        %v2894 = vsel %vm347, %v2510, %v2671
        %v2895 = vsel %vm347, %v2511, %v2673
        %v2896 = vsel %vm347, %v2512, %v2675
        %v2897 = vsel %vm347, %v2513, %v2677
        %v2898 = vsel %vm347, %v2514, %v2679
        %v2899 = vsel %vm347, %v2515, %v2681
        %v2900 = vsel %vm347, %v2516, %v2683
        %v2901 = vsel %vm347, %v2517, %v2685
        %v2902 = vsel %vm347, %v2518, %v2687
        %v2903 = vsel %vm347, %v2519, %v2689
        %v2904 = vsel %vm347, %v2520, %v2691
        %v2905 = vsel %vm347, %v2521, %v2693
        %v2906 = vsel %vm347, %v2522, %v2695
        %v2907 = vsel %vm347, %v2523, %v2697
        %v2908 = vsel %vm347, %v2524, %v2699
        %v2909 = vsel %vm347, %v2525, %v2701
        %v2910 = vsel %vm347, %v2526, %v2703
        %v2911 = vsel %vm347, %v2527, %v2705
        %v2912 = vsel %vm347, %v2528, %v2707
        %v2913 = vsel %vm347, %v2529, %v2709
        %v2914 = vsel %vm347, %v2530, %v2711
        %v2915 = vsel %vm347, %v2531, %v2713
        %v2916 = vsel %vm347, %v2532, %v2715
        %v2917 = vsel %vm347, %v2533, %v2717
        %v2918 = vsel %vm347, %v2534, %v2719
        %v2919 = vsel %vm347, %v2535, %v2721
        %v2920 = vsel %vm347, %v2536, %v2723
        %v2921 = vsel %vm347, %v2537, %v2725
        %v2922 = vsel %vm347, %v2538, %v2727
        %v2923 = vsel %vm347, %v2539, %v2729
        %v2924 = vsel %vm347, %v2540, %v2731
        %v2925 = vsel %vm347, %v2541, %v2733
        %v2926 = vsel %vm347, %v2574, %v2799
        %v2927 = vsel %vm347, %v2575, %v2801
        %v2928 = vsel %vm347, %v2576, %v2803
        %v2929 = vsel %vm347, %v2577, %v2805
        %v2930 = vsel %vm347, %v2578, %v2807
        %v2931 = vsel %vm347, %v2579, %v2809
        %v2932 = vsel %vm347, %v2580, %v2811
        %v2933 = vsel %vm347, %v2581, %v2813
        %v2934 = vsel %vm347, %v2582, %v2815
        %v2935 = vsel %vm347, %v2583, %v2817
        %v2936 = vsel %vm347, %v2584, %v2819
        %v2937 = vsel %vm347, %v2585, %v2821
        %v2938 = vsel %vm347, %v2586, %v2823
        %v2939 = vsel %vm347, %v2587, %v2825
        %v2940 = vsel %vm347, %v2588, %v2827
        %v2941 = vsel %vm347, %v2589, %v2829
        %v2942 = vsel %vm347, %v2590, %v2831
        %v2943 = vsel %vm347, %v2591, %v2833
        %v2944 = vsel %vm347, %v2592, %v2835
        %v2945 = vsel %vm347, %v2593, %v2837
        %v2946 = vsel %vm347, %v2594, %v2839
        %v2947 = vsel %vm347, %v2595, %v2841
        %v2948 = vsel %vm347, %v2596, %v2843
        %v2949 = vsel %vm347, %v2597, %v2845
        %v2950 = vsel %vm347, %v2598, %v2847
        %v2951 = vsel %vm347, %v2599, %v2849
        %v2952 = vsel %vm347, %v2600, %v2851
        %v2953 = vsel %vm347, %v2601, %v2853
        %v2954 = vsel %vm347, %v2602, %v2855
        %v2955 = vsel %vm347, %v2603, %v2857
        %v2956 = vsel %vm347, %v2604, %v2859
        %v2957 = vsel %vm347, %v2605, %v2861
        %s2958 = scalar_lea.vmem [#allocation5], 256
        %v2959 = vld [vmem:[%s2958] sm:$0xff]
        %v2960 = vld [vmem:[%s2958 + $0x8] sm:$0xff]
        %v2961 = vld [vmem:[%s2958 + $0x10] sm:$0xff]
        %v2962 = vld [vmem:[%s2958 + $0x18] sm:$0xff]
        %v2963 = vld [vmem:[%s2958 + $0x20] sm:$0xff]
        %v2964 = vld [vmem:[%s2958 + $0x28] sm:$0xff]
        %v2965 = vld [vmem:[%s2958 + $0x30] sm:$0xff]
        %v2966 = vld [vmem:[%s2958 + $0x38] sm:$0xff]
        %v2967 = vld [vmem:[%s2958 + $0x40] sm:$0xff]
        %v2968 = vld [vmem:[%s2958 + $0x48] sm:$0xff]
        %v2969 = vld [vmem:[%s2958 + $0x50] sm:$0xff]
        %v2970 = vld [vmem:[%s2958 + $0x58] sm:$0xff]
        %v2971 = vld [vmem:[%s2958 + $0x60] sm:$0xff]
        %v2972 = vld [vmem:[%s2958 + $0x68] sm:$0xff]
        %v2973 = vld [vmem:[%s2958 + $0x70] sm:$0xff]
        %v2974 = vld [vmem:[%s2958 + $0x78] sm:$0xff]
        %v2975 = vld [vmem:[%s2958 + $0x80] sm:$0xff]
        %v2976 = vld [vmem:[%s2958 + $0x88] sm:$0xff]
        %v2977 = vld [vmem:[%s2958 + $0x90] sm:$0xff]
        %v2978 = vld [vmem:[%s2958 + $0x98] sm:$0xff]
        %v2979 = vld [vmem:[%s2958 + $0xa0] sm:$0xff]
        %v2980 = vld [vmem:[%s2958 + $0xa8] sm:$0xff]
        %v2981 = vld [vmem:[%s2958 + $0xb0] sm:$0xff]
        %v2982 = vld [vmem:[%s2958 + $0xb8] sm:$0xff]
        %v2983 = vld [vmem:[%s2958 + $0xc0] sm:$0xff]
        %v2984 = vld [vmem:[%s2958 + $0xc8] sm:$0xff]
        %v2985 = vld [vmem:[%s2958 + $0xd0] sm:$0xff]
        %v2986 = vld [vmem:[%s2958 + $0xd8] sm:$0xff]
        %v2987 = vld [vmem:[%s2958 + $0xe0] sm:$0xff]
        %v2988 = vld [vmem:[%s2958 + $0xe8] sm:$0xff]
        %v2989 = vld [vmem:[%s2958 + $0xf0] sm:$0xff]
        %v2990 = vld [vmem:[%s2958 + $0xf8] sm:$0xff]
        %2991 = vmatprep.subr.mxu0 0.0
        %2992 = vmatpush1.msra.mxu0 %v2959
        %2993 = vmatprep.subr.mxu0 0.0
        %2994 = vmatpush1.msra.mxu0 %v2960
        %2995 = vmatprep.subr.mxu0 0.0
        %2996 = vmatpush1.msra.mxu0 %v2961
        %2997 = vmatprep.subr.mxu0 0.0
        %2998 = vmatpush1.msra.mxu0 %v2962
        %2999 = vmatprep.subr.mxu0 0.0
        %3000 = vmatpush1.msra.mxu0 %v2963
        %3001 = vmatprep.subr.mxu0 0.0
        %3002 = vmatpush1.msra.mxu0 %v2964
        %3003 = vmatprep.subr.mxu0 0.0
        %3004 = vmatpush1.msra.mxu0 %v2965
        %3005 = vmatprep.subr.mxu0 0.0
        %3006 = vmatpush1.msra.mxu0 %v2966
        %3007 = vmatprep.subr.mxu0 0.0
        %3008 = vmatpush1.msra.mxu0 %v2967
        %3009 = vmatprep.subr.mxu0 0.0
        %3010 = vmatpush1.msra.mxu0 %v2968
        %3011 = vmatprep.subr.mxu0 0.0
        %3012 = vmatpush1.msra.mxu0 %v2969
        %3013 = vmatprep.subr.mxu0 0.0
        %3014 = vmatpush1.msra.mxu0 %v2970
        %3015 = vmatprep.subr.mxu0 0.0
        %3016 = vmatpush1.msra.mxu0 %v2971
        %3017 = vmatprep.subr.mxu0 0.0
        %3018 = vmatpush1.msra.mxu0 %v2972
        %3019 = vmatprep.subr.mxu0 0.0
        %3020 = vmatpush1.msra.mxu0 %v2973
        %3021 = vmatprep.subr.mxu0 0.0
        %3022 = vmatpush1.msra.mxu0 %v2974
        %3023 = vmatprep.subr.mxu0 0.0
        %3024 = vmatpush1.msra.mxu0 %v2975
        %3025 = vmatprep.subr.mxu0 0.0
        %3026 = vmatpush1.msra.mxu0 %v2976
        %3027 = vmatprep.subr.mxu0 0.0
        %3028 = vmatpush1.msra.mxu0 %v2977
        %3029 = vmatprep.subr.mxu0 0.0
        %3030 = vmatpush1.msra.mxu0 %v2978
        %3031 = vmatprep.subr.mxu0 0.0
        %3032 = vmatpush1.msra.mxu0 %v2979
        %3033 = vmatprep.subr.mxu0 0.0
        %3034 = vmatpush1.msra.mxu0 %v2980
        %3035 = vmatprep.subr.mxu0 0.0
        %3036 = vmatpush1.msra.mxu0 %v2981
        %3037 = vmatprep.subr.mxu0 0.0
        %3038 = vmatpush1.msra.mxu0 %v2982
        %3039 = vmatprep.subr.mxu0 0.0
        %3040 = vmatpush1.msra.mxu0 %v2983
        %3041 = vmatprep.subr.mxu0 0.0
        %3042 = vmatpush1.msra.mxu0 %v2984
        %3043 = vmatprep.subr.mxu0 0.0
        %3044 = vmatpush1.msra.mxu0 %v2985
        %3045 = vmatprep.subr.mxu0 0.0
        %3046 = vmatpush1.msra.mxu0 %v2986
        %3047 = vmatprep.subr.mxu0 0.0
        %3048 = vmatpush1.msra.mxu0 %v2987
        %3049 = vmatprep.subr.mxu0 0.0
        %3050 = vmatpush1.msra.mxu0 %v2988
        %3051 = vmatprep.subr.mxu0 0.0
        %3052 = vmatpush1.msra.mxu0 %v2989
        %3053 = vmatprep.subr.mxu0 0.0
        %3054 = vmatpush1.msra.mxu0 %v2990
        %3055 = vmatprep.mubr.f32.mxu0 %v2926
        %3056 = vmatmul.mubr.f32.gmra.mrb[0].mxu0 %v2894
        %v3057 = vpop.f32.mrb[0].mxu0
        %v3058 = vadd.f32 0.0, %v3057
        %v3059 = vpop.f32.mrb[0].mxu0
        %3060 = vmatprep.mubr.f32.mxu0 %v2927
        %3061 = vmatmul.mubr.f32.gmra.mrb[0].mxu0 %v2895
        %v3062 = vpop.f32.mrb[0].mxu0
        %v3063 = vadd.f32 0.0, %v3062
        %v3064 = vpop.f32.mrb[0].mxu0
        %3065 = vmatprep.mubr.f32.mxu0 %v2928
        %3066 = vmatmul.mubr.f32.gmra.mrb[0].mxu0 %v2896
        %v3067 = vpop.f32.mrb[0].mxu0
        %v3068 = vadd.f32 0.0, %v3067
        %v3069 = vpop.f32.mrb[0].mxu0
        %3070 = vmatprep.mubr.f32.mxu0 %v2929
        %3071 = vmatmul.mubr.f32.gmra.mrb[0].mxu0 %v2897
        %v3072 = vpop.f32.mrb[0].mxu0
        %v3073 = vadd.f32 0.0, %v3072
        %v3074 = vpop.f32.mrb[0].mxu0
        %3075 = vmatprep.mubr.f32.mxu0 %v2930
        %3076 = vmatmul.mubr.f32.gmra.mrb[0].mxu0 %v2898
        %v3077 = vpop.f32.mrb[0].mxu0
        %v3078 = vadd.f32 0.0, %v3077
        %v3079 = vpop.f32.mrb[0].mxu0
        %3080 = vmatprep.mubr.f32.mxu0 %v2931
        %3081 = vmatmul.mubr.f32.gmra.mrb[0].mxu0 %v2899
        %v3082 = vpop.f32.mrb[0].mxu0
        %v3083 = vadd.f32 0.0, %v3082
        %v3084 = vpop.f32.mrb[0].mxu0
        %3085 = vmatprep.mubr.f32.mxu0 %v2932
        %3086 = vmatmul.mubr.f32.gmra.mrb[0].mxu0 %v2900
        %v3087 = vpop.f32.mrb[0].mxu0
        %v3088 = vadd.f32 0.0, %v3087
        %v3089 = vpop.f32.mrb[0].mxu0
        %3090 = vmatprep.mubr.f32.mxu0 %v2933
        %3091 = vmatmul.mubr.f32.gmra.mrb[0].mxu0 %v2901
        %v3092 = vpop.f32.mrb[0].mxu0
        %v3093 = vadd.f32 0.0, %v3092
        %v3094 = vpop.f32.mrb[0].mxu0
        %3095 = vmatprep.mubr.f32.mxu0 %v2934
        %3096 = vmatmul.mubr.f32.gmra.mrb[0].mxu0 %v2902
        %v3097 = vpop.f32.mrb[0].mxu0
        %v3098 = vadd.f32 0.0, %v3097
        %v3099 = vpop.f32.mrb[0].mxu0
        %3100 = vmatprep.mubr.f32.mxu0 %v2935
        %3101 = vmatmul.mubr.f32.gmra.mrb[0].mxu0 %v2903
        %v3102 = vpop.f32.mrb[0].mxu0
        %v3103 = vadd.f32 0.0, %v3102
        %v3104 = vpop.f32.mrb[0].mxu0
        %3105 = vmatprep.mubr.f32.mxu0 %v2936
        %3106 = vmatmul.mubr.f32.gmra.mrb[0].mxu0 %v2904
        %v3107 = vpop.f32.mrb[0].mxu0
        %v3108 = vadd.f32 0.0, %v3107
        %v3109 = vpop.f32.mrb[0].mxu0
        %3110 = vmatprep.mubr.f32.mxu0 %v2937
        %3111 = vmatmul.mubr.f32.gmra.mrb[0].mxu0 %v2905
        %v3112 = vpop.f32.mrb[0].mxu0
        %v3113 = vadd.f32 0.0, %v3112
        %v3114 = vpop.f32.mrb[0].mxu0
        %3115 = vmatprep.mubr.f32.mxu0 %v2938
        %3116 = vmatmul.mubr.f32.gmra.mrb[0].mxu0 %v2906
        %v3117 = vpop.f32.mrb[0].mxu0
        %v3118 = vadd.f32 0.0, %v3117
        %v3119 = vpop.f32.mrb[0].mxu0
        %3120 = vmatprep.mubr.f32.mxu0 %v2939
        %3121 = vmatmul.mubr.f32.gmra.mrb[0].mxu0 %v2907
        %v3122 = vpop.f32.mrb[0].mxu0
        %v3123 = vadd.f32 0.0, %v3122
        %v3124 = vpop.f32.mrb[0].mxu0
        %3125 = vmatprep.mubr.f32.mxu0 %v2940
        %3126 = vmatmul.mubr.f32.gmra.mrb[0].mxu0 %v2908
        %v3127 = vpop.f32.mrb[0].mxu0
        %v3128 = vadd.f32 0.0, %v3127
        %v3129 = vpop.f32.mrb[0].mxu0
        %3130 = vmatprep.mubr.f32.mxu0 %v2941
        %3131 = vmatmul.mubr.f32.gmra.mrb[0].mxu0 %v2909
        %v3132 = vpop.f32.mrb[0].mxu0
        %v3133 = vadd.f32 0.0, %v3132
        %v3134 = vpop.f32.mrb[0].mxu0
        %3135 = vmatprep.mubr.f32.mxu0 %v2942
        %3136 = vmatmul.mubr.f32.gmra.mrb[0].mxu0 %v2910
        %v3137 = vpop.f32.mrb[0].mxu0
        %v3138 = vadd.f32 0.0, %v3137
        %v3139 = vpop.f32.mrb[0].mxu0
        %3140 = vmatprep.mubr.f32.mxu0 %v2943
        %3141 = vmatmul.mubr.f32.gmra.mrb[0].mxu0 %v2911
        %v3142 = vpop.f32.mrb[0].mxu0
        %v3143 = vadd.f32 0.0, %v3142
        %v3144 = vpop.f32.mrb[0].mxu0
        %3145 = vmatprep.mubr.f32.mxu0 %v2944
        %3146 = vmatmul.mubr.f32.gmra.mrb[0].mxu0 %v2912
        %v3147 = vpop.f32.mrb[0].mxu0
        %v3148 = vadd.f32 0.0, %v3147
        %v3149 = vpop.f32.mrb[0].mxu0
        %3150 = vmatprep.mubr.f32.mxu0 %v2945
        %3151 = vmatmul.mubr.f32.gmra.mrb[0].mxu0 %v2913
        %v3152 = vpop.f32.mrb[0].mxu0
        %v3153 = vadd.f32 0.0, %v3152
        %v3154 = vpop.f32.mrb[0].mxu0
        %3155 = vmatprep.mubr.f32.mxu0 %v2946
        %3156 = vmatmul.mubr.f32.gmra.mrb[0].mxu0 %v2914
        %v3157 = vpop.f32.mrb[0].mxu0
        %v3158 = vadd.f32 0.0, %v3157
        %v3159 = vpop.f32.mrb[0].mxu0
        %3160 = vmatprep.mubr.f32.mxu0 %v2947
        %3161 = vmatmul.mubr.f32.gmra.mrb[0].mxu0 %v2915
        %v3162 = vpop.f32.mrb[0].mxu0
        %v3163 = vadd.f32 0.0, %v3162
        %v3164 = vpop.f32.mrb[0].mxu0
        %3165 = vmatprep.mubr.f32.mxu0 %v2948
        %3166 = vmatmul.mubr.f32.gmra.mrb[0].mxu0 %v2916
        %v3167 = vpop.f32.mrb[0].mxu0
        %v3168 = vadd.f32 0.0, %v3167
        %v3169 = vpop.f32.mrb[0].mxu0
        %3170 = vmatprep.mubr.f32.mxu0 %v2949
        %3171 = vmatmul.mubr.f32.gmra.mrb[0].mxu0 %v2917
        %v3172 = vpop.f32.mrb[0].mxu0
        %v3173 = vadd.f32 0.0, %v3172
        %v3174 = vpop.f32.mrb[0].mxu0
        %3175 = vmatprep.mubr.f32.mxu0 %v2950
        %3176 = vmatmul.mubr.f32.gmra.mrb[0].mxu0 %v2918
        %v3177 = vpop.f32.mrb[0].mxu0
        %v3178 = vadd.f32 0.0, %v3177
        %v3179 = vpop.f32.mrb[0].mxu0
        %3180 = vmatprep.mubr.f32.mxu0 %v2951
        %3181 = vmatmul.mubr.f32.gmra.mrb[0].mxu0 %v2919
        %v3182 = vpop.f32.mrb[0].mxu0
        %v3183 = vadd.f32 0.0, %v3182
        %v3184 = vpop.f32.mrb[0].mxu0
        %3185 = vmatprep.mubr.f32.mxu0 %v2952
        %3186 = vmatmul.mubr.f32.gmra.mrb[0].mxu0 %v2920
        %v3187 = vpop.f32.mrb[0].mxu0
        %v3188 = vadd.f32 0.0, %v3187
        %v3189 = vpop.f32.mrb[0].mxu0
        %3190 = vmatprep.mubr.f32.mxu0 %v2953
        %3191 = vmatmul.mubr.f32.gmra.mrb[0].mxu0 %v2921
        %v3192 = vpop.f32.mrb[0].mxu0
        %v3193 = vadd.f32 0.0, %v3192
        %v3194 = vpop.f32.mrb[0].mxu0
        %3195 = vmatprep.mubr.f32.mxu0 %v2954
        %3196 = vmatmul.mubr.f32.gmra.mrb[0].mxu0 %v2922
        %v3197 = vpop.f32.mrb[0].mxu0
        %v3198 = vadd.f32 0.0, %v3197
        %v3199 = vpop.f32.mrb[0].mxu0
        %3200 = vmatprep.mubr.f32.mxu0 %v2955
        %3201 = vmatmul.mubr.f32.gmra.mrb[0].mxu0 %v2923
        %v3202 = vpop.f32.mrb[0].mxu0
        %v3203 = vadd.f32 0.0, %v3202
        %v3204 = vpop.f32.mrb[0].mxu0
        %3205 = vmatprep.mubr.f32.mxu0 %v2956
        %3206 = vmatmul.mubr.f32.gmra.mrb[0].mxu0 %v2924
        %v3207 = vpop.f32.mrb[0].mxu0
        %v3208 = vadd.f32 0.0, %v3207
        %v3209 = vpop.f32.mrb[0].mxu0
        %3210 = vmatprep.mubr.f32.mxu0 %v2957
        %3211 = vmatmul.mubr.f32.gmra.mrb[0].mxu0 %v2925
        %v3212 = vpop.f32.mrb[0].mxu0
        %v3213 = vadd.f32 0.0, %v3212
        %v3214 = vpop.f32.mrb[0].mxu0
        %3215 = vdwg.mxu0
        %s3216 = scalar_lea.vmem %s4, 1
        %v3217 = vld [vmem:[%s3216] sm:$0x1]
        %v3219 = vlaneseq
        %v3220 = vshrl.u32 %v3219, 7
        %v3221 = vsub.s32 0, %v3220
        %v3222 = vrot.slane %v3217, %v3221
        %v3224 = vmul.f32 %v3058, %v3222
        %v3225 = vmul.f32 %v3063, %v3222
        %v3226 = vmul.f32 %v3068, %v3222
        %v3227 = vmul.f32 %v3073, %v3222
        %v3228 = vmul.f32 %v3078, %v3222
        %v3229 = vmul.f32 %v3083, %v3222
        %v3230 = vmul.f32 %v3088, %v3222
        %v3231 = vmul.f32 %v3093, %v3222
        %v3232 = vmul.f32 %v3098, %v3222
        %v3233 = vmul.f32 %v3103, %v3222
        %v3234 = vmul.f32 %v3108, %v3222
        %v3235 = vmul.f32 %v3113, %v3222
        %v3236 = vmul.f32 %v3118, %v3222
        %v3237 = vmul.f32 %v3123, %v3222
        %v3238 = vmul.f32 %v3128, %v3222
        %v3239 = vmul.f32 %v3133, %v3222
        %v3240 = vmul.f32 %v3138, %v3222
        %v3241 = vmul.f32 %v3143, %v3222
        %v3242 = vmul.f32 %v3148, %v3222
        %v3243 = vmul.f32 %v3153, %v3222
        %v3244 = vmul.f32 %v3158, %v3222
        %v3245 = vmul.f32 %v3163, %v3222
        %v3246 = vmul.f32 %v3168, %v3222
        %v3247 = vmul.f32 %v3173, %v3222
        %v3248 = vmul.f32 %v3178, %v3222
        %v3249 = vmul.f32 %v3183, %v3222
        %v3250 = vmul.f32 %v3188, %v3222
        %v3251 = vmul.f32 %v3193, %v3222
        %v3252 = vmul.f32 %v3198, %v3222
        %v3253 = vmul.f32 %v3203, %v3222
        %v3254 = vmul.f32 %v3208, %v3222
        %v3255 = vmul.f32 %v3213, %v3222
        %s3256 = scalar_lea.vmem %s5, 1
        %v3257 = vld [vmem:[%s3256] sm:$0x1]
        %v3259 = vlaneseq
        %v3260 = vshrl.u32 %v3259, 7
        %v3261 = vsub.s32 0, %v3260
        %v3262 = vrot.slane %v3257, %v3261
        %v3264 = vadd.f32 %v3224, %v3262
        %v3265 = vadd.f32 %v3225, %v3262
        %v3266 = vadd.f32 %v3226, %v3262
        %v3267 = vadd.f32 %v3227, %v3262
        %v3268 = vadd.f32 %v3228, %v3262
        %v3269 = vadd.f32 %v3229, %v3262
        %v3270 = vadd.f32 %v3230, %v3262
        %v3271 = vadd.f32 %v3231, %v3262
        %v3272 = vadd.f32 %v3232, %v3262
        %v3273 = vadd.f32 %v3233, %v3262
        %v3274 = vadd.f32 %v3234, %v3262
        %v3275 = vadd.f32 %v3235, %v3262
        %v3276 = vadd.f32 %v3236, %v3262
        %v3277 = vadd.f32 %v3237, %v3262
        %v3278 = vadd.f32 %v3238, %v3262
        %v3279 = vadd.f32 %v3239, %v3262
        %v3280 = vadd.f32 %v3240, %v3262
        %v3281 = vadd.f32 %v3241, %v3262
        %v3282 = vadd.f32 %v3242, %v3262
        %v3283 = vadd.f32 %v3243, %v3262
        %v3284 = vadd.f32 %v3244, %v3262
        %v3285 = vadd.f32 %v3245, %v3262
        %v3286 = vadd.f32 %v3246, %v3262
        %v3287 = vadd.f32 %v3247, %v3262
        %v3288 = vadd.f32 %v3248, %v3262
        %v3289 = vadd.f32 %v3249, %v3262
        %v3290 = vadd.f32 %v3250, %v3262
        %v3291 = vadd.f32 %v3251, %v3262
        %v3292 = vadd.f32 %v3252, %v3262
        %v3293 = vadd.f32 %v3253, %v3262
        %v3294 = vadd.f32 %v3254, %v3262
        %v3295 = vadd.f32 %v3255, %v3262
        %v3296 = vmax.f32 %v3264, 0.0
        %v3297 = vmax.f32 %v3265, 0.0
        %v3298 = vmax.f32 %v3266, 0.0
        %v3299 = vmax.f32 %v3267, 0.0
        %v3300 = vmax.f32 %v3268, 0.0
        %v3301 = vmax.f32 %v3269, 0.0
        %v3302 = vmax.f32 %v3270, 0.0
        %v3303 = vmax.f32 %v3271, 0.0
        %v3304 = vmax.f32 %v3272, 0.0
        %v3305 = vmax.f32 %v3273, 0.0
        %v3306 = vmax.f32 %v3274, 0.0
        %v3307 = vmax.f32 %v3275, 0.0
        %v3308 = vmax.f32 %v3276, 0.0
        %v3309 = vmax.f32 %v3277, 0.0
        %v3310 = vmax.f32 %v3278, 0.0
        %v3311 = vmax.f32 %v3279, 0.0
        %v3312 = vmax.f32 %v3280, 0.0
        %v3313 = vmax.f32 %v3281, 0.0
        %v3314 = vmax.f32 %v3282, 0.0
        %v3315 = vmax.f32 %v3283, 0.0
        %v3316 = vmax.f32 %v3284, 0.0
        %v3317 = vmax.f32 %v3285, 0.0
        %v3318 = vmax.f32 %v3286, 0.0
        %v3319 = vmax.f32 %v3287, 0.0
        %v3320 = vmax.f32 %v3288, 0.0
        %v3321 = vmax.f32 %v3289, 0.0
        %v3322 = vmax.f32 %v3290, 0.0
        %v3323 = vmax.f32 %v3291, 0.0
        %v3324 = vmax.f32 %v3292, 0.0
        %v3325 = vmax.f32 %v3293, 0.0
        %v3326 = vmax.f32 %v3294, 0.0
        %v3327 = vmax.f32 %v3295, 0.0
        %3328 = vst.msk [vmem:[%s1629 + $0x1] sm:$0xff] %vm347, %v3296
        %3329 = vst.msk [vmem:[%s1629 + $0x9] sm:$0xff] %vm347, %v3297
        %3330 = vst.msk [vmem:[%s1629 + $0x19] sm:$0xff] %vm347, %v3298
        %3331 = vst.msk [vmem:[%s1629 + $0x21] sm:$0xff] %vm347, %v3299
        %3332 = vst.msk [vmem:[%s1629 + $0x31] sm:$0xff] %vm347, %v3300
        %3333 = vst.msk [vmem:[%s1629 + $0x39] sm:$0xff] %vm347, %v3301
        %3334 = vst.msk [vmem:[%s1629 + $0x49] sm:$0xff] %vm347, %v3302
        %3335 = vst.msk [vmem:[%s1629 + $0x51] sm:$0xff] %vm347, %v3303
        %3336 = vst.msk [vmem:[%s1629 + $0x61] sm:$0xff] %vm347, %v3304
        %3337 = vst.msk [vmem:[%s1629 + $0x69] sm:$0xff] %vm347, %v3305
        %3338 = vst.msk [vmem:[%s1629 + $0x79] sm:$0xff] %vm347, %v3306
        %3339 = vst.msk [vmem:[%s1629 + $0x81] sm:$0xff] %vm347, %v3307
        %3340 = vst.msk [vmem:[%s1629 + $0x91] sm:$0xff] %vm347, %v3308
        %3341 = vst.msk [vmem:[%s1629 + $0x99] sm:$0xff] %vm347, %v3309
        %3342 = vst.msk [vmem:[%s1629 + $0xa9] sm:$0xff] %vm347, %v3310
        %3343 = vst.msk [vmem:[%s1629 + $0xb1] sm:$0xff] %vm347, %v3311
        %3344 = vst.msk [vmem:[%s1629 + $0xc1] sm:$0xff] %vm347, %v3312
        %3345 = vst.msk [vmem:[%s1629 + $0xc9] sm:$0xff] %vm347, %v3313
        %3346 = vst.msk [vmem:[%s1629 + $0xd9] sm:$0xff] %vm347, %v3314
        %3347 = vst.msk [vmem:[%s1629 + $0xe1] sm:$0xff] %vm347, %v3315
        %3348 = vst.msk [vmem:[%s1629 + $0xf1] sm:$0xff] %vm347, %v3316
        %3349 = vst.msk [vmem:[%s1629 + $0xf9] sm:$0xff] %vm347, %v3317
        %3350 = vst.msk [vmem:[%s1629 + $0x109] sm:$0xff] %vm347, %v3318
        %3351 = vst.msk [vmem:[%s1629 + $0x111] sm:$0xff] %vm347, %v3319
        %3352 = vst.msk [vmem:[%s1629 + $0x121] sm:$0xff] %vm347, %v3320
        %3353 = vst.msk [vmem:[%s1629 + $0x129] sm:$0xff] %vm347, %v3321
        %3354 = vst.msk [vmem:[%s1629 + $0x139] sm:$0xff] %vm347, %v3322
        %3355 = vst.msk [vmem:[%s1629 + $0x141] sm:$0xff] %vm347, %v3323
        %3356 = vst.msk [vmem:[%s1629 + $0x151] sm:$0xff] %vm347, %v3324
        %3357 = vst.msk [vmem:[%s1629 + $0x159] sm:$0xff] %vm347, %v3325
        %3358 = vst.msk [vmem:[%s1629 + $0x169] sm:$0xff] %vm347, %v3326
        %3359 = vst.msk [vmem:[%s1629 + $0x171] sm:$0xff] %vm347, %v3327
        %v3360 = vld [vmem:[#allocation3] sm:$0xff]
        %v3361 = vld [vmem:[#allocation3 + $0x8] sm:$0xff]
        %v3362 = vld [vmem:[#allocation3 + $0x18] sm:$0xff]
        %v3363 = vld [vmem:[#allocation3 + $0x20] sm:$0xff]
        %v3364 = vld [vmem:[#allocation3 + $0x30] sm:$0xff]
        %v3365 = vld [vmem:[#allocation3 + $0x38] sm:$0xff]
        %v3366 = vld [vmem:[#allocation3 + $0x48] sm:$0xff]
        %v3367 = vld [vmem:[#allocation3 + $0x50] sm:$0xff]
        %v3368 = vld [vmem:[#allocation3 + $0x60] sm:$0xff]
        %v3369 = vld [vmem:[#allocation3 + $0x68] sm:$0xff]
        %v3370 = vld [vmem:[#allocation3 + $0x78] sm:$0xff]
        %v3371 = vld [vmem:[#allocation3 + $0x80] sm:$0xff]
        %v3372 = vld [vmem:[#allocation3 + $0x90] sm:$0xff]
        %v3373 = vld [vmem:[#allocation3 + $0x98] sm:$0xff]
        %v3374 = vld [vmem:[#allocation3 + $0xa8] sm:$0xff]
        %v3375 = vld [vmem:[#allocation3 + $0xb0] sm:$0xff]
        %v3376 = vld [vmem:[#allocation3 + $0xc0] sm:$0xff]
        %v3377 = vld [vmem:[#allocation3 + $0xc8] sm:$0xff]
        %v3378 = vld [vmem:[#allocation3 + $0xd8] sm:$0xff]
        %v3379 = vld [vmem:[#allocation3 + $0xe0] sm:$0xff]
        %v3380 = vld [vmem:[#allocation3 + $0xf0] sm:$0xff]
        %v3381 = vld [vmem:[#allocation3 + $0xf8] sm:$0xff]
        %v3382 = vld [vmem:[#allocation3 + $0x108] sm:$0xff]
        %v3383 = vld [vmem:[#allocation3 + $0x110] sm:$0xff]
        %v3384 = vld [vmem:[#allocation3 + $0x120] sm:$0xff]
        %v3385 = vld [vmem:[#allocation3 + $0x128] sm:$0xff]
        %v3386 = vld [vmem:[#allocation3 + $0x138] sm:$0xff]
        %v3387 = vld [vmem:[#allocation3 + $0x140] sm:$0xff]
        %v3388 = vld [vmem:[#allocation3 + $0x150] sm:$0xff]
        %v3389 = vld [vmem:[#allocation3 + $0x158] sm:$0xff]
        %v3390 = vld [vmem:[#allocation3 + $0x168] sm:$0xff]
        %v3391 = vld [vmem:[#allocation3 + $0x170] sm:$0xff]
        %v3392 = vld [vmem:[#allocation3 + $0x1] sm:$0xff]
        %v3393 = vld [vmem:[#allocation3 + $0x9] sm:$0xff]
        %v3394 = vld [vmem:[#allocation3 + $0x19] sm:$0xff]
        %v3395 = vld [vmem:[#allocation3 + $0x21] sm:$0xff]
        %v3396 = vld [vmem:[#allocation3 + $0x31] sm:$0xff]
        %v3397 = vld [vmem:[#allocation3 + $0x39] sm:$0xff]
        %v3398 = vld [vmem:[#allocation3 + $0x49] sm:$0xff]
        %v3399 = vld [vmem:[#allocation3 + $0x51] sm:$0xff]
        %v3400 = vld [vmem:[#allocation3 + $0x61] sm:$0xff]
        %v3401 = vld [vmem:[#allocation3 + $0x69] sm:$0xff]
        %v3402 = vld [vmem:[#allocation3 + $0x79] sm:$0xff]
        %v3403 = vld [vmem:[#allocation3 + $0x81] sm:$0xff]
        %v3404 = vld [vmem:[#allocation3 + $0x91] sm:$0xff]
        %v3405 = vld [vmem:[#allocation3 + $0x99] sm:$0xff]
        %v3406 = vld [vmem:[#allocation3 + $0xa9] sm:$0xff]
        %v3407 = vld [vmem:[#allocation3 + $0xb1] sm:$0xff]
        %v3408 = vld [vmem:[#allocation3 + $0xc1] sm:$0xff]
        %v3409 = vld [vmem:[#allocation3 + $0xc9] sm:$0xff]
        %v3410 = vld [vmem:[#allocation3 + $0xd9] sm:$0xff]
        %v3411 = vld [vmem:[#allocation3 + $0xe1] sm:$0xff]
        %v3412 = vld [vmem:[#allocation3 + $0xf1] sm:$0xff]
        %v3413 = vld [vmem:[#allocation3 + $0xf9] sm:$0xff]
        %v3414 = vld [vmem:[#allocation3 + $0x109] sm:$0xff]
        %v3415 = vld [vmem:[#allocation3 + $0x111] sm:$0xff]
        %v3416 = vld [vmem:[#allocation3 + $0x121] sm:$0xff]
        %v3417 = vld [vmem:[#allocation3 + $0x129] sm:$0xff]
        %v3418 = vld [vmem:[#allocation3 + $0x139] sm:$0xff]
        %v3419 = vld [vmem:[#allocation3 + $0x141] sm:$0xff]
        %v3420 = vld [vmem:[#allocation3 + $0x151] sm:$0xff]
        %v3421 = vld [vmem:[#allocation3 + $0x159] sm:$0xff]
        %v3422 = vld [vmem:[#allocation3 + $0x169] sm:$0xff]
        %v3423 = vld [vmem:[#allocation3 + $0x171] sm:$0xff]
        %v3424 = vld [vmem:[%s1629] sm:$0xff]
        %v3425 = vld [vmem:[%s1629 + $0x8] sm:$0xff]
        %v3426 = vld [vmem:[%s1629 + $0x18] sm:$0xff]
        %v3427 = vld [vmem:[%s1629 + $0x20] sm:$0xff]
        %v3428 = vld [vmem:[%s1629 + $0x30] sm:$0xff]
        %v3429 = vld [vmem:[%s1629 + $0x38] sm:$0xff]
        %v3430 = vld [vmem:[%s1629 + $0x48] sm:$0xff]
        %v3431 = vld [vmem:[%s1629 + $0x50] sm:$0xff]
        %v3432 = vld [vmem:[%s1629 + $0x60] sm:$0xff]
        %v3433 = vld [vmem:[%s1629 + $0x68] sm:$0xff]
        %v3434 = vld [vmem:[%s1629 + $0x78] sm:$0xff]
        %v3435 = vld [vmem:[%s1629 + $0x80] sm:$0xff]
        %v3436 = vld [vmem:[%s1629 + $0x90] sm:$0xff]
        %v3437 = vld [vmem:[%s1629 + $0x98] sm:$0xff]
        %v3438 = vld [vmem:[%s1629 + $0xa8] sm:$0xff]
        %v3439 = vld [vmem:[%s1629 + $0xb0] sm:$0xff]
        %v3440 = vld [vmem:[%s1629 + $0xc0] sm:$0xff]
        %v3441 = vld [vmem:[%s1629 + $0xc8] sm:$0xff]
        %v3442 = vld [vmem:[%s1629 + $0xd8] sm:$0xff]
        %v3443 = vld [vmem:[%s1629 + $0xe0] sm:$0xff]
        %v3444 = vld [vmem:[%s1629 + $0xf0] sm:$0xff]
        %v3445 = vld [vmem:[%s1629 + $0xf8] sm:$0xff]
        %v3446 = vld [vmem:[%s1629 + $0x108] sm:$0xff]
        %v3447 = vld [vmem:[%s1629 + $0x110] sm:$0xff]
        %v3448 = vld [vmem:[%s1629 + $0x120] sm:$0xff]
        %v3449 = vld [vmem:[%s1629 + $0x128] sm:$0xff]
        %v3450 = vld [vmem:[%s1629 + $0x138] sm:$0xff]
        %v3451 = vld [vmem:[%s1629 + $0x140] sm:$0xff]
        %v3452 = vld [vmem:[%s1629 + $0x150] sm:$0xff]
        %v3453 = vld [vmem:[%s1629 + $0x158] sm:$0xff]
        %v3454 = vld [vmem:[%s1629 + $0x168] sm:$0xff]
        %v3455 = vld [vmem:[%s1629 + $0x170] sm:$0xff]
        %v3456 = vld [vmem:[%s1629 + $0x1] sm:$0xff]
        %v3457 = vld [vmem:[%s1629 + $0x9] sm:$0xff]
        %v3458 = vld [vmem:[%s1629 + $0x19] sm:$0xff]
        %v3459 = vld [vmem:[%s1629 + $0x21] sm:$0xff]
        %v3460 = vld [vmem:[%s1629 + $0x31] sm:$0xff]
        %v3461 = vld [vmem:[%s1629 + $0x39] sm:$0xff]
        %v3462 = vld [vmem:[%s1629 + $0x49] sm:$0xff]
        %v3463 = vld [vmem:[%s1629 + $0x51] sm:$0xff]
        %v3464 = vld [vmem:[%s1629 + $0x61] sm:$0xff]
        %v3465 = vld [vmem:[%s1629 + $0x69] sm:$0xff]
        %v3466 = vld [vmem:[%s1629 + $0x79] sm:$0xff]
        %v3467 = vld [vmem:[%s1629 + $0x81] sm:$0xff]
        %v3468 = vld [vmem:[%s1629 + $0x91] sm:$0xff]
        %v3469 = vld [vmem:[%s1629 + $0x99] sm:$0xff]
        %v3470 = vld [vmem:[%s1629 + $0xa9] sm:$0xff]
        %v3471 = vld [vmem:[%s1629 + $0xb1] sm:$0xff]
        %v3472 = vld [vmem:[%s1629 + $0xc1] sm:$0xff]
        %v3473 = vld [vmem:[%s1629 + $0xc9] sm:$0xff]
        %v3474 = vld [vmem:[%s1629 + $0xd9] sm:$0xff]
        %v3475 = vld [vmem:[%s1629 + $0xe1] sm:$0xff]
        %v3476 = vld [vmem:[%s1629 + $0xf1] sm:$0xff]
        %v3477 = vld [vmem:[%s1629 + $0xf9] sm:$0xff]
        %v3478 = vld [vmem:[%s1629 + $0x109] sm:$0xff]
        %v3479 = vld [vmem:[%s1629 + $0x111] sm:$0xff]
        %v3480 = vld [vmem:[%s1629 + $0x121] sm:$0xff]
        %v3481 = vld [vmem:[%s1629 + $0x129] sm:$0xff]
        %v3482 = vld [vmem:[%s1629 + $0x139] sm:$0xff]
        %v3483 = vld [vmem:[%s1629 + $0x141] sm:$0xff]
        %v3484 = vld [vmem:[%s1629 + $0x151] sm:$0xff]
        %v3485 = vld [vmem:[%s1629 + $0x159] sm:$0xff]
        %v3486 = vld [vmem:[%s1629 + $0x169] sm:$0xff]
        %v3487 = vld [vmem:[%s1629 + $0x171] sm:$0xff]
        %3520 = vrot.lane.b32.xlu0 %v3392, 64
        %v3521 = vpop.permute.xlu0 %3520
        %3522 = vrot.lane.b32.xlu0 %v3393, 64
        %v3523 = vpop.permute.xlu0 %3522
        %3524 = vrot.lane.b32.xlu0 %v3394, 64
        %v3525 = vpop.permute.xlu0 %3524
        %3526 = vrot.lane.b32.xlu0 %v3395, 64
        %v3527 = vpop.permute.xlu0 %3526
        %3528 = vrot.lane.b32.xlu0 %v3396, 64
        %v3529 = vpop.permute.xlu0 %3528
        %3530 = vrot.lane.b32.xlu0 %v3397, 64
        %v3531 = vpop.permute.xlu0 %3530
        %3532 = vrot.lane.b32.xlu0 %v3398, 64
        %v3533 = vpop.permute.xlu0 %3532
        %3534 = vrot.lane.b32.xlu0 %v3399, 64
        %v3535 = vpop.permute.xlu0 %3534
        %3536 = vrot.lane.b32.xlu0 %v3400, 64
        %v3537 = vpop.permute.xlu0 %3536
        %3538 = vrot.lane.b32.xlu0 %v3401, 64
        %v3539 = vpop.permute.xlu0 %3538
        %3540 = vrot.lane.b32.xlu0 %v3402, 64
        %v3541 = vpop.permute.xlu0 %3540
        %3542 = vrot.lane.b32.xlu0 %v3403, 64
        %v3543 = vpop.permute.xlu0 %3542
        %3544 = vrot.lane.b32.xlu0 %v3404, 64
        %v3545 = vpop.permute.xlu0 %3544
        %3546 = vrot.lane.b32.xlu0 %v3405, 64
        %v3547 = vpop.permute.xlu0 %3546
        %3548 = vrot.lane.b32.xlu0 %v3406, 64
        %v3549 = vpop.permute.xlu0 %3548
        %3550 = vrot.lane.b32.xlu0 %v3407, 64
        %v3551 = vpop.permute.xlu0 %3550
        %3552 = vrot.lane.b32.xlu0 %v3408, 64
        %v3553 = vpop.permute.xlu0 %3552
        %3554 = vrot.lane.b32.xlu0 %v3409, 64
        %v3555 = vpop.permute.xlu0 %3554
        %3556 = vrot.lane.b32.xlu0 %v3410, 64
        %v3557 = vpop.permute.xlu0 %3556
        %3558 = vrot.lane.b32.xlu0 %v3411, 64
        %v3559 = vpop.permute.xlu0 %3558
        %3560 = vrot.lane.b32.xlu0 %v3412, 64
        %v3561 = vpop.permute.xlu0 %3560
        %3562 = vrot.lane.b32.xlu0 %v3413, 64
        %v3563 = vpop.permute.xlu0 %3562
        %3564 = vrot.lane.b32.xlu0 %v3414, 64
        %v3565 = vpop.permute.xlu0 %3564
        %3566 = vrot.lane.b32.xlu0 %v3415, 64
        %v3567 = vpop.permute.xlu0 %3566
        %3568 = vrot.lane.b32.xlu0 %v3416, 64
        %v3569 = vpop.permute.xlu0 %3568
        %3570 = vrot.lane.b32.xlu0 %v3417, 64
        %v3571 = vpop.permute.xlu0 %3570
        %3572 = vrot.lane.b32.xlu0 %v3418, 64
        %v3573 = vpop.permute.xlu0 %3572
        %3574 = vrot.lane.b32.xlu0 %v3419, 64
        %v3575 = vpop.permute.xlu0 %3574
        %3576 = vrot.lane.b32.xlu0 %v3420, 64
        %v3577 = vpop.permute.xlu0 %3576
        %3578 = vrot.lane.b32.xlu0 %v3421, 64
        %v3579 = vpop.permute.xlu0 %3578
        %3580 = vrot.lane.b32.xlu0 %v3422, 64
        %v3581 = vpop.permute.xlu0 %3580
        %3582 = vrot.lane.b32.xlu0 %v3423, 64
        %v3583 = vpop.permute.xlu0 %3582
        %3648 = vrot.lane.b32.xlu0 %v3456, 64
        %v3649 = vpop.permute.xlu0 %3648
        %3650 = vrot.lane.b32.xlu0 %v3457, 64
        %v3651 = vpop.permute.xlu0 %3650
        %3652 = vrot.lane.b32.xlu0 %v3458, 64
        %v3653 = vpop.permute.xlu0 %3652
        %3654 = vrot.lane.b32.xlu0 %v3459, 64
        %v3655 = vpop.permute.xlu0 %3654
        %3656 = vrot.lane.b32.xlu0 %v3460, 64
        %v3657 = vpop.permute.xlu0 %3656
        %3658 = vrot.lane.b32.xlu0 %v3461, 64
        %v3659 = vpop.permute.xlu0 %3658
        %3660 = vrot.lane.b32.xlu0 %v3462, 64
        %v3661 = vpop.permute.xlu0 %3660
        %3662 = vrot.lane.b32.xlu0 %v3463, 64
        %v3663 = vpop.permute.xlu0 %3662
        %3664 = vrot.lane.b32.xlu0 %v3464, 64
        %v3665 = vpop.permute.xlu0 %3664
        %3666 = vrot.lane.b32.xlu0 %v3465, 64
        %v3667 = vpop.permute.xlu0 %3666
        %3668 = vrot.lane.b32.xlu0 %v3466, 64
        %v3669 = vpop.permute.xlu0 %3668
        %3670 = vrot.lane.b32.xlu0 %v3467, 64
        %v3671 = vpop.permute.xlu0 %3670
        %3672 = vrot.lane.b32.xlu0 %v3468, 64
        %v3673 = vpop.permute.xlu0 %3672
        %3674 = vrot.lane.b32.xlu0 %v3469, 64
        %v3675 = vpop.permute.xlu0 %3674
        %3676 = vrot.lane.b32.xlu0 %v3470, 64
        %v3677 = vpop.permute.xlu0 %3676
        %3678 = vrot.lane.b32.xlu0 %v3471, 64
        %v3679 = vpop.permute.xlu0 %3678
        %3680 = vrot.lane.b32.xlu0 %v3472, 64
        %v3681 = vpop.permute.xlu0 %3680
        %3682 = vrot.lane.b32.xlu0 %v3473, 64
        %v3683 = vpop.permute.xlu0 %3682
        %3684 = vrot.lane.b32.xlu0 %v3474, 64
        %v3685 = vpop.permute.xlu0 %3684
        %3686 = vrot.lane.b32.xlu0 %v3475, 64
        %v3687 = vpop.permute.xlu0 %3686
        %3688 = vrot.lane.b32.xlu0 %v3476, 64
        %v3689 = vpop.permute.xlu0 %3688
        %3690 = vrot.lane.b32.xlu0 %v3477, 64
        %v3691 = vpop.permute.xlu0 %3690
        %3692 = vrot.lane.b32.xlu0 %v3478, 64
        %v3693 = vpop.permute.xlu0 %3692
        %3694 = vrot.lane.b32.xlu0 %v3479, 64
        %v3695 = vpop.permute.xlu0 %3694
        %3696 = vrot.lane.b32.xlu0 %v3480, 64
        %v3697 = vpop.permute.xlu0 %3696
        %3698 = vrot.lane.b32.xlu0 %v3481, 64
        %v3699 = vpop.permute.xlu0 %3698
        %3700 = vrot.lane.b32.xlu0 %v3482, 64
        %v3701 = vpop.permute.xlu0 %3700
        %3702 = vrot.lane.b32.xlu0 %v3483, 64
        %v3703 = vpop.permute.xlu0 %3702
        %3704 = vrot.lane.b32.xlu0 %v3484, 64
        %v3705 = vpop.permute.xlu0 %3704
        %3706 = vrot.lane.b32.xlu0 %v3485, 64
        %v3707 = vpop.permute.xlu0 %3706
        %3708 = vrot.lane.b32.xlu0 %v3486, 64
        %v3709 = vpop.permute.xlu0 %3708
        %3710 = vrot.lane.b32.xlu0 %v3487, 64
        %v3711 = vpop.permute.xlu0 %3710
        %v3744 = vsel %vm347, %v3360, %v3521
        %v3745 = vsel %vm347, %v3361, %v3523
        %v3746 = vsel %vm347, %v3362, %v3525
        %v3747 = vsel %vm347, %v3363, %v3527
        %v3748 = vsel %vm347, %v3364, %v3529
        %v3749 = vsel %vm347, %v3365, %v3531
        %v3750 = vsel %vm347, %v3366, %v3533
        %v3751 = vsel %vm347, %v3367, %v3535
        %v3752 = vsel %vm347, %v3368, %v3537
        %v3753 = vsel %vm347, %v3369, %v3539
        %v3754 = vsel %vm347, %v3370, %v3541
        %v3755 = vsel %vm347, %v3371, %v3543
        %v3756 = vsel %vm347, %v3372, %v3545
        %v3757 = vsel %vm347, %v3373, %v3547
        %v3758 = vsel %vm347, %v3374, %v3549
        %v3759 = vsel %vm347, %v3375, %v3551
        %v3760 = vsel %vm347, %v3376, %v3553
        %v3761 = vsel %vm347, %v3377, %v3555
        %v3762 = vsel %vm347, %v3378, %v3557
        %v3763 = vsel %vm347, %v3379, %v3559
        %v3764 = vsel %vm347, %v3380, %v3561
        %v3765 = vsel %vm347, %v3381, %v3563
        %v3766 = vsel %vm347, %v3382, %v3565
        %v3767 = vsel %vm347, %v3383, %v3567
        %v3768 = vsel %vm347, %v3384, %v3569
        %v3769 = vsel %vm347, %v3385, %v3571
        %v3770 = vsel %vm347, %v3386, %v3573
        %v3771 = vsel %vm347, %v3387, %v3575
        %v3772 = vsel %vm347, %v3388, %v3577
        %v3773 = vsel %vm347, %v3389, %v3579
        %v3774 = vsel %vm347, %v3390, %v3581
        %v3775 = vsel %vm347, %v3391, %v3583
        %v3776 = vsel %vm347, %v3424, %v3649
        %v3777 = vsel %vm347, %v3425, %v3651
        %v3778 = vsel %vm347, %v3426, %v3653
        %v3779 = vsel %vm347, %v3427, %v3655
        %v3780 = vsel %vm347, %v3428, %v3657
        %v3781 = vsel %vm347, %v3429, %v3659
        %v3782 = vsel %vm347, %v3430, %v3661
        %v3783 = vsel %vm347, %v3431, %v3663
        %v3784 = vsel %vm347, %v3432, %v3665
        %v3785 = vsel %vm347, %v3433, %v3667
        %v3786 = vsel %vm347, %v3434, %v3669
        %v3787 = vsel %vm347, %v3435, %v3671
        %v3788 = vsel %vm347, %v3436, %v3673
        %v3789 = vsel %vm347, %v3437, %v3675
        %v3790 = vsel %vm347, %v3438, %v3677
        %v3791 = vsel %vm347, %v3439, %v3679
        %v3792 = vsel %vm347, %v3440, %v3681
        %v3793 = vsel %vm347, %v3441, %v3683
        %v3794 = vsel %vm347, %v3442, %v3685
        %v3795 = vsel %vm347, %v3443, %v3687
        %v3796 = vsel %vm347, %v3444, %v3689
        %v3797 = vsel %vm347, %v3445, %v3691
        %v3798 = vsel %vm347, %v3446, %v3693
        %v3799 = vsel %vm347, %v3447, %v3695
        %v3800 = vsel %vm347, %v3448, %v3697
        %v3801 = vsel %vm347, %v3449, %v3699
        %v3802 = vsel %vm347, %v3450, %v3701
        %v3803 = vsel %vm347, %v3451, %v3703
        %v3804 = vsel %vm347, %v3452, %v3705
        %v3805 = vsel %vm347, %v3453, %v3707
        %v3806 = vsel %vm347, %v3454, %v3709
        %v3807 = vsel %vm347, %v3455, %v3711
        %s3808 = scalar_lea.vmem [#allocation5], 512
        %v3809 = vld [vmem:[%s3808] sm:$0xff]
        %v3810 = vld [vmem:[%s3808 + $0x8] sm:$0xff]
        %v3811 = vld [vmem:[%s3808 + $0x10] sm:$0xff]
        %v3812 = vld [vmem:[%s3808 + $0x18] sm:$0xff]
        %v3813 = vld [vmem:[%s3808 + $0x20] sm:$0xff]
        %v3814 = vld [vmem:[%s3808 + $0x28] sm:$0xff]
        %v3815 = vld [vmem:[%s3808 + $0x30] sm:$0xff]
        %v3816 = vld [vmem:[%s3808 + $0x38] sm:$0xff]
        %v3817 = vld [vmem:[%s3808 + $0x40] sm:$0xff]
        %v3818 = vld [vmem:[%s3808 + $0x48] sm:$0xff]
        %v3819 = vld [vmem:[%s3808 + $0x50] sm:$0xff]
        %v3820 = vld [vmem:[%s3808 + $0x58] sm:$0xff]
        %v3821 = vld [vmem:[%s3808 + $0x60] sm:$0xff]
        %v3822 = vld [vmem:[%s3808 + $0x68] sm:$0xff]
        %v3823 = vld [vmem:[%s3808 + $0x70] sm:$0xff]
        %v3824 = vld [vmem:[%s3808 + $0x78] sm:$0xff]
        %v3825 = vld [vmem:[%s3808 + $0x80] sm:$0xff]
        %v3826 = vld [vmem:[%s3808 + $0x88] sm:$0xff]
        %v3827 = vld [vmem:[%s3808 + $0x90] sm:$0xff]
        %v3828 = vld [vmem:[%s3808 + $0x98] sm:$0xff]
        %v3829 = vld [vmem:[%s3808 + $0xa0] sm:$0xff]
        %v3830 = vld [vmem:[%s3808 + $0xa8] sm:$0xff]
        %v3831 = vld [vmem:[%s3808 + $0xb0] sm:$0xff]
        %v3832 = vld [vmem:[%s3808 + $0xb8] sm:$0xff]
        %v3833 = vld [vmem:[%s3808 + $0xc0] sm:$0xff]
        %v3834 = vld [vmem:[%s3808 + $0xc8] sm:$0xff]
        %v3835 = vld [vmem:[%s3808 + $0xd0] sm:$0xff]
        %v3836 = vld [vmem:[%s3808 + $0xd8] sm:$0xff]
        %v3837 = vld [vmem:[%s3808 + $0xe0] sm:$0xff]
        %v3838 = vld [vmem:[%s3808 + $0xe8] sm:$0xff]
        %v3839 = vld [vmem:[%s3808 + $0xf0] sm:$0xff]
        %v3840 = vld [vmem:[%s3808 + $0xf8] sm:$0xff]
        %3841 = vmatprep.subr.mxu0 0.0
        %3842 = vmatpush1.msra.mxu0 %v3809
        %3843 = vmatprep.subr.mxu0 0.0
        %3844 = vmatpush1.msra.mxu0 %v3810
        %3845 = vmatprep.subr.mxu0 0.0
        %3846 = vmatpush1.msra.mxu0 %v3811
        %3847 = vmatprep.subr.mxu0 0.0
        %3848 = vmatpush1.msra.mxu0 %v3812
        %3849 = vmatprep.subr.mxu0 0.0
        %3850 = vmatpush1.msra.mxu0 %v3813
        %3851 = vmatprep.subr.mxu0 0.0
        %3852 = vmatpush1.msra.mxu0 %v3814
        %3853 = vmatprep.subr.mxu0 0.0
        %3854 = vmatpush1.msra.mxu0 %v3815
        %3855 = vmatprep.subr.mxu0 0.0
        %3856 = vmatpush1.msra.mxu0 %v3816
        %3857 = vmatprep.subr.mxu0 0.0
        %3858 = vmatpush1.msra.mxu0 %v3817
        %3859 = vmatprep.subr.mxu0 0.0
        %3860 = vmatpush1.msra.mxu0 %v3818
        %3861 = vmatprep.subr.mxu0 0.0
        %3862 = vmatpush1.msra.mxu0 %v3819
        %3863 = vmatprep.subr.mxu0 0.0
        %3864 = vmatpush1.msra.mxu0 %v3820
        %3865 = vmatprep.subr.mxu0 0.0
        %3866 = vmatpush1.msra.mxu0 %v3821
        %3867 = vmatprep.subr.mxu0 0.0
        %3868 = vmatpush1.msra.mxu0 %v3822
        %3869 = vmatprep.subr.mxu0 0.0
        %3870 = vmatpush1.msra.mxu0 %v3823
        %3871 = vmatprep.subr.mxu0 0.0
        %3872 = vmatpush1.msra.mxu0 %v3824
        %3873 = vmatprep.subr.mxu0 0.0
        %3874 = vmatpush1.msra.mxu0 %v3825
        %3875 = vmatprep.subr.mxu0 0.0
        %3876 = vmatpush1.msra.mxu0 %v3826
        %3877 = vmatprep.subr.mxu0 0.0
        %3878 = vmatpush1.msra.mxu0 %v3827
        %3879 = vmatprep.subr.mxu0 0.0
        %3880 = vmatpush1.msra.mxu0 %v3828
        %3881 = vmatprep.subr.mxu0 0.0
        %3882 = vmatpush1.msra.mxu0 %v3829
        %3883 = vmatprep.subr.mxu0 0.0
        %3884 = vmatpush1.msra.mxu0 %v3830
        %3885 = vmatprep.subr.mxu0 0.0
        %3886 = vmatpush1.msra.mxu0 %v3831
        %3887 = vmatprep.subr.mxu0 0.0
        %3888 = vmatpush1.msra.mxu0 %v3832
        %3889 = vmatprep.subr.mxu0 0.0
        %3890 = vmatpush1.msra.mxu0 %v3833
        %3891 = vmatprep.subr.mxu0 0.0
        %3892 = vmatpush1.msra.mxu0 %v3834
        %3893 = vmatprep.subr.mxu0 0.0
        %3894 = vmatpush1.msra.mxu0 %v3835
        %3895 = vmatprep.subr.mxu0 0.0
        %3896 = vmatpush1.msra.mxu0 %v3836
        %3897 = vmatprep.subr.mxu0 0.0
        %3898 = vmatpush1.msra.mxu0 %v3837
        %3899 = vmatprep.subr.mxu0 0.0
        %3900 = vmatpush1.msra.mxu0 %v3838
        %3901 = vmatprep.subr.mxu0 0.0
        %3902 = vmatpush1.msra.mxu0 %v3839
        %3903 = vmatprep.subr.mxu0 0.0
        %3904 = vmatpush1.msra.mxu0 %v3840
        %3905 = vmatprep.mubr.f32.mxu0 %v3776
        %3906 = vmatmul.mubr.f32.gmra.mrb[0].mxu0 %v3744
        %v3907 = vpop.f32.mrb[0].mxu0
        %v3908 = vadd.f32 0.0, %v3907
        %v3909 = vpop.f32.mrb[0].mxu0
        %3910 = vmatprep.mubr.f32.mxu0 %v3777
        %3911 = vmatmul.mubr.f32.gmra.mrb[0].mxu0 %v3745
        %v3912 = vpop.f32.mrb[0].mxu0
        %v3913 = vadd.f32 0.0, %v3912
        %v3914 = vpop.f32.mrb[0].mxu0
        %3915 = vmatprep.mubr.f32.mxu0 %v3778
        %3916 = vmatmul.mubr.f32.gmra.mrb[0].mxu0 %v3746
        %v3917 = vpop.f32.mrb[0].mxu0
        %v3918 = vadd.f32 0.0, %v3917
        %v3919 = vpop.f32.mrb[0].mxu0
        %3920 = vmatprep.mubr.f32.mxu0 %v3779
        %3921 = vmatmul.mubr.f32.gmra.mrb[0].mxu0 %v3747
        %v3922 = vpop.f32.mrb[0].mxu0
        %v3923 = vadd.f32 0.0, %v3922
        %v3924 = vpop.f32.mrb[0].mxu0
        %3925 = vmatprep.mubr.f32.mxu0 %v3780
        %3926 = vmatmul.mubr.f32.gmra.mrb[0].mxu0 %v3748
        %v3927 = vpop.f32.mrb[0].mxu0
        %v3928 = vadd.f32 0.0, %v3927
        %v3929 = vpop.f32.mrb[0].mxu0
        %3930 = vmatprep.mubr.f32.mxu0 %v3781
        %3931 = vmatmul.mubr.f32.gmra.mrb[0].mxu0 %v3749
        %v3932 = vpop.f32.mrb[0].mxu0
        %v3933 = vadd.f32 0.0, %v3932
        %v3934 = vpop.f32.mrb[0].mxu0
        %3935 = vmatprep.mubr.f32.mxu0 %v3782
        %3936 = vmatmul.mubr.f32.gmra.mrb[0].mxu0 %v3750
        %v3937 = vpop.f32.mrb[0].mxu0
        %v3938 = vadd.f32 0.0, %v3937
        %v3939 = vpop.f32.mrb[0].mxu0
        %3940 = vmatprep.mubr.f32.mxu0 %v3783
        %3941 = vmatmul.mubr.f32.gmra.mrb[0].mxu0 %v3751
        %v3942 = vpop.f32.mrb[0].mxu0
        %v3943 = vadd.f32 0.0, %v3942
        %v3944 = vpop.f32.mrb[0].mxu0
        %3945 = vmatprep.mubr.f32.mxu0 %v3784
        %3946 = vmatmul.mubr.f32.gmra.mrb[0].mxu0 %v3752
        %v3947 = vpop.f32.mrb[0].mxu0
        %v3948 = vadd.f32 0.0, %v3947
        %v3949 = vpop.f32.mrb[0].mxu0
        %3950 = vmatprep.mubr.f32.mxu0 %v3785
        %3951 = vmatmul.mubr.f32.gmra.mrb[0].mxu0 %v3753
        %v3952 = vpop.f32.mrb[0].mxu0
        %v3953 = vadd.f32 0.0, %v3952
        %v3954 = vpop.f32.mrb[0].mxu0
        %3955 = vmatprep.mubr.f32.mxu0 %v3786
        %3956 = vmatmul.mubr.f32.gmra.mrb[0].mxu0 %v3754
        %v3957 = vpop.f32.mrb[0].mxu0
        %v3958 = vadd.f32 0.0, %v3957
        %v3959 = vpop.f32.mrb[0].mxu0
        %3960 = vmatprep.mubr.f32.mxu0 %v3787
        %3961 = vmatmul.mubr.f32.gmra.mrb[0].mxu0 %v3755
        %v3962 = vpop.f32.mrb[0].mxu0
        %v3963 = vadd.f32 0.0, %v3962
        %v3964 = vpop.f32.mrb[0].mxu0
        %3965 = vmatprep.mubr.f32.mxu0 %v3788
        %3966 = vmatmul.mubr.f32.gmra.mrb[0].mxu0 %v3756
        %v3967 = vpop.f32.mrb[0].mxu0
        %v3968 = vadd.f32 0.0, %v3967
        %v3969 = vpop.f32.mrb[0].mxu0
        %3970 = vmatprep.mubr.f32.mxu0 %v3789
        %3971 = vmatmul.mubr.f32.gmra.mrb[0].mxu0 %v3757
        %v3972 = vpop.f32.mrb[0].mxu0
        %v3973 = vadd.f32 0.0, %v3972
        %v3974 = vpop.f32.mrb[0].mxu0
        %3975 = vmatprep.mubr.f32.mxu0 %v3790
        %3976 = vmatmul.mubr.f32.gmra.mrb[0].mxu0 %v3758
        %v3977 = vpop.f32.mrb[0].mxu0
        %v3978 = vadd.f32 0.0, %v3977
        %v3979 = vpop.f32.mrb[0].mxu0
        %3980 = vmatprep.mubr.f32.mxu0 %v3791
        %3981 = vmatmul.mubr.f32.gmra.mrb[0].mxu0 %v3759
        %v3982 = vpop.f32.mrb[0].mxu0
        %v3983 = vadd.f32 0.0, %v3982
        %v3984 = vpop.f32.mrb[0].mxu0
        %3985 = vmatprep.mubr.f32.mxu0 %v3792
        %3986 = vmatmul.mubr.f32.gmra.mrb[0].mxu0 %v3760
        %v3987 = vpop.f32.mrb[0].mxu0
        %v3988 = vadd.f32 0.0, %v3987
        %v3989 = vpop.f32.mrb[0].mxu0
        %3990 = vmatprep.mubr.f32.mxu0 %v3793
        %3991 = vmatmul.mubr.f32.gmra.mrb[0].mxu0 %v3761
        %v3992 = vpop.f32.mrb[0].mxu0
        %v3993 = vadd.f32 0.0, %v3992
        %v3994 = vpop.f32.mrb[0].mxu0
        %3995 = vmatprep.mubr.f32.mxu0 %v3794
        %3996 = vmatmul.mubr.f32.gmra.mrb[0].mxu0 %v3762
        %v3997 = vpop.f32.mrb[0].mxu0
        %v3998 = vadd.f32 0.0, %v3997
        %v3999 = vpop.f32.mrb[0].mxu0
        %4000 = vmatprep.mubr.f32.mxu0 %v3795
        %4001 = vmatmul.mubr.f32.gmra.mrb[0].mxu0 %v3763
        %v4002 = vpop.f32.mrb[0].mxu0
        %v4003 = vadd.f32 0.0, %v4002
        %v4004 = vpop.f32.mrb[0].mxu0
        %4005 = vmatprep.mubr.f32.mxu0 %v3796
        %4006 = vmatmul.mubr.f32.gmra.mrb[0].mxu0 %v3764
        %v4007 = vpop.f32.mrb[0].mxu0
        %v4008 = vadd.f32 0.0, %v4007
        %v4009 = vpop.f32.mrb[0].mxu0
        %4010 = vmatprep.mubr.f32.mxu0 %v3797
        %4011 = vmatmul.mubr.f32.gmra.mrb[0].mxu0 %v3765
        %v4012 = vpop.f32.mrb[0].mxu0
        %v4013 = vadd.f32 0.0, %v4012
        %v4014 = vpop.f32.mrb[0].mxu0
        %4015 = vmatprep.mubr.f32.mxu0 %v3798
        %4016 = vmatmul.mubr.f32.gmra.mrb[0].mxu0 %v3766
        %v4017 = vpop.f32.mrb[0].mxu0
        %v4018 = vadd.f32 0.0, %v4017
        %v4019 = vpop.f32.mrb[0].mxu0
        %4020 = vmatprep.mubr.f32.mxu0 %v3799
        %4021 = vmatmul.mubr.f32.gmra.mrb[0].mxu0 %v3767
        %v4022 = vpop.f32.mrb[0].mxu0
        %v4023 = vadd.f32 0.0, %v4022
        %v4024 = vpop.f32.mrb[0].mxu0
        %4025 = vmatprep.mubr.f32.mxu0 %v3800
        %4026 = vmatmul.mubr.f32.gmra.mrb[0].mxu0 %v3768
        %v4027 = vpop.f32.mrb[0].mxu0
        %v4028 = vadd.f32 0.0, %v4027
        %v4029 = vpop.f32.mrb[0].mxu0
        %4030 = vmatprep.mubr.f32.mxu0 %v3801
        %4031 = vmatmul.mubr.f32.gmra.mrb[0].mxu0 %v3769
        %v4032 = vpop.f32.mrb[0].mxu0
        %v4033 = vadd.f32 0.0, %v4032
        %v4034 = vpop.f32.mrb[0].mxu0
        %4035 = vmatprep.mubr.f32.mxu0 %v3802
        %4036 = vmatmul.mubr.f32.gmra.mrb[0].mxu0 %v3770
        %v4037 = vpop.f32.mrb[0].mxu0
        %v4038 = vadd.f32 0.0, %v4037
        %v4039 = vpop.f32.mrb[0].mxu0
        %4040 = vmatprep.mubr.f32.mxu0 %v3803
        %4041 = vmatmul.mubr.f32.gmra.mrb[0].mxu0 %v3771
        %v4042 = vpop.f32.mrb[0].mxu0
        %v4043 = vadd.f32 0.0, %v4042
        %v4044 = vpop.f32.mrb[0].mxu0
        %4045 = vmatprep.mubr.f32.mxu0 %v3804
        %4046 = vmatmul.mubr.f32.gmra.mrb[0].mxu0 %v3772
        %v4047 = vpop.f32.mrb[0].mxu0
        %v4048 = vadd.f32 0.0, %v4047
        %v4049 = vpop.f32.mrb[0].mxu0
        %4050 = vmatprep.mubr.f32.mxu0 %v3805
        %4051 = vmatmul.mubr.f32.gmra.mrb[0].mxu0 %v3773
        %v4052 = vpop.f32.mrb[0].mxu0
        %v4053 = vadd.f32 0.0, %v4052
        %v4054 = vpop.f32.mrb[0].mxu0
        %4055 = vmatprep.mubr.f32.mxu0 %v3806
        %4056 = vmatmul.mubr.f32.gmra.mrb[0].mxu0 %v3774
        %v4057 = vpop.f32.mrb[0].mxu0
        %v4058 = vadd.f32 0.0, %v4057
        %v4059 = vpop.f32.mrb[0].mxu0
        %4060 = vmatprep.mubr.f32.mxu0 %v3807
        %4061 = vmatmul.mubr.f32.gmra.mrb[0].mxu0 %v3775
        %v4062 = vpop.f32.mrb[0].mxu0
        %v4063 = vadd.f32 0.0, %v4062
        %v4064 = vpop.f32.mrb[0].mxu0
        %4065 = vdwg.mxu0
        %s4066 = scalar_lea.vmem %s4, 2
        %v4067 = vld [vmem:[%s4066] sm:$0x1]
        %v4069 = vlaneseq
        %v4070 = vshrl.u32 %v4069, 7
        %v4071 = vsub.s32 0, %v4070
        %v4072 = vrot.slane %v4067, %v4071
        %v4074 = vmul.f32 %v3908, %v4072
        %v4075 = vmul.f32 %v3913, %v4072
        %v4076 = vmul.f32 %v3918, %v4072
        %v4077 = vmul.f32 %v3923, %v4072
        %v4078 = vmul.f32 %v3928, %v4072
        %v4079 = vmul.f32 %v3933, %v4072
        %v4080 = vmul.f32 %v3938, %v4072
        %v4081 = vmul.f32 %v3943, %v4072
        %v4082 = vmul.f32 %v3948, %v4072
        %v4083 = vmul.f32 %v3953, %v4072
        %v4084 = vmul.f32 %v3958, %v4072
        %v4085 = vmul.f32 %v3963, %v4072
        %v4086 = vmul.f32 %v3968, %v4072
        %v4087 = vmul.f32 %v3973, %v4072
        %v4088 = vmul.f32 %v3978, %v4072
        %v4089 = vmul.f32 %v3983, %v4072
        %v4090 = vmul.f32 %v3988, %v4072
        %v4091 = vmul.f32 %v3993, %v4072
        %v4092 = vmul.f32 %v3998, %v4072
        %v4093 = vmul.f32 %v4003, %v4072
        %v4094 = vmul.f32 %v4008, %v4072
        %v4095 = vmul.f32 %v4013, %v4072
        %v4096 = vmul.f32 %v4018, %v4072
        %v4097 = vmul.f32 %v4023, %v4072
        %v4098 = vmul.f32 %v4028, %v4072
        %v4099 = vmul.f32 %v4033, %v4072
        %v4100 = vmul.f32 %v4038, %v4072
        %v4101 = vmul.f32 %v4043, %v4072
        %v4102 = vmul.f32 %v4048, %v4072
        %v4103 = vmul.f32 %v4053, %v4072
        %v4104 = vmul.f32 %v4058, %v4072
        %v4105 = vmul.f32 %v4063, %v4072
        %s4106 = scalar_lea.vmem %s5, 2
        %v4107 = vld [vmem:[%s4106] sm:$0x1]
        %v4109 = vlaneseq
        %v4110 = vshrl.u32 %v4109, 7
        %v4111 = vsub.s32 0, %v4110
        %v4112 = vrot.slane %v4107, %v4111
        %v4114 = vadd.f32 %v4074, %v4112
        %v4115 = vadd.f32 %v4075, %v4112
        %v4116 = vadd.f32 %v4076, %v4112
        %v4117 = vadd.f32 %v4077, %v4112
        %v4118 = vadd.f32 %v4078, %v4112
        %v4119 = vadd.f32 %v4079, %v4112
        %v4120 = vadd.f32 %v4080, %v4112
        %v4121 = vadd.f32 %v4081, %v4112
        %v4122 = vadd.f32 %v4082, %v4112
        %v4123 = vadd.f32 %v4083, %v4112
        %v4124 = vadd.f32 %v4084, %v4112
        %v4125 = vadd.f32 %v4085, %v4112
        %v4126 = vadd.f32 %v4086, %v4112
        %v4127 = vadd.f32 %v4087, %v4112
        %v4128 = vadd.f32 %v4088, %v4112
        %v4129 = vadd.f32 %v4089, %v4112
        %v4130 = vadd.f32 %v4090, %v4112
        %v4131 = vadd.f32 %v4091, %v4112
        %v4132 = vadd.f32 %v4092, %v4112
        %v4133 = vadd.f32 %v4093, %v4112
        %v4134 = vadd.f32 %v4094, %v4112
        %v4135 = vadd.f32 %v4095, %v4112
        %v4136 = vadd.f32 %v4096, %v4112
        %v4137 = vadd.f32 %v4097, %v4112
        %v4138 = vadd.f32 %v4098, %v4112
        %v4139 = vadd.f32 %v4099, %v4112
        %v4140 = vadd.f32 %v4100, %v4112
        %v4141 = vadd.f32 %v4101, %v4112
        %v4142 = vadd.f32 %v4102, %v4112
        %v4143 = vadd.f32 %v4103, %v4112
        %v4144 = vadd.f32 %v4104, %v4112
        %v4145 = vadd.f32 %v4105, %v4112
        %v4146 = vmax.f32 %v4114, 0.0
        %v4147 = vmax.f32 %v4115, 0.0
        %v4148 = vmax.f32 %v4116, 0.0
        %v4149 = vmax.f32 %v4117, 0.0
        %v4150 = vmax.f32 %v4118, 0.0
        %v4151 = vmax.f32 %v4119, 0.0
        %v4152 = vmax.f32 %v4120, 0.0
        %v4153 = vmax.f32 %v4121, 0.0
        %v4154 = vmax.f32 %v4122, 0.0
        %v4155 = vmax.f32 %v4123, 0.0
        %v4156 = vmax.f32 %v4124, 0.0
        %v4157 = vmax.f32 %v4125, 0.0
        %v4158 = vmax.f32 %v4126, 0.0
        %v4159 = vmax.f32 %v4127, 0.0
        %v4160 = vmax.f32 %v4128, 0.0
        %v4161 = vmax.f32 %v4129, 0.0
        %v4162 = vmax.f32 %v4130, 0.0
        %v4163 = vmax.f32 %v4131, 0.0
        %v4164 = vmax.f32 %v4132, 0.0
        %v4165 = vmax.f32 %v4133, 0.0
        %v4166 = vmax.f32 %v4134, 0.0
        %v4167 = vmax.f32 %v4135, 0.0
        %v4168 = vmax.f32 %v4136, 0.0
        %v4169 = vmax.f32 %v4137, 0.0
        %v4170 = vmax.f32 %v4138, 0.0
        %v4171 = vmax.f32 %v4139, 0.0
        %v4172 = vmax.f32 %v4140, 0.0
        %v4173 = vmax.f32 %v4141, 0.0
        %v4174 = vmax.f32 %v4142, 0.0
        %v4175 = vmax.f32 %v4143, 0.0
        %v4176 = vmax.f32 %v4144, 0.0
        %v4177 = vmax.f32 %v4145, 0.0
        %4178 = vst.msk [vmem:[%s2477 + $0x1] sm:$0xff] %vm347, %v4146
        %4179 = vst.msk [vmem:[%s2477 + $0x9] sm:$0xff] %vm347, %v4147
        %4180 = vst.msk [vmem:[%s2477 + $0x19] sm:$0xff] %vm347, %v4148
        %4181 = vst.msk [vmem:[%s2477 + $0x21] sm:$0xff] %vm347, %v4149
        %4182 = vst.msk [vmem:[%s2477 + $0x31] sm:$0xff] %vm347, %v4150
        %4183 = vst.msk [vmem:[%s2477 + $0x39] sm:$0xff] %vm347, %v4151
        %4184 = vst.msk [vmem:[%s2477 + $0x49] sm:$0xff] %vm347, %v4152
        %4185 = vst.msk [vmem:[%s2477 + $0x51] sm:$0xff] %vm347, %v4153
        %4186 = vst.msk [vmem:[%s2477 + $0x61] sm:$0xff] %vm347, %v4154
        %4187 = vst.msk [vmem:[%s2477 + $0x69] sm:$0xff] %vm347, %v4155
        %4188 = vst.msk [vmem:[%s2477 + $0x79] sm:$0xff] %vm347, %v4156
        %4189 = vst.msk [vmem:[%s2477 + $0x81] sm:$0xff] %vm347, %v4157
        %4190 = vst.msk [vmem:[%s2477 + $0x91] sm:$0xff] %vm347, %v4158
        %4191 = vst.msk [vmem:[%s2477 + $0x99] sm:$0xff] %vm347, %v4159
        %4192 = vst.msk [vmem:[%s2477 + $0xa9] sm:$0xff] %vm347, %v4160
        %4193 = vst.msk [vmem:[%s2477 + $0xb1] sm:$0xff] %vm347, %v4161
        %4194 = vst.msk [vmem:[%s2477 + $0xc1] sm:$0xff] %vm347, %v4162
        %4195 = vst.msk [vmem:[%s2477 + $0xc9] sm:$0xff] %vm347, %v4163
        %4196 = vst.msk [vmem:[%s2477 + $0xd9] sm:$0xff] %vm347, %v4164
        %4197 = vst.msk [vmem:[%s2477 + $0xe1] sm:$0xff] %vm347, %v4165
        %4198 = vst.msk [vmem:[%s2477 + $0xf1] sm:$0xff] %vm347, %v4166
        %4199 = vst.msk [vmem:[%s2477 + $0xf9] sm:$0xff] %vm347, %v4167
        %4200 = vst.msk [vmem:[%s2477 + $0x109] sm:$0xff] %vm347, %v4168
        %4201 = vst.msk [vmem:[%s2477 + $0x111] sm:$0xff] %vm347, %v4169
        %4202 = vst.msk [vmem:[%s2477 + $0x121] sm:$0xff] %vm347, %v4170
        %4203 = vst.msk [vmem:[%s2477 + $0x129] sm:$0xff] %vm347, %v4171
        %4204 = vst.msk [vmem:[%s2477 + $0x139] sm:$0xff] %vm347, %v4172
        %4205 = vst.msk [vmem:[%s2477 + $0x141] sm:$0xff] %vm347, %v4173
        %4206 = vst.msk [vmem:[%s2477 + $0x151] sm:$0xff] %vm347, %v4174
        %4207 = vst.msk [vmem:[%s2477 + $0x159] sm:$0xff] %vm347, %v4175
        %4208 = vst.msk [vmem:[%s2477 + $0x169] sm:$0xff] %vm347, %v4176
        %4209 = vst.msk [vmem:[%s2477 + $0x171] sm:$0xff] %vm347, %v4177
        %v4210 = vld [vmem:[%s6] sm:$0x3]
        %v4211 = vld [vmem:[%s6 + $0x2] sm:$0x3]
        %v4212 = vld [vmem:[#allocation4] sm:$0xff]
        %v4213 = vld [vmem:[#allocation4 + $0x8] sm:$0xff]
        %v4214 = vld [vmem:[#allocation4 + $0x18] sm:$0xff]
        %v4215 = vld [vmem:[#allocation4 + $0x20] sm:$0xff]
        %v4216 = vld [vmem:[#allocation4 + $0x30] sm:$0xff]
        %v4217 = vld [vmem:[#allocation4 + $0x38] sm:$0xff]
        %v4218 = vld [vmem:[#allocation4 + $0x48] sm:$0xff]
        %v4219 = vld [vmem:[#allocation4 + $0x50] sm:$0xff]
        %v4220 = vld [vmem:[#allocation4 + $0x60] sm:$0xff]
        %v4221 = vld [vmem:[#allocation4 + $0x68] sm:$0xff]
        %v4222 = vld [vmem:[#allocation4 + $0x78] sm:$0xff]
        %v4223 = vld [vmem:[#allocation4 + $0x80] sm:$0xff]
        %v4224 = vld [vmem:[#allocation4 + $0x90] sm:$0xff]
        %v4225 = vld [vmem:[#allocation4 + $0x98] sm:$0xff]
        %v4226 = vld [vmem:[#allocation4 + $0xa8] sm:$0xff]
        %v4227 = vld [vmem:[#allocation4 + $0xb0] sm:$0xff]
        %v4228 = vld [vmem:[#allocation4 + $0xc0] sm:$0xff]
        %v4229 = vld [vmem:[#allocation4 + $0xc8] sm:$0xff]
        %v4230 = vld [vmem:[#allocation4 + $0xd8] sm:$0xff]
        %v4231 = vld [vmem:[#allocation4 + $0xe0] sm:$0xff]
        %v4232 = vld [vmem:[#allocation4 + $0xf0] sm:$0xff]
        %v4233 = vld [vmem:[#allocation4 + $0xf8] sm:$0xff]
        %v4234 = vld [vmem:[#allocation4 + $0x108] sm:$0xff]
        %v4235 = vld [vmem:[#allocation4 + $0x110] sm:$0xff]
        %v4236 = vld [vmem:[#allocation4 + $0x120] sm:$0xff]
        %v4237 = vld [vmem:[#allocation4 + $0x128] sm:$0xff]
        %v4238 = vld [vmem:[#allocation4 + $0x138] sm:$0xff]
        %v4239 = vld [vmem:[#allocation4 + $0x140] sm:$0xff]
        %v4240 = vld [vmem:[#allocation4 + $0x150] sm:$0xff]
        %v4241 = vld [vmem:[#allocation4 + $0x158] sm:$0xff]
        %v4242 = vld [vmem:[#allocation4 + $0x168] sm:$0xff]
        %v4243 = vld [vmem:[#allocation4 + $0x170] sm:$0xff]
        %v4244 = vlaneseq
        %v4245 = vshrl.u32 %v4244, 7
        %v4246 = vsub.s32 0, %v4245
        %v4247 = vrot.slane %v4210, %v4246
        %v4248 = vmul.f32 %v4212, %v4247
        %v4249 = vmul.f32 %v4213, %v4247
        %v4250 = vmul.f32 %v4214, %v4247
        %v4251 = vmul.f32 %v4215, %v4247
        %v4252 = vmul.f32 %v4216, %v4247
        %v4253 = vmul.f32 %v4217, %v4247
        %v4254 = vmul.f32 %v4218, %v4247
        %v4255 = vmul.f32 %v4219, %v4247
        %v4256 = vmul.f32 %v4220, %v4247
        %v4257 = vmul.f32 %v4221, %v4247
        %v4258 = vmul.f32 %v4222, %v4247
        %v4259 = vmul.f32 %v4223, %v4247
        %v4260 = vmul.f32 %v4224, %v4247
        %v4261 = vmul.f32 %v4225, %v4247
        %v4262 = vmul.f32 %v4226, %v4247
        %v4263 = vmul.f32 %v4227, %v4247
        %v4264 = vmul.f32 %v4228, %v4247
        %v4265 = vmul.f32 %v4229, %v4247
        %v4266 = vmul.f32 %v4230, %v4247
        %v4267 = vmul.f32 %v4231, %v4247
        %v4268 = vmul.f32 %v4232, %v4247
        %v4269 = vmul.f32 %v4233, %v4247
        %v4270 = vmul.f32 %v4234, %v4247
        %v4271 = vmul.f32 %v4235, %v4247
        %v4272 = vmul.f32 %v4236, %v4247
        %v4273 = vmul.f32 %v4237, %v4247
        %v4274 = vmul.f32 %v4238, %v4247
        %v4275 = vmul.f32 %v4239, %v4247
        %v4276 = vmul.f32 %v4240, %v4247
        %v4277 = vmul.f32 %v4241, %v4247
        %v4278 = vmul.f32 %v4242, %v4247
        %v4279 = vmul.f32 %v4243, %v4247
        %v4280 = vsel %vm347, %v4248, 0.0
        %4281 = vadd.xlane.f32.xlu0 %v4280
        %v4282 = vpop.xlane.xlu0 %4281
        %v4283 = vsel %vm347, %v4249, 0.0
        %4284 = vadd.xlane.f32.xlu0 %v4283
        %v4285 = vpop.xlane.xlu0 %4284
        %v4286 = vsel %vm347, %v4250, 0.0
        %4287 = vadd.xlane.f32.xlu0 %v4286
        %v4288 = vpop.xlane.xlu0 %4287
        %v4289 = vsel %vm347, %v4251, 0.0
        %4290 = vadd.xlane.f32.xlu0 %v4289
        %v4291 = vpop.xlane.xlu0 %4290
        %v4292 = vsel %vm347, %v4252, 0.0
        %4293 = vadd.xlane.f32.xlu0 %v4292
        %v4294 = vpop.xlane.xlu0 %4293
        %v4295 = vsel %vm347, %v4253, 0.0
        %4296 = vadd.xlane.f32.xlu0 %v4295
        %v4297 = vpop.xlane.xlu0 %4296
        %v4298 = vsel %vm347, %v4254, 0.0
        %4299 = vadd.xlane.f32.xlu0 %v4298
        %v4300 = vpop.xlane.xlu0 %4299
        %v4301 = vsel %vm347, %v4255, 0.0
        %4302 = vadd.xlane.f32.xlu0 %v4301
        %v4303 = vpop.xlane.xlu0 %4302
        %v4304 = vsel %vm347, %v4256, 0.0
        %4305 = vadd.xlane.f32.xlu0 %v4304
        %v4306 = vpop.xlane.xlu0 %4305
        %v4307 = vsel %vm347, %v4257, 0.0
        %4308 = vadd.xlane.f32.xlu0 %v4307
        %v4309 = vpop.xlane.xlu0 %4308
        %v4310 = vsel %vm347, %v4258, 0.0
        %4311 = vadd.xlane.f32.xlu0 %v4310
        %v4312 = vpop.xlane.xlu0 %4311
        %v4313 = vsel %vm347, %v4259, 0.0
        %4314 = vadd.xlane.f32.xlu0 %v4313
        %v4315 = vpop.xlane.xlu0 %4314
        %v4316 = vsel %vm347, %v4260, 0.0
        %4317 = vadd.xlane.f32.xlu0 %v4316
        %v4318 = vpop.xlane.xlu0 %4317
        %v4319 = vsel %vm347, %v4261, 0.0
        %4320 = vadd.xlane.f32.xlu0 %v4319
        %v4321 = vpop.xlane.xlu0 %4320
        %v4322 = vsel %vm347, %v4262, 0.0
        %4323 = vadd.xlane.f32.xlu0 %v4322
        %v4324 = vpop.xlane.xlu0 %4323
        %v4325 = vsel %vm347, %v4263, 0.0
        %4326 = vadd.xlane.f32.xlu0 %v4325
        %v4327 = vpop.xlane.xlu0 %4326
        %v4328 = vsel %vm347, %v4264, 0.0
        %4329 = vadd.xlane.f32.xlu0 %v4328
        %v4330 = vpop.xlane.xlu0 %4329
        %v4331 = vsel %vm347, %v4265, 0.0
        %4332 = vadd.xlane.f32.xlu0 %v4331
        %v4333 = vpop.xlane.xlu0 %4332
        %v4334 = vsel %vm347, %v4266, 0.0
        %4335 = vadd.xlane.f32.xlu0 %v4334
        %v4336 = vpop.xlane.xlu0 %4335
        %v4337 = vsel %vm347, %v4267, 0.0
        %4338 = vadd.xlane.f32.xlu0 %v4337
        %v4339 = vpop.xlane.xlu0 %4338
        %v4340 = vsel %vm347, %v4268, 0.0
        %4341 = vadd.xlane.f32.xlu0 %v4340
        %v4342 = vpop.xlane.xlu0 %4341
        %v4343 = vsel %vm347, %v4269, 0.0
        %4344 = vadd.xlane.f32.xlu0 %v4343
        %v4345 = vpop.xlane.xlu0 %4344
        %v4346 = vsel %vm347, %v4270, 0.0
        %4347 = vadd.xlane.f32.xlu0 %v4346
        %v4348 = vpop.xlane.xlu0 %4347
        %v4349 = vsel %vm347, %v4271, 0.0
        %4350 = vadd.xlane.f32.xlu0 %v4349
        %v4351 = vpop.xlane.xlu0 %4350
        %v4352 = vsel %vm347, %v4272, 0.0
        %4353 = vadd.xlane.f32.xlu0 %v4352
        %v4354 = vpop.xlane.xlu0 %4353
        %v4355 = vsel %vm347, %v4273, 0.0
        %4356 = vadd.xlane.f32.xlu0 %v4355
        %v4357 = vpop.xlane.xlu0 %4356
        %v4358 = vsel %vm347, %v4274, 0.0
        %4359 = vadd.xlane.f32.xlu0 %v4358
        %v4360 = vpop.xlane.xlu0 %4359
        %v4361 = vsel %vm347, %v4275, 0.0
        %4362 = vadd.xlane.f32.xlu0 %v4361
        %v4363 = vpop.xlane.xlu0 %4362
        %v4364 = vsel %vm347, %v4276, 0.0
        %4365 = vadd.xlane.f32.xlu0 %v4364
        %v4366 = vpop.xlane.xlu0 %4365
        %v4367 = vsel %vm347, %v4277, 0.0
        %4368 = vadd.xlane.f32.xlu0 %v4367
        %v4369 = vpop.xlane.xlu0 %4368
        %v4370 = vsel %vm347, %v4278, 0.0
        %4371 = vadd.xlane.f32.xlu0 %v4370
        %v4372 = vpop.xlane.xlu0 %4371
        %v4373 = vsel %vm347, %v4279, 0.0
        %4374 = vadd.xlane.f32.xlu0 %v4373
        %v4375 = vpop.xlane.xlu0 %4374
        %v4376 = vadd.f32 %v4282, 0.0
        %v4377 = vadd.f32 %v4285, 0.0
        %v4378 = vadd.f32 %v4288, 0.0
        %v4379 = vadd.f32 %v4291, 0.0
        %v4380 = vadd.f32 %v4294, 0.0
        %v4381 = vadd.f32 %v4297, 0.0
        %v4382 = vadd.f32 %v4300, 0.0
        %v4383 = vadd.f32 %v4303, 0.0
        %v4384 = vadd.f32 %v4306, 0.0
        %v4385 = vadd.f32 %v4309, 0.0
        %v4386 = vadd.f32 %v4312, 0.0
        %v4387 = vadd.f32 %v4315, 0.0
        %v4388 = vadd.f32 %v4318, 0.0
        %v4389 = vadd.f32 %v4321, 0.0
        %v4390 = vadd.f32 %v4324, 0.0
        %v4391 = vadd.f32 %v4327, 0.0
        %v4392 = vadd.f32 %v4330, 0.0
        %v4393 = vadd.f32 %v4333, 0.0
        %v4394 = vadd.f32 %v4336, 0.0
        %v4395 = vadd.f32 %v4339, 0.0
        %v4396 = vadd.f32 %v4342, 0.0
        %v4397 = vadd.f32 %v4345, 0.0
        %v4398 = vadd.f32 %v4348, 0.0
        %v4399 = vadd.f32 %v4351, 0.0
        %v4400 = vadd.f32 %v4354, 0.0
        %v4401 = vadd.f32 %v4357, 0.0
        %v4402 = vadd.f32 %v4360, 0.0
        %v4403 = vadd.f32 %v4363, 0.0
        %v4404 = vadd.f32 %v4366, 0.0
        %v4405 = vadd.f32 %v4369, 0.0
        %v4406 = vadd.f32 %v4372, 0.0
        %v4407 = vadd.f32 %v4375, 0.0
        %v4408 = vld [vmem:[#allocation4 + $0x1] sm:$0xff]
        %v4409 = vld [vmem:[#allocation4 + $0x9] sm:$0xff]
        %v4410 = vld [vmem:[#allocation4 + $0x19] sm:$0xff]
        %v4411 = vld [vmem:[#allocation4 + $0x21] sm:$0xff]
        %v4412 = vld [vmem:[#allocation4 + $0x31] sm:$0xff]
        %v4413 = vld [vmem:[#allocation4 + $0x39] sm:$0xff]
        %v4414 = vld [vmem:[#allocation4 + $0x49] sm:$0xff]
        %v4415 = vld [vmem:[#allocation4 + $0x51] sm:$0xff]
        %v4416 = vld [vmem:[#allocation4 + $0x61] sm:$0xff]
        %v4417 = vld [vmem:[#allocation4 + $0x69] sm:$0xff]
        %v4418 = vld [vmem:[#allocation4 + $0x79] sm:$0xff]
        %v4419 = vld [vmem:[#allocation4 + $0x81] sm:$0xff]
        %v4420 = vld [vmem:[#allocation4 + $0x91] sm:$0xff]
        %v4421 = vld [vmem:[#allocation4 + $0x99] sm:$0xff]
        %v4422 = vld [vmem:[#allocation4 + $0xa9] sm:$0xff]
        %v4423 = vld [vmem:[#allocation4 + $0xb1] sm:$0xff]
        %v4424 = vld [vmem:[#allocation4 + $0xc1] sm:$0xff]
        %v4425 = vld [vmem:[#allocation4 + $0xc9] sm:$0xff]
        %v4426 = vld [vmem:[#allocation4 + $0xd9] sm:$0xff]
        %v4427 = vld [vmem:[#allocation4 + $0xe1] sm:$0xff]
        %v4428 = vld [vmem:[#allocation4 + $0xf1] sm:$0xff]
        %v4429 = vld [vmem:[#allocation4 + $0xf9] sm:$0xff]
        %v4430 = vld [vmem:[#allocation4 + $0x109] sm:$0xff]
        %v4431 = vld [vmem:[#allocation4 + $0x111] sm:$0xff]
        %v4432 = vld [vmem:[#allocation4 + $0x121] sm:$0xff]
        %v4433 = vld [vmem:[#allocation4 + $0x129] sm:$0xff]
        %v4434 = vld [vmem:[#allocation4 + $0x139] sm:$0xff]
        %v4435 = vld [vmem:[#allocation4 + $0x141] sm:$0xff]
        %v4436 = vld [vmem:[#allocation4 + $0x151] sm:$0xff]
        %v4437 = vld [vmem:[#allocation4 + $0x159] sm:$0xff]
        %v4438 = vld [vmem:[#allocation4 + $0x169] sm:$0xff]
        %v4439 = vld [vmem:[#allocation4 + $0x171] sm:$0xff]
        %v4440 = vlaneseq
        %v4441 = vshrl.u32 %v4440, 7
        %v4442 = vsub.s32 1, %v4441
        %v4443 = vrot.slane %v4210, %v4442
        %v4444 = vmul.f32 %v4408, %v4443
        %v4445 = vmul.f32 %v4409, %v4443
        %v4446 = vmul.f32 %v4410, %v4443
        %v4447 = vmul.f32 %v4411, %v4443
        %v4448 = vmul.f32 %v4412, %v4443
        %v4449 = vmul.f32 %v4413, %v4443
        %v4450 = vmul.f32 %v4414, %v4443
        %v4451 = vmul.f32 %v4415, %v4443
        %v4452 = vmul.f32 %v4416, %v4443
        %v4453 = vmul.f32 %v4417, %v4443
        %v4454 = vmul.f32 %v4418, %v4443
        %v4455 = vmul.f32 %v4419, %v4443
        %v4456 = vmul.f32 %v4420, %v4443
        %v4457 = vmul.f32 %v4421, %v4443
        %v4458 = vmul.f32 %v4422, %v4443
        %v4459 = vmul.f32 %v4423, %v4443
        %v4460 = vmul.f32 %v4424, %v4443
        %v4461 = vmul.f32 %v4425, %v4443
        %v4462 = vmul.f32 %v4426, %v4443
        %v4463 = vmul.f32 %v4427, %v4443
        %v4464 = vmul.f32 %v4428, %v4443
        %v4465 = vmul.f32 %v4429, %v4443
        %v4466 = vmul.f32 %v4430, %v4443
        %v4467 = vmul.f32 %v4431, %v4443
        %v4468 = vmul.f32 %v4432, %v4443
        %v4469 = vmul.f32 %v4433, %v4443
        %v4470 = vmul.f32 %v4434, %v4443
        %v4471 = vmul.f32 %v4435, %v4443
        %v4472 = vmul.f32 %v4436, %v4443
        %v4473 = vmul.f32 %v4437, %v4443
        %v4474 = vmul.f32 %v4438, %v4443
        %v4475 = vmul.f32 %v4439, %v4443
        %v4476 = vsel %vm347, %v4444, 0.0
        %4477 = vadd.xlane.f32.xlu0 %v4476
        %v4478 = vpop.xlane.xlu0 %4477
        %v4479 = vsel %vm347, %v4445, 0.0
        %4480 = vadd.xlane.f32.xlu0 %v4479
        %v4481 = vpop.xlane.xlu0 %4480
        %v4482 = vsel %vm347, %v4446, 0.0
        %4483 = vadd.xlane.f32.xlu0 %v4482
        %v4484 = vpop.xlane.xlu0 %4483
        %v4485 = vsel %vm347, %v4447, 0.0
        %4486 = vadd.xlane.f32.xlu0 %v4485
        %v4487 = vpop.xlane.xlu0 %4486
        %v4488 = vsel %vm347, %v4448, 0.0
        %4489 = vadd.xlane.f32.xlu0 %v4488
        %v4490 = vpop.xlane.xlu0 %4489
        %v4491 = vsel %vm347, %v4449, 0.0
        %4492 = vadd.xlane.f32.xlu0 %v4491
        %v4493 = vpop.xlane.xlu0 %4492
        %v4494 = vsel %vm347, %v4450, 0.0
        %4495 = vadd.xlane.f32.xlu0 %v4494
        %v4496 = vpop.xlane.xlu0 %4495
        %v4497 = vsel %vm347, %v4451, 0.0
        %4498 = vadd.xlane.f32.xlu0 %v4497
        %v4499 = vpop.xlane.xlu0 %4498
        %v4500 = vsel %vm347, %v4452, 0.0
        %4501 = vadd.xlane.f32.xlu0 %v4500
        %v4502 = vpop.xlane.xlu0 %4501
        %v4503 = vsel %vm347, %v4453, 0.0
        %4504 = vadd.xlane.f32.xlu0 %v4503
        %v4505 = vpop.xlane.xlu0 %4504
        %v4506 = vsel %vm347, %v4454, 0.0
        %4507 = vadd.xlane.f32.xlu0 %v4506
        %v4508 = vpop.xlane.xlu0 %4507
        %v4509 = vsel %vm347, %v4455, 0.0
        %4510 = vadd.xlane.f32.xlu0 %v4509
        %v4511 = vpop.xlane.xlu0 %4510
        %v4512 = vsel %vm347, %v4456, 0.0
        %4513 = vadd.xlane.f32.xlu0 %v4512
        %v4514 = vpop.xlane.xlu0 %4513
        %v4515 = vsel %vm347, %v4457, 0.0
        %4516 = vadd.xlane.f32.xlu0 %v4515
        %v4517 = vpop.xlane.xlu0 %4516
        %v4518 = vsel %vm347, %v4458, 0.0
        %4519 = vadd.xlane.f32.xlu0 %v4518
        %v4520 = vpop.xlane.xlu0 %4519
        %v4521 = vsel %vm347, %v4459, 0.0
        %4522 = vadd.xlane.f32.xlu0 %v4521
        %v4523 = vpop.xlane.xlu0 %4522
        %v4524 = vsel %vm347, %v4460, 0.0
        %4525 = vadd.xlane.f32.xlu0 %v4524
        %v4526 = vpop.xlane.xlu0 %4525
        %v4527 = vsel %vm347, %v4461, 0.0
        %4528 = vadd.xlane.f32.xlu0 %v4527
        %v4529 = vpop.xlane.xlu0 %4528
        %v4530 = vsel %vm347, %v4462, 0.0
        %4531 = vadd.xlane.f32.xlu0 %v4530
        %v4532 = vpop.xlane.xlu0 %4531
        %v4533 = vsel %vm347, %v4463, 0.0
        %4534 = vadd.xlane.f32.xlu0 %v4533
        %v4535 = vpop.xlane.xlu0 %4534
        %v4536 = vsel %vm347, %v4464, 0.0
        %4537 = vadd.xlane.f32.xlu0 %v4536
        %v4538 = vpop.xlane.xlu0 %4537
        %v4539 = vsel %vm347, %v4465, 0.0
        %4540 = vadd.xlane.f32.xlu0 %v4539
        %v4541 = vpop.xlane.xlu0 %4540
        %v4542 = vsel %vm347, %v4466, 0.0
        %4543 = vadd.xlane.f32.xlu0 %v4542
        %v4544 = vpop.xlane.xlu0 %4543
        %v4545 = vsel %vm347, %v4467, 0.0
        %4546 = vadd.xlane.f32.xlu0 %v4545
        %v4547 = vpop.xlane.xlu0 %4546
        %v4548 = vsel %vm347, %v4468, 0.0
        %4549 = vadd.xlane.f32.xlu0 %v4548
        %v4550 = vpop.xlane.xlu0 %4549
        %v4551 = vsel %vm347, %v4469, 0.0
        %4552 = vadd.xlane.f32.xlu0 %v4551
        %v4553 = vpop.xlane.xlu0 %4552
        %v4554 = vsel %vm347, %v4470, 0.0
        %4555 = vadd.xlane.f32.xlu0 %v4554
        %v4556 = vpop.xlane.xlu0 %4555
        %v4557 = vsel %vm347, %v4471, 0.0
        %4558 = vadd.xlane.f32.xlu0 %v4557
        %v4559 = vpop.xlane.xlu0 %4558
        %v4560 = vsel %vm347, %v4472, 0.0
        %4561 = vadd.xlane.f32.xlu0 %v4560
        %v4562 = vpop.xlane.xlu0 %4561
        %v4563 = vsel %vm347, %v4473, 0.0
        %4564 = vadd.xlane.f32.xlu0 %v4563
        %v4565 = vpop.xlane.xlu0 %4564
        %v4566 = vsel %vm347, %v4474, 0.0
        %4567 = vadd.xlane.f32.xlu0 %v4566
        %v4568 = vpop.xlane.xlu0 %4567
        %v4569 = vsel %vm347, %v4475, 0.0
        %4570 = vadd.xlane.f32.xlu0 %v4569
        %v4571 = vpop.xlane.xlu0 %4570
        %v4572 = vadd.f32 %v4376, %v4478
        %v4573 = vadd.f32 %v4377, %v4481
        %v4574 = vadd.f32 %v4378, %v4484
        %v4575 = vadd.f32 %v4379, %v4487
        %v4576 = vadd.f32 %v4380, %v4490
        %v4577 = vadd.f32 %v4381, %v4493
        %v4578 = vadd.f32 %v4382, %v4496
        %v4579 = vadd.f32 %v4383, %v4499
        %v4580 = vadd.f32 %v4384, %v4502
        %v4581 = vadd.f32 %v4385, %v4505
        %v4582 = vadd.f32 %v4386, %v4508
        %v4583 = vadd.f32 %v4387, %v4511
        %v4584 = vadd.f32 %v4388, %v4514
        %v4585 = vadd.f32 %v4389, %v4517
        %v4586 = vadd.f32 %v4390, %v4520
        %v4587 = vadd.f32 %v4391, %v4523
        %v4588 = vadd.f32 %v4392, %v4526
        %v4589 = vadd.f32 %v4393, %v4529
        %v4590 = vadd.f32 %v4394, %v4532
        %v4591 = vadd.f32 %v4395, %v4535
        %v4592 = vadd.f32 %v4396, %v4538
        %v4593 = vadd.f32 %v4397, %v4541
        %v4594 = vadd.f32 %v4398, %v4544
        %v4595 = vadd.f32 %v4399, %v4547
        %v4596 = vadd.f32 %v4400, %v4550
        %v4597 = vadd.f32 %v4401, %v4553
        %v4598 = vadd.f32 %v4402, %v4556
        %v4599 = vadd.f32 %v4403, %v4559
        %v4600 = vadd.f32 %v4404, %v4562
        %v4601 = vadd.f32 %v4405, %v4565
        %v4602 = vadd.f32 %v4406, %v4568
        %v4603 = vadd.f32 %v4407, %v4571
        %v4604 = vld [vmem:[%s2477] sm:$0xff]
        %v4605 = vld [vmem:[%s2477 + $0x8] sm:$0xff]
        %v4606 = vld [vmem:[%s2477 + $0x18] sm:$0xff]
        %v4607 = vld [vmem:[%s2477 + $0x20] sm:$0xff]
        %v4608 = vld [vmem:[%s2477 + $0x30] sm:$0xff]
        %v4609 = vld [vmem:[%s2477 + $0x38] sm:$0xff]
        %v4610 = vld [vmem:[%s2477 + $0x48] sm:$0xff]
        %v4611 = vld [vmem:[%s2477 + $0x50] sm:$0xff]
        %v4612 = vld [vmem:[%s2477 + $0x60] sm:$0xff]
        %v4613 = vld [vmem:[%s2477 + $0x68] sm:$0xff]
        %v4614 = vld [vmem:[%s2477 + $0x78] sm:$0xff]
        %v4615 = vld [vmem:[%s2477 + $0x80] sm:$0xff]
        %v4616 = vld [vmem:[%s2477 + $0x90] sm:$0xff]
        %v4617 = vld [vmem:[%s2477 + $0x98] sm:$0xff]
        %v4618 = vld [vmem:[%s2477 + $0xa8] sm:$0xff]
        %v4619 = vld [vmem:[%s2477 + $0xb0] sm:$0xff]
        %v4620 = vld [vmem:[%s2477 + $0xc0] sm:$0xff]
        %v4621 = vld [vmem:[%s2477 + $0xc8] sm:$0xff]
        %v4622 = vld [vmem:[%s2477 + $0xd8] sm:$0xff]
        %v4623 = vld [vmem:[%s2477 + $0xe0] sm:$0xff]
        %v4624 = vld [vmem:[%s2477 + $0xf0] sm:$0xff]
        %v4625 = vld [vmem:[%s2477 + $0xf8] sm:$0xff]
        %v4626 = vld [vmem:[%s2477 + $0x108] sm:$0xff]
        %v4627 = vld [vmem:[%s2477 + $0x110] sm:$0xff]
        %v4628 = vld [vmem:[%s2477 + $0x120] sm:$0xff]
        %v4629 = vld [vmem:[%s2477 + $0x128] sm:$0xff]
        %v4630 = vld [vmem:[%s2477 + $0x138] sm:$0xff]
        %v4631 = vld [vmem:[%s2477 + $0x140] sm:$0xff]
        %v4632 = vld [vmem:[%s2477 + $0x150] sm:$0xff]
        %v4633 = vld [vmem:[%s2477 + $0x158] sm:$0xff]
        %v4634 = vld [vmem:[%s2477 + $0x168] sm:$0xff]
        %v4635 = vld [vmem:[%s2477 + $0x170] sm:$0xff]
        %v4636 = vlaneseq
        %v4637 = vshrl.u32 %v4636, 7
        %v4638 = vsub.s32 0, %v4637
        %v4639 = vrot.slane %v4211, %v4638
        %v4640 = vmul.f32 %v4604, %v4639
        %v4641 = vmul.f32 %v4605, %v4639
        %v4642 = vmul.f32 %v4606, %v4639
        %v4643 = vmul.f32 %v4607, %v4639
        %v4644 = vmul.f32 %v4608, %v4639
        %v4645 = vmul.f32 %v4609, %v4639
        %v4646 = vmul.f32 %v4610, %v4639
        %v4647 = vmul.f32 %v4611, %v4639
        %v4648 = vmul.f32 %v4612, %v4639
        %v4649 = vmul.f32 %v4613, %v4639
        %v4650 = vmul.f32 %v4614, %v4639
        %v4651 = vmul.f32 %v4615, %v4639
        %v4652 = vmul.f32 %v4616, %v4639
        %v4653 = vmul.f32 %v4617, %v4639
        %v4654 = vmul.f32 %v4618, %v4639
        %v4655 = vmul.f32 %v4619, %v4639
        %v4656 = vmul.f32 %v4620, %v4639
        %v4657 = vmul.f32 %v4621, %v4639
        %v4658 = vmul.f32 %v4622, %v4639
        %v4659 = vmul.f32 %v4623, %v4639
        %v4660 = vmul.f32 %v4624, %v4639
        %v4661 = vmul.f32 %v4625, %v4639
        %v4662 = vmul.f32 %v4626, %v4639
        %v4663 = vmul.f32 %v4627, %v4639
        %v4664 = vmul.f32 %v4628, %v4639
        %v4665 = vmul.f32 %v4629, %v4639
        %v4666 = vmul.f32 %v4630, %v4639
        %v4667 = vmul.f32 %v4631, %v4639
        %v4668 = vmul.f32 %v4632, %v4639
        %v4669 = vmul.f32 %v4633, %v4639
        %v4670 = vmul.f32 %v4634, %v4639
        %v4671 = vmul.f32 %v4635, %v4639
        %v4672 = vsel %vm347, %v4640, 0.0
        %4673 = vadd.xlane.f32.xlu0 %v4672
        %v4674 = vpop.xlane.xlu0 %4673
        %v4675 = vsel %vm347, %v4641, 0.0
        %4676 = vadd.xlane.f32.xlu0 %v4675
        %v4677 = vpop.xlane.xlu0 %4676
        %v4678 = vsel %vm347, %v4642, 0.0
        %4679 = vadd.xlane.f32.xlu0 %v4678
        %v4680 = vpop.xlane.xlu0 %4679
        %v4681 = vsel %vm347, %v4643, 0.0
        %4682 = vadd.xlane.f32.xlu0 %v4681
        %v4683 = vpop.xlane.xlu0 %4682
        %v4684 = vsel %vm347, %v4644, 0.0
        %4685 = vadd.xlane.f32.xlu0 %v4684
        %v4686 = vpop.xlane.xlu0 %4685
        %v4687 = vsel %vm347, %v4645, 0.0
        %4688 = vadd.xlane.f32.xlu0 %v4687
        %v4689 = vpop.xlane.xlu0 %4688
        %v4690 = vsel %vm347, %v4646, 0.0
        %4691 = vadd.xlane.f32.xlu0 %v4690
        %v4692 = vpop.xlane.xlu0 %4691
        %v4693 = vsel %vm347, %v4647, 0.0
        %4694 = vadd.xlane.f32.xlu0 %v4693
        %v4695 = vpop.xlane.xlu0 %4694
        %v4696 = vsel %vm347, %v4648, 0.0
        %4697 = vadd.xlane.f32.xlu0 %v4696
        %v4698 = vpop.xlane.xlu0 %4697
        %v4699 = vsel %vm347, %v4649, 0.0
        %4700 = vadd.xlane.f32.xlu0 %v4699
        %v4701 = vpop.xlane.xlu0 %4700
        %v4702 = vsel %vm347, %v4650, 0.0
        %4703 = vadd.xlane.f32.xlu0 %v4702
        %v4704 = vpop.xlane.xlu0 %4703
        %v4705 = vsel %vm347, %v4651, 0.0
        %4706 = vadd.xlane.f32.xlu0 %v4705
        %v4707 = vpop.xlane.xlu0 %4706
        %v4708 = vsel %vm347, %v4652, 0.0
        %4709 = vadd.xlane.f32.xlu0 %v4708
        %v4710 = vpop.xlane.xlu0 %4709
        %v4711 = vsel %vm347, %v4653, 0.0
        %4712 = vadd.xlane.f32.xlu0 %v4711
        %v4713 = vpop.xlane.xlu0 %4712
        %v4714 = vsel %vm347, %v4654, 0.0
        %4715 = vadd.xlane.f32.xlu0 %v4714
        %v4716 = vpop.xlane.xlu0 %4715
        %v4717 = vsel %vm347, %v4655, 0.0
        %4718 = vadd.xlane.f32.xlu0 %v4717
        %v4719 = vpop.xlane.xlu0 %4718
        %v4720 = vsel %vm347, %v4656, 0.0
        %4721 = vadd.xlane.f32.xlu0 %v4720
        %v4722 = vpop.xlane.xlu0 %4721
        %v4723 = vsel %vm347, %v4657, 0.0
        %4724 = vadd.xlane.f32.xlu0 %v4723
        %v4725 = vpop.xlane.xlu0 %4724
        %v4726 = vsel %vm347, %v4658, 0.0
        %4727 = vadd.xlane.f32.xlu0 %v4726
        %v4728 = vpop.xlane.xlu0 %4727
        %v4729 = vsel %vm347, %v4659, 0.0
        %4730 = vadd.xlane.f32.xlu0 %v4729
        %v4731 = vpop.xlane.xlu0 %4730
        %v4732 = vsel %vm347, %v4660, 0.0
        %4733 = vadd.xlane.f32.xlu0 %v4732
        %v4734 = vpop.xlane.xlu0 %4733
        %v4735 = vsel %vm347, %v4661, 0.0
        %4736 = vadd.xlane.f32.xlu0 %v4735
        %v4737 = vpop.xlane.xlu0 %4736
        %v4738 = vsel %vm347, %v4662, 0.0
        %4739 = vadd.xlane.f32.xlu0 %v4738
        %v4740 = vpop.xlane.xlu0 %4739
        %v4741 = vsel %vm347, %v4663, 0.0
        %4742 = vadd.xlane.f32.xlu0 %v4741
        %v4743 = vpop.xlane.xlu0 %4742
        %v4744 = vsel %vm347, %v4664, 0.0
        %4745 = vadd.xlane.f32.xlu0 %v4744
        %v4746 = vpop.xlane.xlu0 %4745
        %v4747 = vsel %vm347, %v4665, 0.0
        %4748 = vadd.xlane.f32.xlu0 %v4747
        %v4749 = vpop.xlane.xlu0 %4748
        %v4750 = vsel %vm347, %v4666, 0.0
        %4751 = vadd.xlane.f32.xlu0 %v4750
        %v4752 = vpop.xlane.xlu0 %4751
        %v4753 = vsel %vm347, %v4667, 0.0
        %4754 = vadd.xlane.f32.xlu0 %v4753
        %v4755 = vpop.xlane.xlu0 %4754
        %v4756 = vsel %vm347, %v4668, 0.0
        %4757 = vadd.xlane.f32.xlu0 %v4756
        %v4758 = vpop.xlane.xlu0 %4757
        %v4759 = vsel %vm347, %v4669, 0.0
        %4760 = vadd.xlane.f32.xlu0 %v4759
        %v4761 = vpop.xlane.xlu0 %4760
        %v4762 = vsel %vm347, %v4670, 0.0
        %4763 = vadd.xlane.f32.xlu0 %v4762
        %v4764 = vpop.xlane.xlu0 %4763
        %v4765 = vsel %vm347, %v4671, 0.0
        %4766 = vadd.xlane.f32.xlu0 %v4765
        %v4767 = vpop.xlane.xlu0 %4766
        %v4768 = vadd.f32 %v4572, %v4674
        %v4769 = vadd.f32 %v4573, %v4677
        %v4770 = vadd.f32 %v4574, %v4680
        %v4771 = vadd.f32 %v4575, %v4683
        %v4772 = vadd.f32 %v4576, %v4686
        %v4773 = vadd.f32 %v4577, %v4689
        %v4774 = vadd.f32 %v4578, %v4692
        %v4775 = vadd.f32 %v4579, %v4695
        %v4776 = vadd.f32 %v4580, %v4698
        %v4777 = vadd.f32 %v4581, %v4701
        %v4778 = vadd.f32 %v4582, %v4704
        %v4779 = vadd.f32 %v4583, %v4707
        %v4780 = vadd.f32 %v4584, %v4710
        %v4781 = vadd.f32 %v4585, %v4713
        %v4782 = vadd.f32 %v4586, %v4716
        %v4783 = vadd.f32 %v4587, %v4719
        %v4784 = vadd.f32 %v4588, %v4722
        %v4785 = vadd.f32 %v4589, %v4725
        %v4786 = vadd.f32 %v4590, %v4728
        %v4787 = vadd.f32 %v4591, %v4731
        %v4788 = vadd.f32 %v4592, %v4734
        %v4789 = vadd.f32 %v4593, %v4737
        %v4790 = vadd.f32 %v4594, %v4740
        %v4791 = vadd.f32 %v4595, %v4743
        %v4792 = vadd.f32 %v4596, %v4746
        %v4793 = vadd.f32 %v4597, %v4749
        %v4794 = vadd.f32 %v4598, %v4752
        %v4795 = vadd.f32 %v4599, %v4755
        %v4796 = vadd.f32 %v4600, %v4758
        %v4797 = vadd.f32 %v4601, %v4761
        %v4798 = vadd.f32 %v4602, %v4764
        %v4799 = vadd.f32 %v4603, %v4767
        %v4800 = vld [vmem:[%s2477 + $0x1] sm:$0xff]
        %v4801 = vld [vmem:[%s2477 + $0x9] sm:$0xff]
        %v4802 = vld [vmem:[%s2477 + $0x19] sm:$0xff]
        %v4803 = vld [vmem:[%s2477 + $0x21] sm:$0xff]
        %v4804 = vld [vmem:[%s2477 + $0x31] sm:$0xff]
        %v4805 = vld [vmem:[%s2477 + $0x39] sm:$0xff]
        %v4806 = vld [vmem:[%s2477 + $0x49] sm:$0xff]
        %v4807 = vld [vmem:[%s2477 + $0x51] sm:$0xff]
        %v4808 = vld [vmem:[%s2477 + $0x61] sm:$0xff]
        %v4809 = vld [vmem:[%s2477 + $0x69] sm:$0xff]
        %v4810 = vld [vmem:[%s2477 + $0x79] sm:$0xff]
        %v4811 = vld [vmem:[%s2477 + $0x81] sm:$0xff]
        %v4812 = vld [vmem:[%s2477 + $0x91] sm:$0xff]
        %v4813 = vld [vmem:[%s2477 + $0x99] sm:$0xff]
        %v4814 = vld [vmem:[%s2477 + $0xa9] sm:$0xff]
        %v4815 = vld [vmem:[%s2477 + $0xb1] sm:$0xff]
        %v4816 = vld [vmem:[%s2477 + $0xc1] sm:$0xff]
        %v4817 = vld [vmem:[%s2477 + $0xc9] sm:$0xff]
        %v4818 = vld [vmem:[%s2477 + $0xd9] sm:$0xff]
        %v4819 = vld [vmem:[%s2477 + $0xe1] sm:$0xff]
        %v4820 = vld [vmem:[%s2477 + $0xf1] sm:$0xff]
        %v4821 = vld [vmem:[%s2477 + $0xf9] sm:$0xff]
        %v4822 = vld [vmem:[%s2477 + $0x109] sm:$0xff]
        %v4823 = vld [vmem:[%s2477 + $0x111] sm:$0xff]
        %v4824 = vld [vmem:[%s2477 + $0x121] sm:$0xff]
        %v4825 = vld [vmem:[%s2477 + $0x129] sm:$0xff]
        %v4826 = vld [vmem:[%s2477 + $0x139] sm:$0xff]
        %v4827 = vld [vmem:[%s2477 + $0x141] sm:$0xff]
        %v4828 = vld [vmem:[%s2477 + $0x151] sm:$0xff]
        %v4829 = vld [vmem:[%s2477 + $0x159] sm:$0xff]
        %v4830 = vld [vmem:[%s2477 + $0x169] sm:$0xff]
        %v4831 = vld [vmem:[%s2477 + $0x171] sm:$0xff]
        %v4832 = vlaneseq
        %v4833 = vshrl.u32 %v4832, 7
        %v4834 = vsub.s32 1, %v4833
        %v4835 = vrot.slane %v4211, %v4834
        %v4836 = vmul.f32 %v4800, %v4835
        %v4837 = vmul.f32 %v4801, %v4835
        %v4838 = vmul.f32 %v4802, %v4835
        %v4839 = vmul.f32 %v4803, %v4835
        %v4840 = vmul.f32 %v4804, %v4835
        %v4841 = vmul.f32 %v4805, %v4835
        %v4842 = vmul.f32 %v4806, %v4835
        %v4843 = vmul.f32 %v4807, %v4835
        %v4844 = vmul.f32 %v4808, %v4835
        %v4845 = vmul.f32 %v4809, %v4835
        %v4846 = vmul.f32 %v4810, %v4835
        %v4847 = vmul.f32 %v4811, %v4835
        %v4848 = vmul.f32 %v4812, %v4835
        %v4849 = vmul.f32 %v4813, %v4835
        %v4850 = vmul.f32 %v4814, %v4835
        %v4851 = vmul.f32 %v4815, %v4835
        %v4852 = vmul.f32 %v4816, %v4835
        %v4853 = vmul.f32 %v4817, %v4835
        %v4854 = vmul.f32 %v4818, %v4835
        %v4855 = vmul.f32 %v4819, %v4835
        %v4856 = vmul.f32 %v4820, %v4835
        %v4857 = vmul.f32 %v4821, %v4835
        %v4858 = vmul.f32 %v4822, %v4835
        %v4859 = vmul.f32 %v4823, %v4835
        %v4860 = vmul.f32 %v4824, %v4835
        %v4861 = vmul.f32 %v4825, %v4835
        %v4862 = vmul.f32 %v4826, %v4835
        %v4863 = vmul.f32 %v4827, %v4835
        %v4864 = vmul.f32 %v4828, %v4835
        %v4865 = vmul.f32 %v4829, %v4835
        %v4866 = vmul.f32 %v4830, %v4835
        %v4867 = vmul.f32 %v4831, %v4835
        %v4868 = vsel %vm347, %v4836, 0.0
        %4869 = vadd.xlane.f32.xlu0 %v4868
        %v4870 = vpop.xlane.xlu0 %4869
        %v4871 = vsel %vm347, %v4837, 0.0
        %4872 = vadd.xlane.f32.xlu0 %v4871
        %v4873 = vpop.xlane.xlu0 %4872
        %v4874 = vsel %vm347, %v4838, 0.0
        %4875 = vadd.xlane.f32.xlu0 %v4874
        %v4876 = vpop.xlane.xlu0 %4875
        %v4877 = vsel %vm347, %v4839, 0.0
        %4878 = vadd.xlane.f32.xlu0 %v4877
        %v4879 = vpop.xlane.xlu0 %4878
        %v4880 = vsel %vm347, %v4840, 0.0
        %4881 = vadd.xlane.f32.xlu0 %v4880
        %v4882 = vpop.xlane.xlu0 %4881
        %v4883 = vsel %vm347, %v4841, 0.0
        %4884 = vadd.xlane.f32.xlu0 %v4883
        %v4885 = vpop.xlane.xlu0 %4884
        %v4886 = vsel %vm347, %v4842, 0.0
        %4887 = vadd.xlane.f32.xlu0 %v4886
        %v4888 = vpop.xlane.xlu0 %4887
        %v4889 = vsel %vm347, %v4843, 0.0
        %4890 = vadd.xlane.f32.xlu0 %v4889
        %v4891 = vpop.xlane.xlu0 %4890
        %v4892 = vsel %vm347, %v4844, 0.0
        %4893 = vadd.xlane.f32.xlu0 %v4892
        %v4894 = vpop.xlane.xlu0 %4893
        %v4895 = vsel %vm347, %v4845, 0.0
        %4896 = vadd.xlane.f32.xlu0 %v4895
        %v4897 = vpop.xlane.xlu0 %4896
        %v4898 = vsel %vm347, %v4846, 0.0
        %4899 = vadd.xlane.f32.xlu0 %v4898
        %v4900 = vpop.xlane.xlu0 %4899
        %v4901 = vsel %vm347, %v4847, 0.0
        %4902 = vadd.xlane.f32.xlu0 %v4901
        %v4903 = vpop.xlane.xlu0 %4902
        %v4904 = vsel %vm347, %v4848, 0.0
        %4905 = vadd.xlane.f32.xlu0 %v4904
        %v4906 = vpop.xlane.xlu0 %4905
        %v4907 = vsel %vm347, %v4849, 0.0
        %4908 = vadd.xlane.f32.xlu0 %v4907
        %v4909 = vpop.xlane.xlu0 %4908
        %v4910 = vsel %vm347, %v4850, 0.0
        %4911 = vadd.xlane.f32.xlu0 %v4910
        %v4912 = vpop.xlane.xlu0 %4911
        %v4913 = vsel %vm347, %v4851, 0.0
        %4914 = vadd.xlane.f32.xlu0 %v4913
        %v4915 = vpop.xlane.xlu0 %4914
        %v4916 = vsel %vm347, %v4852, 0.0
        %4917 = vadd.xlane.f32.xlu0 %v4916
        %v4918 = vpop.xlane.xlu0 %4917
        %v4919 = vsel %vm347, %v4853, 0.0
        %4920 = vadd.xlane.f32.xlu0 %v4919
        %v4921 = vpop.xlane.xlu0 %4920
        %v4922 = vsel %vm347, %v4854, 0.0
        %4923 = vadd.xlane.f32.xlu0 %v4922
        %v4924 = vpop.xlane.xlu0 %4923
        %v4925 = vsel %vm347, %v4855, 0.0
        %4926 = vadd.xlane.f32.xlu0 %v4925
        %v4927 = vpop.xlane.xlu0 %4926
        %v4928 = vsel %vm347, %v4856, 0.0
        %4929 = vadd.xlane.f32.xlu0 %v4928
        %v4930 = vpop.xlane.xlu0 %4929
        %v4931 = vsel %vm347, %v4857, 0.0
        %4932 = vadd.xlane.f32.xlu0 %v4931
        %v4933 = vpop.xlane.xlu0 %4932
        %v4934 = vsel %vm347, %v4858, 0.0
        %4935 = vadd.xlane.f32.xlu0 %v4934
        %v4936 = vpop.xlane.xlu0 %4935
        %v4937 = vsel %vm347, %v4859, 0.0
        %4938 = vadd.xlane.f32.xlu0 %v4937
        %v4939 = vpop.xlane.xlu0 %4938
        %v4940 = vsel %vm347, %v4860, 0.0
        %4941 = vadd.xlane.f32.xlu0 %v4940
        %v4942 = vpop.xlane.xlu0 %4941
        %v4943 = vsel %vm347, %v4861, 0.0
        %4944 = vadd.xlane.f32.xlu0 %v4943
        %v4945 = vpop.xlane.xlu0 %4944
        %v4946 = vsel %vm347, %v4862, 0.0
        %4947 = vadd.xlane.f32.xlu0 %v4946
        %v4948 = vpop.xlane.xlu0 %4947
        %v4949 = vsel %vm347, %v4863, 0.0
        %4950 = vadd.xlane.f32.xlu0 %v4949
        %v4951 = vpop.xlane.xlu0 %4950
        %v4952 = vsel %vm347, %v4864, 0.0
        %4953 = vadd.xlane.f32.xlu0 %v4952
        %v4954 = vpop.xlane.xlu0 %4953
        %v4955 = vsel %vm347, %v4865, 0.0
        %4956 = vadd.xlane.f32.xlu0 %v4955
        %v4957 = vpop.xlane.xlu0 %4956
        %v4958 = vsel %vm347, %v4866, 0.0
        %4959 = vadd.xlane.f32.xlu0 %v4958
        %v4960 = vpop.xlane.xlu0 %4959
        %v4961 = vsel %vm347, %v4867, 0.0
        %4962 = vadd.xlane.f32.xlu0 %v4961
        %v4963 = vpop.xlane.xlu0 %4962
        %v4964 = vadd.f32 %v4768, %v4870
        %v4965 = vadd.f32 %v4769, %v4873
        %v4966 = vadd.f32 %v4770, %v4876
        %v4967 = vadd.f32 %v4771, %v4879
        %v4968 = vadd.f32 %v4772, %v4882
        %v4969 = vadd.f32 %v4773, %v4885
        %v4970 = vadd.f32 %v4774, %v4888
        %v4971 = vadd.f32 %v4775, %v4891
        %v4972 = vadd.f32 %v4776, %v4894
        %v4973 = vadd.f32 %v4777, %v4897
        %v4974 = vadd.f32 %v4778, %v4900
        %v4975 = vadd.f32 %v4779, %v4903
        %v4976 = vadd.f32 %v4780, %v4906
        %v4977 = vadd.f32 %v4781, %v4909
        %v4978 = vadd.f32 %v4782, %v4912
        %v4979 = vadd.f32 %v4783, %v4915
        %v4980 = vadd.f32 %v4784, %v4918
        %v4981 = vadd.f32 %v4785, %v4921
        %v4982 = vadd.f32 %v4786, %v4924
        %v4983 = vadd.f32 %v4787, %v4927
        %v4984 = vadd.f32 %v4788, %v4930
        %v4985 = vadd.f32 %v4789, %v4933
        %v4986 = vadd.f32 %v4790, %v4936
        %v4987 = vadd.f32 %v4791, %v4939
        %v4988 = vadd.f32 %v4792, %v4942
        %v4989 = vadd.f32 %v4793, %v4945
        %v4990 = vadd.f32 %v4794, %v4948
        %v4991 = vadd.f32 %v4795, %v4951
        %v4992 = vadd.f32 %v4796, %v4954
        %v4993 = vadd.f32 %v4797, %v4957
        %v4994 = vadd.f32 %v4798, %v4960
        %v4995 = vadd.f32 %v4799, %v4963
        %v4996 = vld [vmem:[%s288] sm:$0xff]
        %v4997 = vld [vmem:[%s288 + $0x8] sm:$0xff]
        %v4998 = vld [vmem:[%s288 + $0x10] sm:$0xff]
        %v4999 = vld [vmem:[%s288 + $0x18] sm:$0xff]
        %v5000 = vld [vmem:[%s288 + $0x20] sm:$0xff]
        %v5001 = vld [vmem:[%s288 + $0x28] sm:$0xff]
        %v5002 = vld [vmem:[%s288 + $0x30] sm:$0xff]
        %v5003 = vld [vmem:[%s288 + $0x38] sm:$0xff]
        %v5004 = vld [vmem:[%s288 + $0x40] sm:$0xff]
        %v5005 = vld [vmem:[%s288 + $0x48] sm:$0xff]
        %v5006 = vld [vmem:[%s288 + $0x50] sm:$0xff]
        %v5007 = vld [vmem:[%s288 + $0x58] sm:$0xff]
        %v5008 = vld [vmem:[%s288 + $0x60] sm:$0xff]
        %v5009 = vld [vmem:[%s288 + $0x68] sm:$0xff]
        %v5010 = vld [vmem:[%s288 + $0x70] sm:$0xff]
        %v5011 = vld [vmem:[%s288 + $0x78] sm:$0xff]
        %v5012 = vld [vmem:[%s288 + $0x80] sm:$0xff]
        %v5013 = vld [vmem:[%s288 + $0x88] sm:$0xff]
        %v5014 = vld [vmem:[%s288 + $0x90] sm:$0xff]
        %v5015 = vld [vmem:[%s288 + $0x98] sm:$0xff]
        %v5016 = vld [vmem:[%s288 + $0xa0] sm:$0xff]
        %v5017 = vld [vmem:[%s288 + $0xa8] sm:$0xff]
        %v5018 = vld [vmem:[%s288 + $0xb0] sm:$0xff]
        %v5019 = vld [vmem:[%s288 + $0xb8] sm:$0xff]
        %v5020 = vld [vmem:[%s288 + $0xc0] sm:$0xff]
        %v5021 = vld [vmem:[%s288 + $0xc8] sm:$0xff]
        %v5022 = vld [vmem:[%s288 + $0xd0] sm:$0xff]
        %v5023 = vld [vmem:[%s288 + $0xd8] sm:$0xff]
        %v5024 = vld [vmem:[%s288 + $0xe0] sm:$0xff]
        %v5025 = vld [vmem:[%s288 + $0xe8] sm:$0xff]
        %v5026 = vld [vmem:[%s288 + $0xf0] sm:$0xff]
        %v5027 = vld [vmem:[%s288 + $0xf8] sm:$0xff]
        %v5028 = vsub.f32 %v4996, %v4964
        %v5029 = vsub.f32 %v4997, %v4965
        %v5030 = vsub.f32 %v4998, %v4966
        %v5031 = vsub.f32 %v4999, %v4967
        %v5032 = vsub.f32 %v5000, %v4968
        %v5033 = vsub.f32 %v5001, %v4969
        %v5034 = vsub.f32 %v5002, %v4970
        %v5035 = vsub.f32 %v5003, %v4971
        %v5036 = vsub.f32 %v5004, %v4972
        %v5037 = vsub.f32 %v5005, %v4973
        %v5038 = vsub.f32 %v5006, %v4974
        %v5039 = vsub.f32 %v5007, %v4975
        %v5040 = vsub.f32 %v5008, %v4976
        %v5041 = vsub.f32 %v5009, %v4977
        %v5042 = vsub.f32 %v5010, %v4978
        %v5043 = vsub.f32 %v5011, %v4979
        %v5044 = vsub.f32 %v5012, %v4980
        %v5045 = vsub.f32 %v5013, %v4981
        %v5046 = vsub.f32 %v5014, %v4982
        %v5047 = vsub.f32 %v5015, %v4983
        %v5048 = vsub.f32 %v5016, %v4984
        %v5049 = vsub.f32 %v5017, %v4985
        %v5050 = vsub.f32 %v5018, %v4986
        %v5051 = vsub.f32 %v5019, %v4987
        %v5052 = vsub.f32 %v5020, %v4988
        %v5053 = vsub.f32 %v5021, %v4989
        %v5054 = vsub.f32 %v5022, %v4990
        %v5055 = vsub.f32 %v5023, %v4991
        %v5056 = vsub.f32 %v5024, %v4992
        %v5057 = vsub.f32 %v5025, %v4993
        %v5058 = vsub.f32 %v5026, %v4994
        %v5059 = vsub.f32 %v5027, %v4995
        %5060 = vst.msk [vmem:[%s293] sm:$0xff] %vm294, %v5028
        %5061 = vst.msk [vmem:[%s293 + $0x8] sm:$0xff] %vm294, %v5029
        %5062 = vst.msk [vmem:[%s293 + $0x10] sm:$0xff] %vm294, %v5030
        %5063 = vst.msk [vmem:[%s293 + $0x18] sm:$0xff] %vm294, %v5031
        %5064 = vst.msk [vmem:[%s293 + $0x20] sm:$0xff] %vm294, %v5032
        %5065 = vst.msk [vmem:[%s293 + $0x28] sm:$0xff] %vm294, %v5033
        %5066 = vst.msk [vmem:[%s293 + $0x30] sm:$0xff] %vm294, %v5034
        %5067 = vst.msk [vmem:[%s293 + $0x38] sm:$0xff] %vm294, %v5035
        %5068 = vst.msk [vmem:[%s293 + $0x40] sm:$0xff] %vm294, %v5036
        %5069 = vst.msk [vmem:[%s293 + $0x48] sm:$0xff] %vm294, %v5037
        %5070 = vst.msk [vmem:[%s293 + $0x50] sm:$0xff] %vm294, %v5038
        %5071 = vst.msk [vmem:[%s293 + $0x58] sm:$0xff] %vm294, %v5039
        %5072 = vst.msk [vmem:[%s293 + $0x60] sm:$0xff] %vm294, %v5040
        %5073 = vst.msk [vmem:[%s293 + $0x68] sm:$0xff] %vm294, %v5041
        %5074 = vst.msk [vmem:[%s293 + $0x70] sm:$0xff] %vm294, %v5042
        %5075 = vst.msk [vmem:[%s293 + $0x78] sm:$0xff] %vm294, %v5043
        %5076 = vst.msk [vmem:[%s293 + $0x80] sm:$0xff] %vm294, %v5044
        %5077 = vst.msk [vmem:[%s293 + $0x88] sm:$0xff] %vm294, %v5045
        %5078 = vst.msk [vmem:[%s293 + $0x90] sm:$0xff] %vm294, %v5046
        %5079 = vst.msk [vmem:[%s293 + $0x98] sm:$0xff] %vm294, %v5047
        %5080 = vst.msk [vmem:[%s293 + $0xa0] sm:$0xff] %vm294, %v5048
        %5081 = vst.msk [vmem:[%s293 + $0xa8] sm:$0xff] %vm294, %v5049
        %5082 = vst.msk [vmem:[%s293 + $0xb0] sm:$0xff] %vm294, %v5050
        %5083 = vst.msk [vmem:[%s293 + $0xb8] sm:$0xff] %vm294, %v5051
        %5084 = vst.msk [vmem:[%s293 + $0xc0] sm:$0xff] %vm294, %v5052
        %5085 = vst.msk [vmem:[%s293 + $0xc8] sm:$0xff] %vm294, %v5053
        %5086 = vst.msk [vmem:[%s293 + $0xd0] sm:$0xff] %vm294, %v5054
        %5087 = vst.msk [vmem:[%s293 + $0xd8] sm:$0xff] %vm294, %v5055
        %5088 = vst.msk [vmem:[%s293 + $0xe0] sm:$0xff] %vm294, %v5056
        %5089 = vst.msk [vmem:[%s293 + $0xe8] sm:$0xff] %vm294, %v5057
        %5090 = vst.msk [vmem:[%s293 + $0xf0] sm:$0xff] %vm294, %v5058
        %5091 = vst.msk [vmem:[%s293 + $0xf8] sm:$0xff] %vm294, %v5059
        %p5092 = scmp.lt.s32.totalorder %s19, 1
        %s5093 = scalar_select %p5092, %s19, 1
        %s5094 = smul.addr %s5093, 32
        %s5095 = smul.addr %s5094, 8
        %s5096 = scalar_lea.vmem %s7, %s5095
        // Predicated region
        $region53: #{dncnn_forward.1} parent=47 // pred_check
          %p5097 = pneg %p189
        $region54: #{dncnn_forward.1} parent=47 // pred_check_branch
          %5099 = sbr.rel (%p5097) target = $region56
        $region55: #{dncnn_forward.1} parent=47 // pred_region
          _
        $region56: #{dncnn_forward.1} parent=47 // pred_fallthru
          _
      $region48: #{dncnn_forward.1} parent=5 // pred_fallthru
        _
      %p5100 = scmp.le.s32.totalorder 2, %s14
      // Predicated region
      $region57: #{dncnn_forward.1} parent=5 // pred_check
        %p5101 = pneg %p5100
      $region58: #{dncnn_forward.1} parent=5 // pred_check_branch
        %5103 = sbr.rel (%p5101) target = $region60
      $region59: #{dncnn_forward.1} parent=5 // pred_region
        %s5104 = ssub.s32 %s14, 2
        // Predicated region
        $region61: #{dncnn_forward.1} parent=59 // pred_check
          %p5105 = pneg %p195
        $region62: #{dncnn_forward.1} parent=59 // pred_check_branch
          %5107 = sbr.rel (%p5105) target = $region64
        $region63: #{dncnn_forward.1} parent=59 // pred_region
          %p5108 = scmp.lt.s32.totalorder %s20, 1
          %s5109 = scalar_select %p5108, %s20, 1
          %s5110 = smul.addr %s5109, 32
          %s5111 = smul.addr %s5110, 8
          %s5112 = scalar_lea.vmem %s7, %s5111
        $region64: #{dncnn_forward.1} parent=59 // pred_fallthru
          _
      $region60: #{dncnn_forward.1} parent=5 // pred_fallthru
        _
    $region6: #{dncnn_forward.1} parent=1 // loop_footer
      %s18 = sadd.s32 1, %s14
    $region7: #{dncnn_forward.1} parent=1 // loop_footer_branch
      %13 = sbr.rel target = $region3
    $region8: #{dncnn_forward.1} parent=1 // loop_exit
      _
    %5113 = vsyncpa [#allocation6], 1
    %s5114 = scalar_lea.sflag [#allocation6], 1
    %5115 = vsyncpa %s5114, 1

</llo_original>
